<compile_context>
chip_gen: v6e
topology: v6e:2x2x1
jax: 0.10.0
libtpu: 0.0.40
codegen_flags: <defaults>
</compile_context>

<pallas_src>
import functools

import jax
import jax.numpy as jnp
from jax import lax
from jax.experimental import pallas as pl
from jax.experimental.pallas import tpu as pltpu  # noqa: F401  (TPU backend)


# ----------------------------------------------------------------------------
# Fused Pallas kernel: whole MultiScaleCNN forward on VMEM-resident data
# ----------------------------------------------------------------------------
def _fused_forward_kernel(a1_ref, w1_ref, b1_ref, w2_ref, b2_ref, w3_ref,
                          b3_ref, w4_ref, b4_ref, wfc_ref, bfc_ref, out_ref,
                          *, mv, wp, hpwp, nb, ho4, wo4):
    """All layers fused.

    a1_ref : (m_pad, D*9)          bf16  conv1 3x3 patches, rows = padded (n,h,w)
    w1_ref : (D*9, 16*Do1)         bf16  conv1 as (patch)->(channel,depth)
    w2/3   : (16*Do1, 16*Do1)      bf16  folded multi-scale blocks
    w4_ref : (4, 16*Do1, 16*Do4)   bf16  conv4, one matrix per 2x2 spatial tap
    wfc_ref: (Ho4*Wo4, 16*Do4, n_classes) bf16  fc weight per spatial position
    b*_ref : (1, F) f32 biases;    out_ref : (batch, n_classes) f32
    """

    def mm(a, w):  # bf16 MXU matmul with f32 accumulation
        return jnp.dot(a.astype(jnp.bfloat16), w,
                       preferred_element_type=jnp.float32)

    # conv1 (11,3,3), stride (3,1,1) + ReLU
    h = jnp.maximum(mm(a1_ref[...], w1_ref[...]) + b1_ref[...], 0.0)
    # multi-scale block 2 (conv2_1..conv2_4 summed) + ReLU
    h = jnp.maximum(mm(h, w2_ref[...]) + b2_ref[...], 0.0)
    # multi-scale block 3 + ReLU
    h = jnp.maximum(mm(h, w3_ref[...]) + b3_ref[...], 0.0)

    # conv4 (3,2,2) + ReLU: 4 row-shifted matmuls on the padded (Hp, Wp) grid.
    # Valid output rows only read real (non-padding) rows of h, so padding
    # garbage never contaminates the result.
    acc = mm(h[0:mv, :], w4_ref[0])
    acc = acc + mm(h[1:1 + mv, :], w4_ref[1])
    acc = acc + mm(h[wp:wp + mv, :], w4_ref[2])
    acc = acc + mm(h[wp + 1:wp + 1 + mv, :], w4_ref[3])
    c = jnp.maximum(acc + b4_ref[...], 0.0)           # (mv, 16*Do4)

    # TODO(synk): nn.Dropout(p=0.6) treated as identity (inference mode).
    # (nn.MaxPool2d is defined in the module but never used in forward.)

    # fc: one (1, 16*Do4) x (16*Do4, n_classes) dot per valid spatial position,
    # statically unrolled (Ho4*Wo4 positions per sample).
    for i in range(nb):
        y = bfc_ref[...]                              # (1, n_classes) f32
        for hh in range(ho4):
            for ww in range(wo4):
                r = i * hpwp + hh * wp + ww
                y = y + mm(c[r:r + 1, :], wfc_ref[hh * wo4 + ww])
        out_ref[i:i + 1, :] = y


# ----------------------------------------------------------------------------
# Static shape bookkeeping
# ----------------------------------------------------------------------------
def _derive_dims(n_bands, n_classes, patch_size, batch):
    do1 = (n_bands - 11) // 3 + 1          # depth after conv1
    ho, wo = patch_size - 2, patch_size - 2
    do4, ho4, wo4 = do1 - 2, ho - 1, wo - 1
    hp, wp = ho + 1, wo + 1                # padded spatial grid (room for shifts)
    mv = batch * hp * wp                   # "valid" grid rows
    m_pad = ((mv + wp + 1 + 15) // 16) * 16   # +max shift, 16-row aligned (bf16)
    return dict(D=n_bands, Ho=ho, Wo=wo, Hp=hp, Wp=wp, Do1=do1, Do4=do4,
                Ho4=ho4, Wo4=wo4, C1=16 * do1, C4=16 * do4, mv=mv, m_pad=m_pad,
                batch=batch, n_classes=n_classes,
                features=16 * do4 * ho4 * wo4)


# ----------------------------------------------------------------------------
# One-time weight preprocessing (branch folding, Toeplitz expansion, fc perm)
# ----------------------------------------------------------------------------
def prepare_weights(params, dims):
    f32, bf16 = jnp.float32, jnp.bfloat16
    d_in, do1, do4 = dims["D"], dims["Do1"], dims["Do4"]
    c1, c4, ncls = dims["C1"], dims["C4"], dims["n_classes"]

    # conv1 -> (D*3*3, 16*Do1):  rows (d, kh, kw), cols (co, do)
    w1 = params["conv1_w"]                             # (16,1,11,3,3)
    w1e = jnp.zeros((d_in, 3, 3, 16, do1), f32)
    for do in range(do1):
        w1e = w1e.at[3 * do:3 * do + 11, :, :, :, do].set(
            jnp.transpose(w1[:, 0], (1, 2, 3, 0)))
    w1e = w1e.reshape(d_in * 9, c1)
    b1e = jnp.repeat(params["conv1_b"], do1)

    def fold_block(prefix):
        # fold the 4 same-padded depth branches (k = 1,3,5,11) into one 11-tap
        wf = jnp.zeros((16, 16, 11), f32)
        bf = jnp.zeros((16,), f32)
        for i in (1, 2, 3, 4):
            w = params[f"{prefix}_{i}_w"][:, :, :, 0, 0]   # (16,16,k)
            k = w.shape[2]
            off = (11 - k) // 2
            wf = wf.at[:, :, off:off + k].add(w)
            bf = bf + params[f"{prefix}_{i}_b"]
        # dense depth mixing: rows (ci, di), cols (co, do)
        we = jnp.zeros((16, do1, 16, do1), f32)
        for do in range(do1):
            for di in range(do1):
                t = di - do + 5
                if 0 <= t <= 10:
                    we = we.at[:, di, :, do].set(wf[:, :, t].T)
        return we.reshape(c1, c1), jnp.repeat(bf, do1)

    w2e, b2e = fold_block("conv2")
    w3e, b3e = fold_block("conv3")

    # conv4 -> one (16*Do1, 16*Do4) matrix per spatial tap (kh, kw)
    w4 = params["conv4_w"]                              # (16,16,3,2,2)
    w4e = jnp.zeros((2, 2, 16, do1, 16, do4), f32)
    for dd in range(do4):
        for kd in range(3):
            w4e = w4e.at[:, :, :, dd + kd, :, dd].set(
                jnp.transpose(w4[:, :, kd], (2, 3, 1, 0)))
    w4e = w4e.reshape(4, c1, c4)
    b4e = jnp.repeat(params["conv4_b"], do4)

    # fc (pre-permuted once): (spatial position, (co, do4), class)
    wfc = params["fc_w"].reshape(ncls, 16, do4, dims["Ho4"], dims["Wo4"])
    wfc3 = jnp.transpose(wfc, (3, 4, 1, 2, 0)).reshape(
        dims["Ho4"] * dims["Wo4"], c4, ncls)

    return dict(
        w1e=w1e.astype(bf16), b1e=b1e.reshape(1, c1).astype(f32),
        w2e=w2e.astype(bf16), b2e=b2e.reshape(1, c1).astype(f32),
        w3e=w3e.astype(bf16), b3e=b3e.reshape(1, c1).astype(f32),
        w4e=w4e.astype(bf16), b4e=b4e.reshape(1, c4).astype(f32),
        wfc3=wfc3.astype(bf16), bfc=params["fc_b"].reshape(1, ncls).astype(f32),
    )


# ----------------------------------------------------------------------------
# Host glue: 3x3 spatial patches of the raw input (conv1 LHS), padded grid rows
# ----------------------------------------------------------------------------
def _conv1_patches(x, dims):
    """x: (N,1,D,H,W) f32 -> bf16 (m_pad, D*9), row = n*Hp*Wp + h*Wp + w."""
    n = x.shape[0]
    d_in, ho, wo, hp, wp = dims["D"], dims["Ho"], dims["Wo"], dims["Hp"], dims["Wp"]
    pats = [x[:, 0, :, j:j + ho, k:k + wo] for j in range(3) for k in range(3)]
    p = jnp.stack(pats, axis=-1)                    # (N, D, Ho, Wo, 9)
    p = jnp.transpose(p, (0, 2, 3, 1, 4))           # (N, Ho, Wo, D, 9)
    p = p.reshape(n, ho, wo, d_in * 9)
    p = jnp.pad(p, ((0, 0), (0, hp - ho), (0, wp - wo), (0, 0)))
    p = p.reshape(n * hp * wp, d_in * 9)
    p = jnp.pad(p, ((0, dims["m_pad"] - n * hp * wp), (0, 0)))
    return p.astype(jnp.bfloat16)


# ----------------------------------------------------------------------------
# Build the fused, jitted forward
# ----------------------------------------------------------------------------
def make_multiscale_cnn(params, n_bands, n_classes, patch_size, batch):
    dims = _derive_dims(n_bands, n_classes, patch_size, batch)
    weights = prepare_weights(params, dims)

    kernel = functools.partial(
        _fused_forward_kernel,
        mv=dims["mv"], wp=dims["Wp"], hpwp=dims["Hp"] * dims["Wp"],
        nb=dims["batch"], ho4=dims["Ho4"], wo4=dims["Wo4"])

    names = ("w1e", "b1e", "w2e", "b2e", "w3e", "b3e", "w4e", "b4e",
             "wfc3", "bfc")
    consts = tuple(weights[k] for k in names)
    a1_shape = (dims["m_pad"], dims["D"] * 9)
    in_shapes = (a1_shape,) + tuple(c.shape for c in consts)

    def full_spec(shape):
        return pl.BlockSpec(shape, lambda nd=len(shape): (0,) * nd)

    fused = pl.pallas_call(
        kernel,
        out_shape=jax.ShapeDtypeStruct((dims["batch"], dims["n_classes"]),
                                       jnp.float32),
        in_specs=[full_spec(s) for s in in_shapes],
        out_specs=full_spec((dims["batch"], dims["n_classes"])),
    )

    @jax.jit
    def forward(x):
        a1 = _conv1_patches(x, dims)
        return fused(a1, *consts)

    return forward


# ----------------------------------------------------------------------------
# Parameters (deterministic kaiming-uniform weights, zero biases)
# ----------------------------------------------------------------------------
def _kaiming_uniform(key, shape, fan_in):
    bound = (6.0 / fan_in) ** 0.5
    return jax.random.uniform(key, shape, jnp.float32, -bound, bound)


def init_params(key, n_bands, n_classes, patch_size):
    conv_shapes = {
        "conv1": (16, 1, 11, 3, 3),
        "conv2_1": (16, 16, 1, 1, 1),
        "conv2_2": (16, 16, 3, 1, 1),
        "conv2_3": (16, 16, 5, 1, 1),
        "conv2_4": (16, 16, 11, 1, 1),
        "conv3_1": (16, 16, 1, 1, 1),
        "conv3_2": (16, 16, 3, 1, 1),
        "conv3_3": (16, 16, 5, 1, 1),
        "conv3_4": (16, 16, 11, 1, 1),
        "conv4": (16, 16, 3, 2, 2),
    }
    params = {}
    keys = jax.random.split(key, len(conv_shapes) + 1)
    for k_rng, (name, shp) in zip(keys[:-1], conv_shapes.items()):
        fan_in = shp[1] * shp[2] * shp[3] * shp[4]
        params[name + "_w"] = _kaiming_uniform(k_rng, shp, fan_in)
        params[name + "_b"] = jnp.zeros((shp[0],), jnp.float32)
    features = _derive_dims(n_bands, n_classes, patch_size, 1)["features"]
    params["fc_w"] = _kaiming_uniform(keys[-1], (n_classes, features), features)
    params["fc_b"] = jnp.zeros((n_classes,), jnp.float32)
    return params


# ----------------------------------------------------------------------------
# Pure-XLA replica of MultiScaleCNN.forward (validation only)
# ----------------------------------------------------------------------------
def reference_forward(x, params):
    dn = ("NCDHW", "OIDHW", "NCDHW")

    def conv(inp, w, b, stride=(1, 1, 1), pad=((0, 0), (0, 0), (0, 0))):
        out = lax.conv_general_dilated(inp, w, stride, pad,
                                       dimension_numbers=dn)
        return out + b.reshape(1, -1, 1, 1, 1)

    h = jax.nn.relu(conv(x, params["conv1_w"], params["conv1_b"],
                         stride=(3, 1, 1)))

    def block(h, pfx):
        out = 0.0
        for i, p in zip((1, 2, 3, 4), (0, 1, 2, 5)):
            out = out + conv(h, params[f"{pfx}_{i}_w"], params[f"{pfx}_{i}_b"],
                             pad=((p, p), (0, 0), (0, 0)))
        return jax.nn.relu(out)

    h = block(h, "conv2")
    h = block(h, "conv3")
    h = jax.nn.relu(conv(h, params["conv4_w"], params["conv4_b"]))
    feats = h.reshape(h.shape[0], -1)
    return feats @ params["fc_w"].T + params["fc_b"]


# ----------------------------------------------------------------------------
if __name__ == "__main__":
    n_bands, n_classes, patch_size, batch = 20, 10, 7, 2

    key = jax.random.PRNGKey(0)
    k_params, k_x = jax.random.split(key)
    params = init_params(k_params, n_bands, n_classes, patch_size)

    # PyTorch Conv3d input layout: (N, 1, n_bands, patch_size, patch_size)
    x = jax.random.normal(k_x, (batch, 1, n_bands, patch_size, patch_size),
                          jnp.float32)

    forward = make_multiscale_cnn(params, n_bands, n_classes, patch_size, batch)
    out = jax.block_until_ready(forward(x))

    assert out.shape == (batch, n_classes), out.shape
    assert bool(jnp.all(jnp.isfinite(out)))

    # Validate the fused bf16 kernel against a pure-f32 XLA replica.
    ref = reference_forward(x, params)
    tol = 0.1 * float(jnp.max(jnp.abs(ref)))
    assert bool(jnp.allclose(out, ref, rtol=0.1, atol=tol)), (out, ref)

    print("KERNEL_OK")
</pallas_src>

<mosaic_0001>
module attributes {stable_mosaic.version = 11 : i64} {
  func.func @_fused_forward_kernel(%arg0: memref<80x180xbf16, #tpu.memory_space<vmem>>, %arg1: memref<180x64xbf16, #tpu.memory_space<vmem>>, %arg2: memref<1x64xf32, #tpu.memory_space<vmem>>, %arg3: memref<64x64xbf16, #tpu.memory_space<vmem>>, %arg4: memref<1x64xf32, #tpu.memory_space<vmem>>, %arg5: memref<64x64xbf16, #tpu.memory_space<vmem>>, %arg6: memref<1x64xf32, #tpu.memory_space<vmem>>, %arg7: memref<4x64x32xbf16, #tpu.memory_space<vmem>>, %arg8: memref<1x32xf32, #tpu.memory_space<vmem>>, %arg9: memref<16x32x10xbf16, #tpu.memory_space<vmem>>, %arg10: memref<1x10xf32, #tpu.memory_space<vmem>>, %arg11: memref<2x10xf32, #tpu.memory_space<vmem>>) attributes {dimension_semantics = [], scalar_prefetch = 0 : i64, scratch_operands = 0 : i64, tpu.core_type = #tpu.core_type<tc>} {
    %c0 = arith.constant 0 : index
    %c0_0 = arith.constant 0 : index
    %0 = vector.load %arg0[%c0, %c0_0] : memref<80x180xbf16, #tpu.memory_space<vmem>>, vector<80x180xbf16>
    %c0_1 = arith.constant 0 : index
    %c0_2 = arith.constant 0 : index
    %1 = vector.load %arg1[%c0_1, %c0_2] : memref<180x64xbf16, #tpu.memory_space<vmem>>, vector<180x64xbf16>
    %cst = arith.constant dense<0.000000e+00> : vector<80x64xf32>
    %2 = tpu.matmul %0, %1, %cst {dimension_numbers = #tpu.dot_dimension_numbers<[1], [0], [0], [1], [0, 0, 1, 1], [], []>} : vector<80x180xbf16>, vector<180x64xbf16>, vector<80x64xf32> -> vector<80x64xf32>
    %c0_3 = arith.constant 0 : index
    %c0_4 = arith.constant 0 : index
    %3 = vector.load %arg2[%c0_3, %c0_4] : memref<1x64xf32, #tpu.memory_space<vmem>>, vector<1x64xf32>
    %4 = vector.broadcast %3 : vector<1x64xf32> to vector<80x64xf32>
    %5 = arith.addf %2, %4 : vector<80x64xf32>
    %cst_5 = arith.constant 0.000000e+00 : f32
    %6 = vector.broadcast %cst_5 : f32 to vector<80x64xf32>
    %7 = arith.maximumf %5, %6 : vector<80x64xf32>
    %c0_6 = arith.constant 0 : index
    %c0_7 = arith.constant 0 : index
    %8 = vector.load %arg3[%c0_6, %c0_7] : memref<64x64xbf16, #tpu.memory_space<vmem>>, vector<64x64xbf16>
    %9 = arith.truncf %7 : vector<80x64xf32> to vector<80x64xbf16>
    %cst_8 = arith.constant dense<0.000000e+00> : vector<80x64xf32>
    %10 = tpu.matmul %9, %8, %cst_8 {dimension_numbers = #tpu.dot_dimension_numbers<[1], [0], [0], [1], [0, 0, 1, 1], [], []>} : vector<80x64xbf16>, vector<64x64xbf16>, vector<80x64xf32> -> vector<80x64xf32>
    %c0_9 = arith.constant 0 : index
    %c0_10 = arith.constant 0 : index
    %11 = vector.load %arg4[%c0_9, %c0_10] : memref<1x64xf32, #tpu.memory_space<vmem>>, vector<1x64xf32>
    %12 = vector.broadcast %11 : vector<1x64xf32> to vector<80x64xf32>
    %13 = arith.addf %10, %12 : vector<80x64xf32>
    %cst_11 = arith.constant 0.000000e+00 : f32
    %14 = vector.broadcast %cst_11 : f32 to vector<80x64xf32>
    %15 = arith.maximumf %13, %14 : vector<80x64xf32>
    %c0_12 = arith.constant 0 : index
    %c0_13 = arith.constant 0 : index
    %16 = vector.load %arg5[%c0_12, %c0_13] : memref<64x64xbf16, #tpu.memory_space<vmem>>, vector<64x64xbf16>
    %17 = arith.truncf %15 : vector<80x64xf32> to vector<80x64xbf16>
    %cst_14 = arith.constant dense<0.000000e+00> : vector<80x64xf32>
    %18 = tpu.matmul %17, %16, %cst_14 {dimension_numbers = #tpu.dot_dimension_numbers<[1], [0], [0], [1], [0, 0, 1, 1], [], []>} : vector<80x64xbf16>, vector<64x64xbf16>, vector<80x64xf32> -> vector<80x64xf32>
    %c0_15 = arith.constant 0 : index
    %c0_16 = arith.constant 0 : index
    %19 = vector.load %arg6[%c0_15, %c0_16] : memref<1x64xf32, #tpu.memory_space<vmem>>, vector<1x64xf32>
    %20 = vector.broadcast %19 : vector<1x64xf32> to vector<80x64xf32>
    %21 = arith.addf %18, %20 : vector<80x64xf32>
    %cst_17 = arith.constant 0.000000e+00 : f32
    %22 = vector.broadcast %cst_17 : f32 to vector<80x64xf32>
    %23 = arith.maximumf %21, %22 : vector<80x64xf32>
    %24 = vector.extract_strided_slice %23 {offsets = [0, 0], sizes = [72, 64], strides = [1, 1]} : vector<80x64xf32> to vector<72x64xf32>
    %c0_18 = arith.constant 0 : index
    %c0_19 = arith.constant 0 : index
    %c0_20 = arith.constant 0 : index
    %25 = vector.load %arg7[%c0_18, %c0_19, %c0_20] : memref<4x64x32xbf16, #tpu.memory_space<vmem>>, vector<1x64x32xbf16>
    %26 = vector.shape_cast %25 : vector<1x64x32xbf16> to vector<64x32xbf16>
    %27 = arith.truncf %24 : vector<72x64xf32> to vector<72x64xbf16>
    %cst_21 = arith.constant dense<0.000000e+00> : vector<72x32xf32>
    %28 = tpu.matmul %27, %26, %cst_21 {dimension_numbers = #tpu.dot_dimension_numbers<[1], [0], [0], [1], [0, 0, 1, 1], [], []>} : vector<72x64xbf16>, vector<64x32xbf16>, vector<72x32xf32> -> vector<72x32xf32>
    %29 = vector.extract_strided_slice %23 {offsets = [1, 0], sizes = [72, 64], strides = [1, 1]} : vector<80x64xf32> to vector<72x64xf32>
    %c1 = arith.constant 1 : index
    %c0_22 = arith.constant 0 : index
    %c0_23 = arith.constant 0 : index
    %30 = vector.load %arg7[%c1, %c0_22, %c0_23] : memref<4x64x32xbf16, #tpu.memory_space<vmem>>, vector<1x64x32xbf16>
    %31 = vector.shape_cast %30 : vector<1x64x32xbf16> to vector<64x32xbf16>
    %32 = arith.truncf %29 : vector<72x64xf32> to vector<72x64xbf16>
    %cst_24 = arith.constant dense<0.000000e+00> : vector<72x32xf32>
    %33 = tpu.matmul %32, %31, %cst_24 {dimension_numbers = #tpu.dot_dimension_numbers<[1], [0], [0], [1], [0, 0, 1, 1], [], []>} : vector<72x64xbf16>, vector<64x32xbf16>, vector<72x32xf32> -> vector<72x32xf32>
    %34 = arith.addf %28, %33 : vector<72x32xf32>
    %35 = vector.extract_strided_slice %23 {offsets = [6, 0], sizes = [72, 64], strides = [1, 1]} : vector<80x64xf32> to vector<72x64xf32>
    %c2 = arith.constant 2 : index
    %c0_25 = arith.constant 0 : index
    %c0_26 = arith.constant 0 : index
    %36 = vector.load %arg7[%c2, %c0_25, %c0_26] : memref<4x64x32xbf16, #tpu.memory_space<vmem>>, vector<1x64x32xbf16>
    %37 = vector.shape_cast %36 : vector<1x64x32xbf16> to vector<64x32xbf16>
    %38 = arith.truncf %35 : vector<72x64xf32> to vector<72x64xbf16>
    %cst_27 = arith.constant dense<0.000000e+00> : vector<72x32xf32>
    %39 = tpu.matmul %38, %37, %cst_27 {dimension_numbers = #tpu.dot_dimension_numbers<[1], [0], [0], [1], [0, 0, 1, 1], [], []>} : vector<72x64xbf16>, vector<64x32xbf16>, vector<72x32xf32> -> vector<72x32xf32>
    %40 = arith.addf %34, %39 : vector<72x32xf32>
    %41 = vector.extract_strided_slice %23 {offsets = [7, 0], sizes = [72, 64], strides = [1, 1]} : vector<80x64xf32> to vector<72x64xf32>
    %c3 = arith.constant 3 : index
    %c0_28 = arith.constant 0 : index
    %c0_29 = arith.constant 0 : index
    %42 = vector.load %arg7[%c3, %c0_28, %c0_29] : memref<4x64x32xbf16, #tpu.memory_space<vmem>>, vector<1x64x32xbf16>
    %43 = vector.shape_cast %42 : vector<1x64x32xbf16> to vector<64x32xbf16>
    %44 = arith.truncf %41 : vector<72x64xf32> to vector<72x64xbf16>
    %cst_30 = arith.constant dense<0.000000e+00> : vector<72x32xf32>
    %45 = tpu.matmul %44, %43, %cst_30 {dimension_numbers = #tpu.dot_dimension_numbers<[1], [0], [0], [1], [0, 0, 1, 1], [], []>} : vector<72x64xbf16>, vector<64x32xbf16>, vector<72x32xf32> -> vector<72x32xf32>
    %46 = arith.addf %40, %45 : vector<72x32xf32>
    %c0_31 = arith.constant 0 : index
    %c0_32 = arith.constant 0 : index
    %47 = vector.load %arg8[%c0_31, %c0_32] : memref<1x32xf32, #tpu.memory_space<vmem>>, vector<1x32xf32>
    %48 = vector.broadcast %47 : vector<1x32xf32> to vector<72x32xf32>
    %49 = arith.addf %46, %48 : vector<72x32xf32>
    %cst_33 = arith.constant 0.000000e+00 : f32
    %50 = vector.broadcast %cst_33 : f32 to vector<72x32xf32>
    %51 = arith.maximumf %49, %50 : vector<72x32xf32>
    %c0_34 = arith.constant 0 : index
    %c0_35 = arith.constant 0 : index
    %52 = vector.load %arg10[%c0_34, %c0_35] : memref<1x10xf32, #tpu.memory_space<vmem>>, vector<1x10xf32>
    %53 = vector.extract_strided_slice %51 {offsets = [0, 0], sizes = [1, 32], strides = [1, 1]} : vector<72x32xf32> to vector<1x32xf32>
    %c0_36 = arith.constant 0 : index
    %c0_37 = arith.constant 0 : index
    %c0_38 = arith.constant 0 : index
    %54 = vector.load %arg9[%c0_36, %c0_37, %c0_38] : memref<16x32x10xbf16, #tpu.memory_space<vmem>>, vector<1x32x10xbf16>
    %55 = vector.shape_cast %54 : vector<1x32x10xbf16> to vector<32x10xbf16>
    %56 = arith.truncf %53 : vector<1x32xf32> to vector<1x32xbf16>
    %cst_39 = arith.constant dense<0.000000e+00> : vector<1x10xf32>
    %57 = tpu.matmul %56, %55, %cst_39 {dimension_numbers = #tpu.dot_dimension_numbers<[1], [0], [0], [1], [0, 0, 1, 1], [], []>} : vector<1x32xbf16>, vector<32x10xbf16>, vector<1x10xf32> -> vector<1x10xf32>
    %58 = arith.addf %52, %57 : vector<1x10xf32>
    %59 = vector.extract_strided_slice %51 {offsets = [1, 0], sizes = [1, 32], strides = [1, 1]} : vector<72x32xf32> to vector<1x32xf32>
    %c1_40 = arith.constant 1 : index
    %c0_41 = arith.constant 0 : index
    %c0_42 = arith.constant 0 : index
    %60 = vector.load %arg9[%c1_40, %c0_41, %c0_42] : memref<16x32x10xbf16, #tpu.memory_space<vmem>>, vector<1x32x10xbf16>
    %61 = vector.shape_cast %60 : vector<1x32x10xbf16> to vector<32x10xbf16>
    %62 = arith.truncf %59 : vector<1x32xf32> to vector<1x32xbf16>
    %cst_43 = arith.constant dense<0.000000e+00> : vector<1x10xf32>
    %63 = tpu.matmul %62, %61, %cst_43 {dimension_numbers = #tpu.dot_dimension_numbers<[1], [0], [0], [1], [0, 0, 1, 1], [], []>} : vector<1x32xbf16>, vector<32x10xbf16>, vector<1x10xf32> -> vector<1x10xf32>
    %64 = arith.addf %58, %63 : vector<1x10xf32>
    %65 = vector.extract_strided_slice %51 {offsets = [2, 0], sizes = [1, 32], strides = [1, 1]} : vector<72x32xf32> to vector<1x32xf32>
    %c2_44 = arith.constant 2 : index
    %c0_45 = arith.constant 0 : index
    %c0_46 = arith.constant 0 : index
    %66 = vector.load %arg9[%c2_44, %c0_45, %c0_46] : memref<16x32x10xbf16, #tpu.memory_space<vmem>>, vector<1x32x10xbf16>
    %67 = vector.shape_cast %66 : vector<1x32x10xbf16> to vector<32x10xbf16>
    %68 = arith.truncf %65 : vector<1x32xf32> to vector<1x32xbf16>
    %cst_47 = arith.constant dense<0.000000e+00> : vector<1x10xf32>
    %69 = tpu.matmul %68, %67, %cst_47 {dimension_numbers = #tpu.dot_dimension_numbers<[1], [0], [0], [1], [0, 0, 1, 1], [], []>} : vector<1x32xbf16>, vector<32x10xbf16>, vector<1x10xf32> -> vector<1x10xf32>
    %70 = arith.addf %64, %69 : vector<1x10xf32>
    %71 = vector.extract_strided_slice %51 {offsets = [3, 0], sizes = [1, 32], strides = [1, 1]} : vector<72x32xf32> to vector<1x32xf32>
    %c3_48 = arith.constant 3 : index
    %c0_49 = arith.constant 0 : index
    %c0_50 = arith.constant 0 : index
    %72 = vector.load %arg9[%c3_48, %c0_49, %c0_50] : memref<16x32x10xbf16, #tpu.memory_space<vmem>>, vector<1x32x10xbf16>
    %73 = vector.shape_cast %72 : vector<1x32x10xbf16> to vector<32x10xbf16>
    %74 = arith.truncf %71 : vector<1x32xf32> to vector<1x32xbf16>
    %cst_51 = arith.constant dense<0.000000e+00> : vector<1x10xf32>
    %75 = tpu.matmul %74, %73, %cst_51 {dimension_numbers = #tpu.dot_dimension_numbers<[1], [0], [0], [1], [0, 0, 1, 1], [], []>} : vector<1x32xbf16>, vector<32x10xbf16>, vector<1x10xf32> -> vector<1x10xf32>
    %76 = arith.addf %70, %75 : vector<1x10xf32>
    %77 = vector.extract_strided_slice %51 {offsets = [6, 0], sizes = [1, 32], strides = [1, 1]} : vector<72x32xf32> to vector<1x32xf32>
    %c4 = arith.constant 4 : index
    %c0_52 = arith.constant 0 : index
    %c0_53 = arith.constant 0 : index
    %78 = vector.load %arg9[%c4, %c0_52, %c0_53] : memref<16x32x10xbf16, #tpu.memory_space<vmem>>, vector<1x32x10xbf16>
    %79 = vector.shape_cast %78 : vector<1x32x10xbf16> to vector<32x10xbf16>
    %80 = arith.truncf %77 : vector<1x32xf32> to vector<1x32xbf16>
    %cst_54 = arith.constant dense<0.000000e+00> : vector<1x10xf32>
    %81 = tpu.matmul %80, %79, %cst_54 {dimension_numbers = #tpu.dot_dimension_numbers<[1], [0], [0], [1], [0, 0, 1, 1], [], []>} : vector<1x32xbf16>, vector<32x10xbf16>, vector<1x10xf32> -> vector<1x10xf32>
    %82 = arith.addf %76, %81 : vector<1x10xf32>
    %83 = vector.extract_strided_slice %51 {offsets = [7, 0], sizes = [1, 32], strides = [1, 1]} : vector<72x32xf32> to vector<1x32xf32>
    %c5 = arith.constant 5 : index
    %c0_55 = arith.constant 0 : index
    %c0_56 = arith.constant 0 : index
    %84 = vector.load %arg9[%c5, %c0_55, %c0_56] : memref<16x32x10xbf16, #tpu.memory_space<vmem>>, vector<1x32x10xbf16>
    %85 = vector.shape_cast %84 : vector<1x32x10xbf16> to vector<32x10xbf16>
    %86 = arith.truncf %83 : vector<1x32xf32> to vector<1x32xbf16>
    %cst_57 = arith.constant dense<0.000000e+00> : vector<1x10xf32>
    %87 = tpu.matmul %86, %85, %cst_57 {dimension_numbers = #tpu.dot_dimension_numbers<[1], [0], [0], [1], [0, 0, 1, 1], [], []>} : vector<1x32xbf16>, vector<32x10xbf16>, vector<1x10xf32> -> vector<1x10xf32>
    %88 = arith.addf %82, %87 : vector<1x10xf32>
    %89 = vector.extract_strided_slice %51 {offsets = [8, 0], sizes = [1, 32], strides = [1, 1]} : vector<72x32xf32> to vector<1x32xf32>
    %c6 = arith.constant 6 : index
    %c0_58 = arith.constant 0 : index
    %c0_59 = arith.constant 0 : index
    %90 = vector.load %arg9[%c6, %c0_58, %c0_59] : memref<16x32x10xbf16, #tpu.memory_space<vmem>>, vector<1x32x10xbf16>
    %91 = vector.shape_cast %90 : vector<1x32x10xbf16> to vector<32x10xbf16>
    %92 = arith.truncf %89 : vector<1x32xf32> to vector<1x32xbf16>
    %cst_60 = arith.constant dense<0.000000e+00> : vector<1x10xf32>
    %93 = tpu.matmul %92, %91, %cst_60 {dimension_numbers = #tpu.dot_dimension_numbers<[1], [0], [0], [1], [0, 0, 1, 1], [], []>} : vector<1x32xbf16>, vector<32x10xbf16>, vector<1x10xf32> -> vector<1x10xf32>
    %94 = arith.addf %88, %93 : vector<1x10xf32>
    %95 = vector.extract_strided_slice %51 {offsets = [9, 0], sizes = [1, 32], strides = [1, 1]} : vector<72x32xf32> to vector<1x32xf32>
    %c7 = arith.constant 7 : index
    %c0_61 = arith.constant 0 : index
    %c0_62 = arith.constant 0 : index
    %96 = vector.load %arg9[%c7, %c0_61, %c0_62] : memref<16x32x10xbf16, #tpu.memory_space<vmem>>, vector<1x32x10xbf16>
    %97 = vector.shape_cast %96 : vector<1x32x10xbf16> to vector<32x10xbf16>
    %98 = arith.truncf %95 : vector<1x32xf32> to vector<1x32xbf16>
    %cst_63 = arith.constant dense<0.000000e+00> : vector<1x10xf32>
    %99 = tpu.matmul %98, %97, %cst_63 {dimension_numbers = #tpu.dot_dimension_numbers<[1], [0], [0], [1], [0, 0, 1, 1], [], []>} : vector<1x32xbf16>, vector<32x10xbf16>, vector<1x10xf32> -> vector<1x10xf32>
    %100 = arith.addf %94, %99 : vector<1x10xf32>
    %101 = vector.extract_strided_slice %51 {offsets = [12, 0], sizes = [1, 32], strides = [1, 1]} : vector<72x32xf32> to vector<1x32xf32>
    %c8 = arith.constant 8 : index
    %c0_64 = arith.constant 0 : index
    %c0_65 = arith.constant 0 : index
    %102 = vector.load %arg9[%c8, %c0_64, %c0_65] : memref<16x32x10xbf16, #tpu.memory_space<vmem>>, vector<1x32x10xbf16>
    %103 = vector.shape_cast %102 : vector<1x32x10xbf16> to vector<32x10xbf16>
    %104 = arith.truncf %101 : vector<1x32xf32> to vector<1x32xbf16>
    %cst_66 = arith.constant dense<0.000000e+00> : vector<1x10xf32>
    %105 = tpu.matmul %104, %103, %cst_66 {dimension_numbers = #tpu.dot_dimension_numbers<[1], [0], [0], [1], [0, 0, 1, 1], [], []>} : vector<1x32xbf16>, vector<32x10xbf16>, vector<1x10xf32> -> vector<1x10xf32>
    %106 = arith.addf %100, %105 : vector<1x10xf32>
    %107 = vector.extract_strided_slice %51 {offsets = [13, 0], sizes = [1, 32], strides = [1, 1]} : vector<72x32xf32> to vector<1x32xf32>
    %c9 = arith.constant 9 : index
    %c0_67 = arith.constant 0 : index
    %c0_68 = arith.constant 0 : index
    %108 = vector.load %arg9[%c9, %c0_67, %c0_68] : memref<16x32x10xbf16, #tpu.memory_space<vmem>>, vector<1x32x10xbf16>
    %109 = vector.shape_cast %108 : vector<1x32x10xbf16> to vector<32x10xbf16>
    %110 = arith.truncf %107 : vector<1x32xf32> to vector<1x32xbf16>
    %cst_69 = arith.constant dense<0.000000e+00> : vector<1x10xf32>
    %111 = tpu.matmul %110, %109, %cst_69 {dimension_numbers = #tpu.dot_dimension_numbers<[1], [0], [0], [1], [0, 0, 1, 1], [], []>} : vector<1x32xbf16>, vector<32x10xbf16>, vector<1x10xf32> -> vector<1x10xf32>
    %112 = arith.addf %106, %111 : vector<1x10xf32>
    %113 = vector.extract_strided_slice %51 {offsets = [14, 0], sizes = [1, 32], strides = [1, 1]} : vector<72x32xf32> to vector<1x32xf32>
    %c10 = arith.constant 10 : index
    %c0_70 = arith.constant 0 : index
    %c0_71 = arith.constant 0 : index
    %114 = vector.load %arg9[%c10, %c0_70, %c0_71] : memref<16x32x10xbf16, #tpu.memory_space<vmem>>, vector<1x32x10xbf16>
    %115 = vector.shape_cast %114 : vector<1x32x10xbf16> to vector<32x10xbf16>
    %116 = arith.truncf %113 : vector<1x32xf32> to vector<1x32xbf16>
    %cst_72 = arith.constant dense<0.000000e+00> : vector<1x10xf32>
    %117 = tpu.matmul %116, %115, %cst_72 {dimension_numbers = #tpu.dot_dimension_numbers<[1], [0], [0], [1], [0, 0, 1, 1], [], []>} : vector<1x32xbf16>, vector<32x10xbf16>, vector<1x10xf32> -> vector<1x10xf32>
    %118 = arith.addf %112, %117 : vector<1x10xf32>
    %119 = vector.extract_strided_slice %51 {offsets = [15, 0], sizes = [1, 32], strides = [1, 1]} : vector<72x32xf32> to vector<1x32xf32>
    %c11 = arith.constant 11 : index
    %c0_73 = arith.constant 0 : index
    %c0_74 = arith.constant 0 : index
    %120 = vector.load %arg9[%c11, %c0_73, %c0_74] : memref<16x32x10xbf16, #tpu.memory_space<vmem>>, vector<1x32x10xbf16>
    %121 = vector.shape_cast %120 : vector<1x32x10xbf16> to vector<32x10xbf16>
    %122 = arith.truncf %119 : vector<1x32xf32> to vector<1x32xbf16>
    %cst_75 = arith.constant dense<0.000000e+00> : vector<1x10xf32>
    %123 = tpu.matmul %122, %121, %cst_75 {dimension_numbers = #tpu.dot_dimension_numbers<[1], [0], [0], [1], [0, 0, 1, 1], [], []>} : vector<1x32xbf16>, vector<32x10xbf16>, vector<1x10xf32> -> vector<1x10xf32>
    %124 = arith.addf %118, %123 : vector<1x10xf32>
    %125 = vector.extract_strided_slice %51 {offsets = [18, 0], sizes = [1, 32], strides = [1, 1]} : vector<72x32xf32> to vector<1x32xf32>
    %c12 = arith.constant 12 : index
    %c0_76 = arith.constant 0 : index
    %c0_77 = arith.constant 0 : index
    %126 = vector.load %arg9[%c12, %c0_76, %c0_77] : memref<16x32x10xbf16, #tpu.memory_space<vmem>>, vector<1x32x10xbf16>
    %127 = vector.shape_cast %126 : vector<1x32x10xbf16> to vector<32x10xbf16>
    %128 = arith.truncf %125 : vector<1x32xf32> to vector<1x32xbf16>
    %cst_78 = arith.constant dense<0.000000e+00> : vector<1x10xf32>
    %129 = tpu.matmul %128, %127, %cst_78 {dimension_numbers = #tpu.dot_dimension_numbers<[1], [0], [0], [1], [0, 0, 1, 1], [], []>} : vector<1x32xbf16>, vector<32x10xbf16>, vector<1x10xf32> -> vector<1x10xf32>
    %130 = arith.addf %124, %129 : vector<1x10xf32>
    %131 = vector.extract_strided_slice %51 {offsets = [19, 0], sizes = [1, 32], strides = [1, 1]} : vector<72x32xf32> to vector<1x32xf32>
    %c13 = arith.constant 13 : index
    %c0_79 = arith.constant 0 : index
    %c0_80 = arith.constant 0 : index
    %132 = vector.load %arg9[%c13, %c0_79, %c0_80] : memref<16x32x10xbf16, #tpu.memory_space<vmem>>, vector<1x32x10xbf16>
    %133 = vector.shape_cast %132 : vector<1x32x10xbf16> to vector<32x10xbf16>
    %134 = arith.truncf %131 : vector<1x32xf32> to vector<1x32xbf16>
    %cst_81 = arith.constant dense<0.000000e+00> : vector<1x10xf32>
    %135 = tpu.matmul %134, %133, %cst_81 {dimension_numbers = #tpu.dot_dimension_numbers<[1], [0], [0], [1], [0, 0, 1, 1], [], []>} : vector<1x32xbf16>, vector<32x10xbf16>, vector<1x10xf32> -> vector<1x10xf32>
    %136 = arith.addf %130, %135 : vector<1x10xf32>
    %137 = vector.extract_strided_slice %51 {offsets = [20, 0], sizes = [1, 32], strides = [1, 1]} : vector<72x32xf32> to vector<1x32xf32>
    %c14 = arith.constant 14 : index
    %c0_82 = arith.constant 0 : index
    %c0_83 = arith.constant 0 : index
    %138 = vector.load %arg9[%c14, %c0_82, %c0_83] : memref<16x32x10xbf16, #tpu.memory_space<vmem>>, vector<1x32x10xbf16>
    %139 = vector.shape_cast %138 : vector<1x32x10xbf16> to vector<32x10xbf16>
    %140 = arith.truncf %137 : vector<1x32xf32> to vector<1x32xbf16>
    %cst_84 = arith.constant dense<0.000000e+00> : vector<1x10xf32>
    %141 = tpu.matmul %140, %139, %cst_84 {dimension_numbers = #tpu.dot_dimension_numbers<[1], [0], [0], [1], [0, 0, 1, 1], [], []>} : vector<1x32xbf16>, vector<32x10xbf16>, vector<1x10xf32> -> vector<1x10xf32>
    %142 = arith.addf %136, %141 : vector<1x10xf32>
    %143 = vector.extract_strided_slice %51 {offsets = [21, 0], sizes = [1, 32], strides = [1, 1]} : vector<72x32xf32> to vector<1x32xf32>
    %c15 = arith.constant 15 : index
    %c0_85 = arith.constant 0 : index
    %c0_86 = arith.constant 0 : index
    %144 = vector.load %arg9[%c15, %c0_85, %c0_86] : memref<16x32x10xbf16, #tpu.memory_space<vmem>>, vector<1x32x10xbf16>
    %145 = vector.shape_cast %144 : vector<1x32x10xbf16> to vector<32x10xbf16>
    %146 = arith.truncf %143 : vector<1x32xf32> to vector<1x32xbf16>
    %cst_87 = arith.constant dense<0.000000e+00> : vector<1x10xf32>
    %147 = tpu.matmul %146, %145, %cst_87 {dimension_numbers = #tpu.dot_dimension_numbers<[1], [0], [0], [1], [0, 0, 1, 1], [], []>} : vector<1x32xbf16>, vector<32x10xbf16>, vector<1x10xf32> -> vector<1x10xf32>
    %148 = arith.addf %142, %147 : vector<1x10xf32>
    %c0_88 = arith.constant 0 : index
    %c0_89 = arith.constant 0 : index
    %149 = vector.load %arg11[%c0_88, %c0_89] : memref<2x10xf32, #tpu.memory_space<vmem>>, vector<1x10xf32>
    tpu.vector_store %arg11[%c0_88, %c0_89], %148 {strides = array<i32>} : memref<2x10xf32, #tpu.memory_space<vmem>>, vector<1x10xf32>,
    %c0_90 = arith.constant 0 : index
    %c0_91 = arith.constant 0 : index
    %150 = vector.load %arg10[%c0_90, %c0_91] : memref<1x10xf32, #tpu.memory_space<vmem>>, vector<1x10xf32>
    %151 = vector.extract_strided_slice %51 {offsets = [36, 0], sizes = [1, 32], strides = [1, 1]} : vector<72x32xf32> to vector<1x32xf32>
    %c0_92 = arith.constant 0 : index
    %c0_93 = arith.constant 0 : index
    %c0_94 = arith.constant 0 : index
    %152 = vector.load %arg9[%c0_92, %c0_93, %c0_94] : memref<16x32x10xbf16, #tpu.memory_space<vmem>>, vector<1x32x10xbf16>
    %153 = vector.shape_cast %152 : vector<1x32x10xbf16> to vector<32x10xbf16>
    %154 = arith.truncf %151 : vector<1x32xf32> to vector<1x32xbf16>
    %cst_95 = arith.constant dense<0.000000e+00> : vector<1x10xf32>
    %155 = tpu.matmul %154, %153, %cst_95 {dimension_numbers = #tpu.dot_dimension_numbers<[1], [0], [0], [1], [0, 0, 1, 1], [], []>} : vector<1x32xbf16>, vector<32x10xbf16>, vector<1x10xf32> -> vector<1x10xf32>
    %156 = arith.addf %150, %155 : vector<1x10xf32>
    %157 = vector.extract_strided_slice %51 {offsets = [37, 0], sizes = [1, 32], strides = [1, 1]} : vector<72x32xf32> to vector<1x32xf32>
    %c1_96 = arith.constant 1 : index
    %c0_97 = arith.constant 0 : index
    %c0_98 = arith.constant 0 : index
    %158 = vector.load %arg9[%c1_96, %c0_97, %c0_98] : memref<16x32x10xbf16, #tpu.memory_space<vmem>>, vector<1x32x10xbf16>
    %159 = vector.shape_cast %158 : vector<1x32x10xbf16> to vector<32x10xbf16>
    %160 = arith.truncf %157 : vector<1x32xf32> to vector<1x32xbf16>
    %cst_99 = arith.constant dense<0.000000e+00> : vector<1x10xf32>
    %161 = tpu.matmul %160, %159, %cst_99 {dimension_numbers = #tpu.dot_dimension_numbers<[1], [0], [0], [1], [0, 0, 1, 1], [], []>} : vector<1x32xbf16>, vector<32x10xbf16>, vector<1x10xf32> -> vector<1x10xf32>
    %162 = arith.addf %156, %161 : vector<1x10xf32>
    %163 = vector.extract_strided_slice %51 {offsets = [38, 0], sizes = [1, 32], strides = [1, 1]} : vector<72x32xf32> to vector<1x32xf32>
    %c2_100 = arith.constant 2 : index
    %c0_101 = arith.constant 0 : index
    %c0_102 = arith.constant 0 : index
    %164 = vector.load %arg9[%c2_100, %c0_101, %c0_102] : memref<16x32x10xbf16, #tpu.memory_space<vmem>>, vector<1x32x10xbf16>
    %165 = vector.shape_cast %164 : vector<1x32x10xbf16> to vector<32x10xbf16>
    %166 = arith.truncf %163 : vector<1x32xf32> to vector<1x32xbf16>
    %cst_103 = arith.constant dense<0.000000e+00> : vector<1x10xf32>
    %167 = tpu.matmul %166, %165, %cst_103 {dimension_numbers = #tpu.dot_dimension_numbers<[1], [0], [0], [1], [0, 0, 1, 1], [], []>} : vector<1x32xbf16>, vector<32x10xbf16>, vector<1x10xf32> -> vector<1x10xf32>
    %168 = arith.addf %162, %167 : vector<1x10xf32>
    %169 = vector.extract_strided_slice %51 {offsets = [39, 0], sizes = [1, 32], strides = [1, 1]} : vector<72x32xf32> to vector<1x32xf32>
    %c3_104 = arith.constant 3 : index
    %c0_105 = arith.constant 0 : index
    %c0_106 = arith.constant 0 : index
    %170 = vector.load %arg9[%c3_104, %c0_105, %c0_106] : memref<16x32x10xbf16, #tpu.memory_space<vmem>>, vector<1x32x10xbf16>
    %171 = vector.shape_cast %170 : vector<1x32x10xbf16> to vector<32x10xbf16>
    %172 = arith.truncf %169 : vector<1x32xf32> to vector<1x32xbf16>
    %cst_107 = arith.constant dense<0.000000e+00> : vector<1x10xf32>
    %173 = tpu.matmul %172, %171, %cst_107 {dimension_numbers = #tpu.dot_dimension_numbers<[1], [0], [0], [1], [0, 0, 1, 1], [], []>} : vector<1x32xbf16>, vector<32x10xbf16>, vector<1x10xf32> -> vector<1x10xf32>
    %174 = arith.addf %168, %173 : vector<1x10xf32>
    %175 = vector.extract_strided_slice %51 {offsets = [42, 0], sizes = [1, 32], strides = [1, 1]} : vector<72x32xf32> to vector<1x32xf32>
    %c4_108 = arith.constant 4 : index
    %c0_109 = arith.constant 0 : index
    %c0_110 = arith.constant 0 : index
    %176 = vector.load %arg9[%c4_108, %c0_109, %c0_110] : memref<16x32x10xbf16, #tpu.memory_space<vmem>>, vector<1x32x10xbf16>
    %177 = vector.shape_cast %176 : vector<1x32x10xbf16> to vector<32x10xbf16>
    %178 = arith.truncf %175 : vector<1x32xf32> to vector<1x32xbf16>
    %cst_111 = arith.constant dense<0.000000e+00> : vector<1x10xf32>
    %179 = tpu.matmul %178, %177, %cst_111 {dimension_numbers = #tpu.dot_dimension_numbers<[1], [0], [0], [1], [0, 0, 1, 1], [], []>} : vector<1x32xbf16>, vector<32x10xbf16>, vector<1x10xf32> -> vector<1x10xf32>
    %180 = arith.addf %174, %179 : vector<1x10xf32>
    %181 = vector.extract_strided_slice %51 {offsets = [43, 0], sizes = [1, 32], strides = [1, 1]} : vector<72x32xf32> to vector<1x32xf32>
    %c5_112 = arith.constant 5 : index
    %c0_113 = arith.constant 0 : index
    %c0_114 = arith.constant 0 : index
    %182 = vector.load %arg9[%c5_112, %c0_113, %c0_114] : memref<16x32x10xbf16, #tpu.memory_space<vmem>>, vector<1x32x10xbf16>
    %183 = vector.shape_cast %182 : vector<1x32x10xbf16> to vector<32x10xbf16>
    %184 = arith.truncf %181 : vector<1x32xf32> to vector<1x32xbf16>
    %cst_115 = arith.constant dense<0.000000e+00> : vector<1x10xf32>
    %185 = tpu.matmul %184, %183, %cst_115 {dimension_numbers = #tpu.dot_dimension_numbers<[1], [0], [0], [1], [0, 0, 1, 1], [], []>} : vector<1x32xbf16>, vector<32x10xbf16>, vector<1x10xf32> -> vector<1x10xf32>
    %186 = arith.addf %180, %185 : vector<1x10xf32>
    %187 = vector.extract_strided_slice %51 {offsets = [44, 0], sizes = [1, 32], strides = [1, 1]} : vector<72x32xf32> to vector<1x32xf32>
    %c6_116 = arith.constant 6 : index
    %c0_117 = arith.constant 0 : index
    %c0_118 = arith.constant 0 : index
    %188 = vector.load %arg9[%c6_116, %c0_117, %c0_118] : memref<16x32x10xbf16, #tpu.memory_space<vmem>>, vector<1x32x10xbf16>
    %189 = vector.shape_cast %188 : vector<1x32x10xbf16> to vector<32x10xbf16>
    %190 = arith.truncf %187 : vector<1x32xf32> to vector<1x32xbf16>
    %cst_119 = arith.constant dense<0.000000e+00> : vector<1x10xf32>
    %191 = tpu.matmul %190, %189, %cst_119 {dimension_numbers = #tpu.dot_dimension_numbers<[1], [0], [0], [1], [0, 0, 1, 1], [], []>} : vector<1x32xbf16>, vector<32x10xbf16>, vector<1x10xf32> -> vector<1x10xf32>
    %192 = arith.addf %186, %191 : vector<1x10xf32>
    %193 = vector.extract_strided_slice %51 {offsets = [45, 0], sizes = [1, 32], strides = [1, 1]} : vector<72x32xf32> to vector<1x32xf32>
    %c7_120 = arith.constant 7 : index
    %c0_121 = arith.constant 0 : index
    %c0_122 = arith.constant 0 : index
    %194 = vector.load %arg9[%c7_120, %c0_121, %c0_122] : memref<16x32x10xbf16, #tpu.memory_space<vmem>>, vector<1x32x10xbf16>
    %195 = vector.shape_cast %194 : vector<1x32x10xbf16> to vector<32x10xbf16>
    %196 = arith.truncf %193 : vector<1x32xf32> to vector<1x32xbf16>
    %cst_123 = arith.constant dense<0.000000e+00> : vector<1x10xf32>
    %197 = tpu.matmul %196, %195, %cst_123 {dimension_numbers = #tpu.dot_dimension_numbers<[1], [0], [0], [1], [0, 0, 1, 1], [], []>} : vector<1x32xbf16>, vector<32x10xbf16>, vector<1x10xf32> -> vector<1x10xf32>
    %198 = arith.addf %192, %197 : vector<1x10xf32>
    %199 = vector.extract_strided_slice %51 {offsets = [48, 0], sizes = [1, 32], strides = [1, 1]} : vector<72x32xf32> to vector<1x32xf32>
    %c8_124 = arith.constant 8 : index
    %c0_125 = arith.constant 0 : index
    %c0_126 = arith.constant 0 : index
    %200 = vector.load %arg9[%c8_124, %c0_125, %c0_126] : memref<16x32x10xbf16, #tpu.memory_space<vmem>>, vector<1x32x10xbf16>
    %201 = vector.shape_cast %200 : vector<1x32x10xbf16> to vector<32x10xbf16>
    %202 = arith.truncf %199 : vector<1x32xf32> to vector<1x32xbf16>
    %cst_127 = arith.constant dense<0.000000e+00> : vector<1x10xf32>
    %203 = tpu.matmul %202, %201, %cst_127 {dimension_numbers = #tpu.dot_dimension_numbers<[1], [0], [0], [1], [0, 0, 1, 1], [], []>} : vector<1x32xbf16>, vector<32x10xbf16>, vector<1x10xf32> -> vector<1x10xf32>
    %204 = arith.addf %198, %203 : vector<1x10xf32>
    %205 = vector.extract_strided_slice %51 {offsets = [49, 0], sizes = [1, 32], strides = [1, 1]} : vector<72x32xf32> to vector<1x32xf32>
    %c9_128 = arith.constant 9 : index
    %c0_129 = arith.constant 0 : index
    %c0_130 = arith.constant 0 : index
    %206 = vector.load %arg9[%c9_128, %c0_129, %c0_130] : memref<16x32x10xbf16, #tpu.memory_space<vmem>>, vector<1x32x10xbf16>
    %207 = vector.shape_cast %206 : vector<1x32x10xbf16> to vector<32x10xbf16>
    %208 = arith.truncf %205 : vector<1x32xf32> to vector<1x32xbf16>
    %cst_131 = arith.constant dense<0.000000e+00> : vector<1x10xf32>
    %209 = tpu.matmul %208, %207, %cst_131 {dimension_numbers = #tpu.dot_dimension_numbers<[1], [0], [0], [1], [0, 0, 1, 1], [], []>} : vector<1x32xbf16>, vector<32x10xbf16>, vector<1x10xf32> -> vector<1x10xf32>
    %210 = arith.addf %204, %209 : vector<1x10xf32>
    %211 = vector.extract_strided_slice %51 {offsets = [50, 0], sizes = [1, 32], strides = [1, 1]} : vector<72x32xf32> to vector<1x32xf32>
    %c10_132 = arith.constant 10 : index
    %c0_133 = arith.constant 0 : index
    %c0_134 = arith.constant 0 : index
    %212 = vector.load %arg9[%c10_132, %c0_133, %c0_134] : memref<16x32x10xbf16, #tpu.memory_space<vmem>>, vector<1x32x10xbf16>
    %213 = vector.shape_cast %212 : vector<1x32x10xbf16> to vector<32x10xbf16>
    %214 = arith.truncf %211 : vector<1x32xf32> to vector<1x32xbf16>
    %cst_135 = arith.constant dense<0.000000e+00> : vector<1x10xf32>
    %215 = tpu.matmul %214, %213, %cst_135 {dimension_numbers = #tpu.dot_dimension_numbers<[1], [0], [0], [1], [0, 0, 1, 1], [], []>} : vector<1x32xbf16>, vector<32x10xbf16>, vector<1x10xf32> -> vector<1x10xf32>
    %216 = arith.addf %210, %215 : vector<1x10xf32>
    %217 = vector.extract_strided_slice %51 {offsets = [51, 0], sizes = [1, 32], strides = [1, 1]} : vector<72x32xf32> to vector<1x32xf32>
    %c11_136 = arith.constant 11 : index
    %c0_137 = arith.constant 0 : index
    %c0_138 = arith.constant 0 : index
    %218 = vector.load %arg9[%c11_136, %c0_137, %c0_138] : memref<16x32x10xbf16, #tpu.memory_space<vmem>>, vector<1x32x10xbf16>
    %219 = vector.shape_cast %218 : vector<1x32x10xbf16> to vector<32x10xbf16>
    %220 = arith.truncf %217 : vector<1x32xf32> to vector<1x32xbf16>
    %cst_139 = arith.constant dense<0.000000e+00> : vector<1x10xf32>
    %221 = tpu.matmul %220, %219, %cst_139 {dimension_numbers = #tpu.dot_dimension_numbers<[1], [0], [0], [1], [0, 0, 1, 1], [], []>} : vector<1x32xbf16>, vector<32x10xbf16>, vector<1x10xf32> -> vector<1x10xf32>
    %222 = arith.addf %216, %221 : vector<1x10xf32>
    %223 = vector.extract_strided_slice %51 {offsets = [54, 0], sizes = [1, 32], strides = [1, 1]} : vector<72x32xf32> to vector<1x32xf32>
    %c12_140 = arith.constant 12 : index
    %c0_141 = arith.constant 0 : index
    %c0_142 = arith.constant 0 : index
    %224 = vector.load %arg9[%c12_140, %c0_141, %c0_142] : memref<16x32x10xbf16, #tpu.memory_space<vmem>>, vector<1x32x10xbf16>
    %225 = vector.shape_cast %224 : vector<1x32x10xbf16> to vector<32x10xbf16>
    %226 = arith.truncf %223 : vector<1x32xf32> to vector<1x32xbf16>
    %cst_143 = arith.constant dense<0.000000e+00> : vector<1x10xf32>
    %227 = tpu.matmul %226, %225, %cst_143 {dimension_numbers = #tpu.dot_dimension_numbers<[1], [0], [0], [1], [0, 0, 1, 1], [], []>} : vector<1x32xbf16>, vector<32x10xbf16>, vector<1x10xf32> -> vector<1x10xf32>
    %228 = arith.addf %222, %227 : vector<1x10xf32>
    %229 = vector.extract_strided_slice %51 {offsets = [55, 0], sizes = [1, 32], strides = [1, 1]} : vector<72x32xf32> to vector<1x32xf32>
    %c13_144 = arith.constant 13 : index
    %c0_145 = arith.constant 0 : index
    %c0_146 = arith.constant 0 : index
    %230 = vector.load %arg9[%c13_144, %c0_145, %c0_146] : memref<16x32x10xbf16, #tpu.memory_space<vmem>>, vector<1x32x10xbf16>
    %231 = vector.shape_cast %230 : vector<1x32x10xbf16> to vector<32x10xbf16>
    %232 = arith.truncf %229 : vector<1x32xf32> to vector<1x32xbf16>
    %cst_147 = arith.constant dense<0.000000e+00> : vector<1x10xf32>
    %233 = tpu.matmul %232, %231, %cst_147 {dimension_numbers = #tpu.dot_dimension_numbers<[1], [0], [0], [1], [0, 0, 1, 1], [], []>} : vector<1x32xbf16>, vector<32x10xbf16>, vector<1x10xf32> -> vector<1x10xf32>
    %234 = arith.addf %228, %233 : vector<1x10xf32>
    %235 = vector.extract_strided_slice %51 {offsets = [56, 0], sizes = [1, 32], strides = [1, 1]} : vector<72x32xf32> to vector<1x32xf32>
    %c14_148 = arith.constant 14 : index
    %c0_149 = arith.constant 0 : index
    %c0_150 = arith.constant 0 : index
    %236 = vector.load %arg9[%c14_148, %c0_149, %c0_150] : memref<16x32x10xbf16, #tpu.memory_space<vmem>>, vector<1x32x10xbf16>
    %237 = vector.shape_cast %236 : vector<1x32x10xbf16> to vector<32x10xbf16>
    %238 = arith.truncf %235 : vector<1x32xf32> to vector<1x32xbf16>
    %cst_151 = arith.constant dense<0.000000e+00> : vector<1x10xf32>
    %239 = tpu.matmul %238, %237, %cst_151 {dimension_numbers = #tpu.dot_dimension_numbers<[1], [0], [0], [1], [0, 0, 1, 1], [], []>} : vector<1x32xbf16>, vector<32x10xbf16>, vector<1x10xf32> -> vector<1x10xf32>
    %240 = arith.addf %234, %239 : vector<1x10xf32>
    %241 = vector.extract_strided_slice %51 {offsets = [57, 0], sizes = [1, 32], strides = [1, 1]} : vector<72x32xf32> to vector<1x32xf32>
    %c15_152 = arith.constant 15 : index
    %c0_153 = arith.constant 0 : index
    %c0_154 = arith.constant 0 : index
    %242 = vector.load %arg9[%c15_152, %c0_153, %c0_154] : memref<16x32x10xbf16, #tpu.memory_space<vmem>>, vector<1x32x10xbf16>
    %243 = vector.shape_cast %242 : vector<1x32x10xbf16> to vector<32x10xbf16>
    %244 = arith.truncf %241 : vector<1x32xf32> to vector<1x32xbf16>
    %cst_155 = arith.constant dense<0.000000e+00> : vector<1x10xf32>
    %245 = tpu.matmul %244, %243, %cst_155 {dimension_numbers = #tpu.dot_dimension_numbers<[1], [0], [0], [1], [0, 0, 1, 1], [], []>} : vector<1x32xbf16>, vector<32x10xbf16>, vector<1x10xf32> -> vector<1x10xf32>
    %246 = arith.addf %240, %245 : vector<1x10xf32>
    %c1_156 = arith.constant 1 : index
    %c0_157 = arith.constant 0 : index
    %247 = vector.load %arg11[%c1_156, %c0_157] : memref<2x10xf32, #tpu.memory_space<vmem>>, vector<1x10xf32>
    tpu.vector_store %arg11[%c1_156, %c0_157], %246 {strides = array<i32>} : memref<2x10xf32, #tpu.memory_space<vmem>>, vector<1x10xf32>,
    return
  }
}

</mosaic_0001>

<llo_original>
// kernel: forward.1
$region0: #{forward.1}
  #allocation0 [shape = 'u32[]', space=smem, size = 0x4, offset = 0x4, fixed_abs, tag = 'smem constant byte address 0x4 - core index']
  #allocation1 [shape = 'u32[144,128]{1,0:T(1,128)}', space=vmem, size = 0x12000, scoped, tag = 'internal scratch']
  %s0 = inlined_call_operand.vmem [shape: bf16[80,180], index: 0, kind: input, shape index: {}]
  %s1 = inlined_call_operand.vmem [shape: bf16[180,64], index: 1, kind: input, shape index: {}]
  %s2 = inlined_call_operand.vmem [shape: f32[1,64], index: 2, kind: input, shape index: {}, may-alias: {2,4,6}]
  %s3 = inlined_call_operand.vmem [shape: bf16[64,64], index: 3, kind: input, shape index: {}]
  %s4 = inlined_call_operand.vmem [shape: f32[1,64], index: 4, kind: input, shape index: {}, may-alias: {2,4,6}]
  %s5 = inlined_call_operand.vmem [shape: bf16[64,64], index: 5, kind: input, shape index: {}]
  %s6 = inlined_call_operand.vmem [shape: f32[1,64], index: 6, kind: input, shape index: {}, may-alias: {2,4,6}]
  %s7 = inlined_call_operand.vmem [shape: bf16[4,64,32], index: 7, kind: input, shape index: {}]
  %s8 = inlined_call_operand.vmem [shape: f32[1,32], index: 8, kind: input, shape index: {}]
  %s9 = inlined_call_operand.vmem [shape: bf16[16,32,10], index: 9, kind: input, shape index: {}]
  %s10 = inlined_call_operand.vmem [shape: f32[1,10], index: 10, kind: input, shape index: {}]
  %s11 = inlined_call_operand.hbm [shape: f32[2,10], index: 11, kind: output, shape index: {}]
  %s12 = sld [smem:[#allocation0]]
  $region54: #{forward.1} parent=0
    _
  %s14 = ssub.s32 1, %s12
  %s15 = scalar_select 0, %s14, %s12
  $region1: #{forward.1} parent=0
    #allocation2 [shape = 'u8[1024]{0}', space=vmem, size = 0x400, scoped, tag = 'output window, operand 0, single buffered']
    #allocation3 [shape = 's32[1]{0}', space=sflag, size = 0x4, scoped, tag = 'scoped memory for forward.1']
    %16 = vsyncpa [#allocation3], 0
    // Predicated region
    $region2: #{forward.1} parent=1 // pred_check
      _
    $region3: #{forward.1} parent=1 // pred_check_branch
      %18 = sbr.rel (0) target = $region5
    $region4: #{forward.1} parent=1 // pred_region
      _
    $region5: #{forward.1} parent=1 // pred_fallthru
      _
    // Predicated region
    $region6: #{forward.1} parent=1 // pred_check
      _
    $region7: #{forward.1} parent=1 // pred_check_branch
      %20 = sbr.rel (0) target = $region9
    $region8: #{forward.1} parent=1 // pred_region
      _
    $region9: #{forward.1} parent=1 // pred_fallthru
      _
    // Predicated region
    $region10: #{forward.1} parent=1 // pred_check
      _
    $region11: #{forward.1} parent=1 // pred_check_branch
      %22 = sbr.rel (0) target = $region13
    $region12: #{forward.1} parent=1 // pred_region
      _
    $region13: #{forward.1} parent=1 // pred_fallthru
      _
    // Predicated region
    $region14: #{forward.1} parent=1 // pred_check
      _
    $region15: #{forward.1} parent=1 // pred_check_branch
      %24 = sbr.rel (0) target = $region17
    $region16: #{forward.1} parent=1 // pred_region
      _
    $region17: #{forward.1} parent=1 // pred_fallthru
      _
    // Predicated region
    $region18: #{forward.1} parent=1 // pred_check
      _
    $region19: #{forward.1} parent=1 // pred_check_branch
      %26 = sbr.rel (0) target = $region21
    $region20: #{forward.1} parent=1 // pred_region
      _
    $region21: #{forward.1} parent=1 // pred_fallthru
      _
    // Predicated region
    $region22: #{forward.1} parent=1 // pred_check
      _
    $region23: #{forward.1} parent=1 // pred_check_branch
      %28 = sbr.rel (0) target = $region25
    $region24: #{forward.1} parent=1 // pred_region
      _
    $region25: #{forward.1} parent=1 // pred_fallthru
      _
    // Predicated region
    $region26: #{forward.1} parent=1 // pred_check
      _
    $region27: #{forward.1} parent=1 // pred_check_branch
      %30 = sbr.rel (0) target = $region29
    $region28: #{forward.1} parent=1 // pred_region
      _
    $region29: #{forward.1} parent=1 // pred_fallthru
      _
    // Predicated region
    $region30: #{forward.1} parent=1 // pred_check
      _
    $region31: #{forward.1} parent=1 // pred_check_branch
      %32 = sbr.rel (0) target = $region33
    $region32: #{forward.1} parent=1 // pred_region
      _
    $region33: #{forward.1} parent=1 // pred_fallthru
      _
    // Predicated region
    $region34: #{forward.1} parent=1 // pred_check
      _
    $region35: #{forward.1} parent=1 // pred_check_branch
      %34 = sbr.rel (0) target = $region37
    $region36: #{forward.1} parent=1 // pred_region
      _
    $region37: #{forward.1} parent=1 // pred_fallthru
      _
    // Predicated region
    $region38: #{forward.1} parent=1 // pred_check
      _
    $region39: #{forward.1} parent=1 // pred_check_branch
      %36 = sbr.rel (0) target = $region41
    $region40: #{forward.1} parent=1 // pred_region
      _
    $region41: #{forward.1} parent=1 // pred_fallthru
      _
    // Predicated region
    $region42: #{forward.1} parent=1 // pred_check
      _
    $region43: #{forward.1} parent=1 // pred_check_branch
      %38 = sbr.rel (0) target = $region45
    $region44: #{forward.1} parent=1 // pred_region
      _
    $region45: #{forward.1} parent=1 // pred_fallthru
      _
    %v40 = vld [vmem:[%s0] sm:$0xff]
    %v41 = vld [vmem:[%s0 + $0x8] sm:$0xff]
    %v42 = vld [vmem:[%s0 + $0x10] sm:$0xff]
    %v43 = vld [vmem:[%s0 + $0x18] sm:$0xff]
    %v44 = vld [vmem:[%s0 + $0x20] sm:$0xff]
    %v45 = vld [vmem:[%s0 + $0x28] sm:$0xff]
    %v46 = vld [vmem:[%s0 + $0x30] sm:$0xff]
    %v47 = vld [vmem:[%s0 + $0x38] sm:$0xff]
    %v48 = vld [vmem:[%s0 + $0x40] sm:$0xff]
    %v49 = vld [vmem:[%s0 + $0x48] sm:$0xff]
    %v50 = vld [vmem:[%s1] sm:$0xf]
    %v51 = vld [vmem:[%s1 + $0x4] sm:$0xf]
    %v52 = vld [vmem:[%s1 + $0x8] sm:$0xf]
    %v53 = vld [vmem:[%s1 + $0xc] sm:$0xf]
    %v54 = vld [vmem:[%s1 + $0x10] sm:$0xf]
    %v55 = vld [vmem:[%s1 + $0x14] sm:$0xf]
    %v56 = vld [vmem:[%s1 + $0x18] sm:$0xf]
    %v57 = vld [vmem:[%s1 + $0x1c] sm:$0xf]
    %v58 = vld [vmem:[%s1 + $0x20] sm:$0xf]
    %v59 = vld [vmem:[%s1 + $0x24] sm:$0xf]
    %v60 = vld [vmem:[%s1 + $0x28] sm:$0xf]
    %v61 = vld [vmem:[%s1 + $0x2c] sm:$0xf]
    %v62 = vld [vmem:[%s1 + $0x30] sm:$0xf]
    %v63 = vld [vmem:[%s1 + $0x34] sm:$0xf]
    %v64 = vld [vmem:[%s1 + $0x38] sm:$0xf]
    %v65 = vld [vmem:[%s1 + $0x3c] sm:$0xf]
    %v66 = vld [vmem:[%s1 + $0x40] sm:$0xf]
    %v67 = vld [vmem:[%s1 + $0x44] sm:$0xf]
    %v68 = vld [vmem:[%s1 + $0x48] sm:$0xf]
    %v69 = vld [vmem:[%s1 + $0x4c] sm:$0xf]
    %v70 = vld [vmem:[%s1 + $0x50] sm:$0xf]
    %v71 = vld [vmem:[%s1 + $0x54] sm:$0xf]
    %v72 = vld [vmem:[%s1 + $0x58] sm:$0x3]
    %v73 = vld [vmem:[%s2] sm:$0x1]
    %v75 = vlaneseq
    %v76 = vshrl.u32 %v75, 7
    %v77 = vsub.s32 0, %v76
    %v78 = vrot.slane %v73, %v77
    %v90 = vunpack.c.l.b16 %v40
    %v91 = vunpack.c.h.b16 %v40
    %v92 = vunpack.c.l.b16 %v41
    %v93 = vunpack.c.h.b16 %v41
    %v94 = vunpack.c.l.b16 %v42
    %v95 = vunpack.c.h.b16 %v42
    %v96 = vunpack.c.l.b16 %v43
    %v97 = vunpack.c.h.b16 %v43
    %v98 = vunpack.c.l.b16 %v44
    %v99 = vunpack.c.h.b16 %v44
    %v100 = vunpack.c.l.b16 %v45
    %v101 = vunpack.c.h.b16 %v45
    %v102 = vunpack.c.l.b16 %v46
    %v103 = vunpack.c.h.b16 %v46
    %v104 = vunpack.c.l.b16 %v47
    %v105 = vunpack.c.h.b16 %v47
    %v106 = vunpack.c.l.b16 %v48
    %v107 = vunpack.c.h.b16 %v48
    %v108 = vunpack.c.l.b16 %v49
    %v109 = vunpack.c.h.b16 %v49
    %v110 = vpack.c.b16 %v92, %v90
    %v111 = vpack.c.b16 %v93, %v91
    %v112 = vpack.c.b16 %v96, %v94
    %v113 = vpack.c.b16 %v97, %v95
    %v114 = vpack.c.b16 %v100, %v98
    %v115 = vpack.c.b16 %v101, %v99
    %v116 = vpack.c.b16 %v104, %v102
    %v117 = vpack.c.b16 %v105, %v103
    %v118 = vpack.c.b16 %v108, %v106
    %v119 = vpack.c.b16 %v109, %v107
    %v148 = vunpack.c.l.b16 %v50
    %v149 = vunpack.c.l.b16 %v51
    %v150 = vunpack.c.l.b16 %v52
    %v151 = vunpack.c.l.b16 %v53
    %v152 = vunpack.c.l.b16 %v54
    %v153 = vunpack.c.l.b16 %v55
    %v154 = vunpack.c.l.b16 %v56
    %v155 = vunpack.c.l.b16 %v57
    %v156 = vunpack.c.l.b16 %v58
    %v157 = vunpack.c.l.b16 %v59
    %v158 = vunpack.c.l.b16 %v60
    %v159 = vunpack.c.l.b16 %v61
    %v160 = vunpack.c.l.b16 %v62
    %v161 = vunpack.c.l.b16 %v63
    %v162 = vunpack.c.l.b16 %v64
    %v163 = vunpack.c.l.b16 %v65
    %v164 = vunpack.c.l.b16 %v66
    %v165 = vunpack.c.l.b16 %v67
    %v166 = vunpack.c.l.b16 %v68
    %v167 = vunpack.c.l.b16 %v69
    %v168 = vunpack.c.l.b16 %v70
    %v169 = vunpack.c.l.b16 %v71
    %v170 = vunpack.c.l.b16 %v72
    %v171 = vpack.c.b16 %v149, %v148
    %v172 = vpack.c.b16 %v151, %v150
    %v173 = vpack.c.b16 %v153, %v152
    %v174 = vpack.c.b16 %v155, %v154
    %v175 = vpack.c.b16 %v157, %v156
    %v176 = vpack.c.b16 %v159, %v158
    %v177 = vpack.c.b16 %v161, %v160
    %v178 = vpack.c.b16 %v163, %v162
    %v179 = vpack.c.b16 %v165, %v164
    %v180 = vpack.c.b16 %v167, %v166
    %v181 = vpack.c.b16 %v169, %v168
    %v182 = vpack.c.b16 %v170, %v170
    %vm194 = vcmask 424960
    %v196 = vsel %vm194, %v111, 0
    %v199 = vsel %vm194, %v113, 0
    %v202 = vsel %vm194, %v115, 0
    %v205 = vsel %vm194, %v117, 0
    %v208 = vsel %vm194, %v119, 0
    %vm210 = vcmask 1041408
    %v212 = vsel %vm210, %v182, 0
    %214 = vmatprep.subr.bf16.mxu0 0
    %215 = vmatpush1.bf16.msra.mxu0 %v178
    %216 = vmatprep.subr.bf16.mxu0 0
    %217 = vmatpush1.bf16.msra.mxu0 %v177
    %218 = vmatprep.subr.bf16.mxu0 0
    %219 = vmatpush1.bf16.msra.mxu0 %v176
    %220 = vmatprep.subr.bf16.mxu0 0
    %221 = vmatpush1.bf16.msra.mxu0 %v175
    %222 = vmatprep.subr.bf16.mxu0 0
    %223 = vmatpush1.bf16.msra.mxu0 %v174
    %224 = vmatprep.subr.bf16.mxu0 0
    %225 = vmatpush1.bf16.msra.mxu0 %v173
    %226 = vmatprep.subr.bf16.mxu0 0
    %227 = vmatpush1.bf16.msra.mxu0 %v172
    %228 = vmatprep.subr.bf16.mxu0 0
    %229 = vmatpush1.bf16.msra.mxu0 %v171
    %230 = vmatprep.subr.bf16.mxu0 0
    %231 = vmatpush2.bf16.msra.mxu0 0
    %232 = vmatprep.subr.bf16.mxu0 0
    %233 = vmatpush2.bf16.msra.mxu0 0
    %234 = vmatprep.subr.bf16.mxu0 0
    %235 = vmatpush2.bf16.msra.mxu0 0
    %236 = vmatprep.subr.bf16.mxu0 0
    %237 = vmatpush2.bf16.msra.mxu0 0
    %238 = vmatprep.subr.bf16.mxu0 0
    %239 = vmatpush2.bf16.msra.mxu0 %v212
    %240 = vmatprep.subr.bf16.mxu0 0
    %241 = vmatpush2.bf16.msra.mxu0 %v181
    %242 = vmatprep.subr.bf16.mxu0 0
    %243 = vmatpush2.bf16.msra.mxu0 %v180
    %244 = vmatprep.subr.bf16.mxu0 0
    %245 = vmatpush2.bf16.msra.mxu0 %v179
    %246 = vmatprep.mubr.bf16.mxu0 %v196
    %247 = vmatmul.mubr.bf16.gmra.mxu0 %v110
    %v248 = vpop.f32.mrf.mxu0
    %v249 = vadd.f32 %v78, %v248
    %v250 = vpop.f32.mrf.mxu0
    %v251 = vpop.f32.mrf.mxu0
    %v252 = vadd.f32 %v78, %v251
    %v253 = vpop.f32.mrf.mxu0
    %254 = vmatprep.mubr.bf16.mxu0 %v199
    %255 = vmatmul.mubr.bf16.gmra.mxu0 %v112
    %v256 = vpop.f32.mrf.mxu0
    %v257 = vadd.f32 %v78, %v256
    %v258 = vpop.f32.mrf.mxu0
    %v259 = vpop.f32.mrf.mxu0
    %v260 = vadd.f32 %v78, %v259
    %v261 = vpop.f32.mrf.mxu0
    %262 = vmatprep.mubr.bf16.mxu0 %v202
    %263 = vmatmul.mubr.bf16.gmra.mxu0 %v114
    %v264 = vpop.f32.mrf.mxu0
    %v265 = vadd.f32 %v78, %v264
    %v266 = vpop.f32.mrf.mxu0
    %v267 = vpop.f32.mrf.mxu0
    %v268 = vadd.f32 %v78, %v267
    %v269 = vpop.f32.mrf.mxu0
    %270 = vmatprep.mubr.bf16.mxu0 %v205
    %271 = vmatmul.mubr.bf16.gmra.mxu0 %v116
    %v272 = vpop.f32.mrf.mxu0
    %v273 = vadd.f32 %v78, %v272
    %v274 = vpop.f32.mrf.mxu0
    %v275 = vpop.f32.mrf.mxu0
    %v276 = vadd.f32 %v78, %v275
    %v277 = vpop.f32.mrf.mxu0
    %278 = vmatprep.mubr.bf16.mxu0 %v208
    %279 = vmatmul.mubr.bf16.gmra.mxu0 %v118
    %v280 = vpop.f32.mrf.mxu0
    %v281 = vadd.f32 %v78, %v280
    %v282 = vpop.f32.mrf.mxu0
    %v283 = vpop.f32.mrf.mxu0
    %v284 = vadd.f32 %v78, %v283
    %v285 = vpop.f32.mrf.mxu0
    %286 = vdwg.mxu0
    %v287 = vmax.f32 %v249, 0.0
    %v288 = vmax.f32 %v252, 0.0
    %v289 = vmax.f32 %v257, 0.0
    %v290 = vmax.f32 %v260, 0.0
    %v291 = vmax.f32 %v265, 0.0
    %v292 = vmax.f32 %v268, 0.0
    %v293 = vmax.f32 %v273, 0.0
    %v294 = vmax.f32 %v276, 0.0
    %v295 = vmax.f32 %v281, 0.0
    %v296 = vmax.f32 %v284, 0.0
    %v297 = vld [vmem:[%s3] sm:$0xf]
    %v298 = vld [vmem:[%s3 + $0x4] sm:$0xf]
    %v299 = vld [vmem:[%s3 + $0x8] sm:$0xf]
    %v300 = vld [vmem:[%s3 + $0xc] sm:$0xf]
    %v301 = vld [vmem:[%s3 + $0x10] sm:$0xf]
    %v302 = vld [vmem:[%s3 + $0x14] sm:$0xf]
    %v303 = vld [vmem:[%s3 + $0x18] sm:$0xf]
    %v304 = vld [vmem:[%s3 + $0x1c] sm:$0xf]
    %v305 = vpack.c.bf16 %v288, %v287
    %v306 = vpack.c.bf16 %v290, %v289
    %v307 = vpack.c.bf16 %v292, %v291
    %v308 = vpack.c.bf16 %v294, %v293
    %v309 = vpack.c.bf16 %v296, %v295
    %v310 = vld [vmem:[%s4] sm:$0x1]
    %v312 = vlaneseq
    %v313 = vshrl.u32 %v312, 7
    %v314 = vsub.s32 0, %v313
    %v315 = vrot.slane %v310, %v314
    %v325 = vunpack.c.l.b16 %v297
    %v326 = vunpack.c.l.b16 %v298
    %v327 = vunpack.c.l.b16 %v299
    %v328 = vunpack.c.l.b16 %v300
    %v329 = vunpack.c.l.b16 %v301
    %v330 = vunpack.c.l.b16 %v302
    %v331 = vunpack.c.l.b16 %v303
    %v332 = vunpack.c.l.b16 %v304
    %v333 = vpack.c.b16 %v326, %v325
    %v334 = vpack.c.b16 %v328, %v327
    %v335 = vpack.c.b16 %v330, %v329
    %v336 = vpack.c.b16 %v332, %v331
    %vm341 = vcmask 523264
    %v343 = vsel %vm341, %v305, 0
    %v346 = vsel %vm341, %v306, 0
    %v349 = vsel %vm341, %v307, 0
    %v352 = vsel %vm341, %v308, 0
    %v355 = vsel %vm341, %v309, 0
    %357 = vmatprep.subr.bf16.mxu0 0
    %358 = vmatpush1.bf16.msra.mxu0 0
    %359 = vmatprep.subr.bf16.mxu0 0
    %360 = vmatpush1.bf16.msra.mxu0 0
    %361 = vmatprep.subr.bf16.mxu0 0
    %362 = vmatpush1.bf16.msra.mxu0 0
    %363 = vmatprep.subr.bf16.mxu0 0
    %364 = vmatpush1.bf16.msra.mxu0 0
    %365 = vmatprep.subr.bf16.mxu0 0
    %366 = vmatpush1.bf16.msra.mxu0 %v336
    %367 = vmatprep.subr.bf16.mxu0 0
    %368 = vmatpush1.bf16.msra.mxu0 %v335
    %369 = vmatprep.subr.bf16.mxu0 0
    %370 = vmatpush1.bf16.msra.mxu0 %v334
    %371 = vmatprep.subr.bf16.mxu0 0
    %372 = vmatpush1.bf16.msra.mxu0 %v333
    %373 = vmatprep.subr.bf16.mxu0 0
    %374 = vmatpush2.bf16.msra.mxu0 0
    %375 = vmatprep.subr.bf16.mxu0 0
    %376 = vmatpush2.bf16.msra.mxu0 0
    %377 = vmatprep.subr.bf16.mxu0 0
    %378 = vmatpush2.bf16.msra.mxu0 0
    %379 = vmatprep.subr.bf16.mxu0 0
    %380 = vmatpush2.bf16.msra.mxu0 0
    %381 = vmatprep.subr.bf16.mxu0 0
    %382 = vmatpush2.bf16.msra.mxu0 0
    %383 = vmatprep.subr.bf16.mxu0 0
    %384 = vmatpush2.bf16.msra.mxu0 0
    %385 = vmatprep.subr.bf16.mxu0 0
    %386 = vmatpush2.bf16.msra.mxu0 0
    %387 = vmatprep.subr.bf16.mxu0 0
    %388 = vmatpush2.bf16.msra.mxu0 0
    %389 = vmatprep.mubr.bf16.mxu0 0
    %390 = vmatmul.mubr.bf16.gmra.mxu0 %v343
    %v391 = vpop.f32.mrf.mxu0
    %v392 = vadd.f32 %v315, %v391
    %v393 = vpop.f32.mrf.mxu0
    %v394 = vpop.f32.mrf.mxu0
    %v395 = vadd.f32 %v315, %v394
    %v396 = vpop.f32.mrf.mxu0
    %397 = vmatprep.mubr.bf16.mxu0 0
    %398 = vmatmul.mubr.bf16.gmra.mxu0 %v346
    %v399 = vpop.f32.mrf.mxu0
    %v400 = vadd.f32 %v315, %v399
    %v401 = vpop.f32.mrf.mxu0
    %v402 = vpop.f32.mrf.mxu0
    %v403 = vadd.f32 %v315, %v402
    %v404 = vpop.f32.mrf.mxu0
    %405 = vmatprep.mubr.bf16.mxu0 0
    %406 = vmatmul.mubr.bf16.gmra.mxu0 %v349
    %v407 = vpop.f32.mrf.mxu0
    %v408 = vadd.f32 %v315, %v407
    %v409 = vpop.f32.mrf.mxu0
    %v410 = vpop.f32.mrf.mxu0
    %v411 = vadd.f32 %v315, %v410
    %v412 = vpop.f32.mrf.mxu0
    %413 = vmatprep.mubr.bf16.mxu0 0
    %414 = vmatmul.mubr.bf16.gmra.mxu0 %v352
    %v415 = vpop.f32.mrf.mxu0
    %v416 = vadd.f32 %v315, %v415
    %v417 = vpop.f32.mrf.mxu0
    %v418 = vpop.f32.mrf.mxu0
    %v419 = vadd.f32 %v315, %v418
    %v420 = vpop.f32.mrf.mxu0
    %421 = vmatprep.mubr.bf16.mxu0 0
    %422 = vmatmul.mubr.bf16.gmra.mxu0 %v355
    %v423 = vpop.f32.mrf.mxu0
    %v424 = vadd.f32 %v315, %v423
    %v425 = vpop.f32.mrf.mxu0
    %v426 = vpop.f32.mrf.mxu0
    %v427 = vadd.f32 %v315, %v426
    %v428 = vpop.f32.mrf.mxu0
    %429 = vdwg.mxu0
    %v430 = vmax.f32 %v392, 0.0
    %v431 = vmax.f32 %v395, 0.0
    %v432 = vmax.f32 %v400, 0.0
    %v433 = vmax.f32 %v403, 0.0
    %v434 = vmax.f32 %v408, 0.0
    %v435 = vmax.f32 %v411, 0.0
    %v436 = vmax.f32 %v416, 0.0
    %v437 = vmax.f32 %v419, 0.0
    %v438 = vmax.f32 %v424, 0.0
    %v439 = vmax.f32 %v427, 0.0
    %v440 = vld [vmem:[%s5] sm:$0xf]
    %v441 = vld [vmem:[%s5 + $0x4] sm:$0xf]
    %v442 = vld [vmem:[%s5 + $0x8] sm:$0xf]
    %v443 = vld [vmem:[%s5 + $0xc] sm:$0xf]
    %v444 = vld [vmem:[%s5 + $0x10] sm:$0xf]
    %v445 = vld [vmem:[%s5 + $0x14] sm:$0xf]
    %v446 = vld [vmem:[%s5 + $0x18] sm:$0xf]
    %v447 = vld [vmem:[%s5 + $0x1c] sm:$0xf]
    %v448 = vpack.c.bf16 %v431, %v430
    %v449 = vpack.c.bf16 %v433, %v432
    %v450 = vpack.c.bf16 %v435, %v434
    %v451 = vpack.c.bf16 %v437, %v436
    %v452 = vpack.c.bf16 %v439, %v438
    %v453 = vld [vmem:[%s6] sm:$0x1]
    %v455 = vlaneseq
    %v456 = vshrl.u32 %v455, 7
    %v457 = vsub.s32 0, %v456
    %v458 = vrot.slane %v453, %v457
    %v468 = vunpack.c.l.b16 %v440
    %v469 = vunpack.c.l.b16 %v441
    %v470 = vunpack.c.l.b16 %v442
    %v471 = vunpack.c.l.b16 %v443
    %v472 = vunpack.c.l.b16 %v444
    %v473 = vunpack.c.l.b16 %v445
    %v474 = vunpack.c.l.b16 %v446
    %v475 = vunpack.c.l.b16 %v447
    %v476 = vpack.c.b16 %v469, %v468
    %v477 = vpack.c.b16 %v471, %v470
    %v478 = vpack.c.b16 %v473, %v472
    %v479 = vpack.c.b16 %v475, %v474
    %v485 = vsel %vm341, %v448, 0
    %v488 = vsel %vm341, %v449, 0
    %v491 = vsel %vm341, %v450, 0
    %v494 = vsel %vm341, %v451, 0
    %v497 = vsel %vm341, %v452, 0
    %499 = vmatprep.subr.bf16.mxu0 0
    %500 = vmatpush1.bf16.msra.mxu0 0
    %501 = vmatprep.subr.bf16.mxu0 0
    %502 = vmatpush1.bf16.msra.mxu0 0
    %503 = vmatprep.subr.bf16.mxu0 0
    %504 = vmatpush1.bf16.msra.mxu0 0
    %505 = vmatprep.subr.bf16.mxu0 0
    %506 = vmatpush1.bf16.msra.mxu0 0
    %507 = vmatprep.subr.bf16.mxu0 0
    %508 = vmatpush1.bf16.msra.mxu0 %v479
    %509 = vmatprep.subr.bf16.mxu0 0
    %510 = vmatpush1.bf16.msra.mxu0 %v478
    %511 = vmatprep.subr.bf16.mxu0 0
    %512 = vmatpush1.bf16.msra.mxu0 %v477
    %513 = vmatprep.subr.bf16.mxu0 0
    %514 = vmatpush1.bf16.msra.mxu0 %v476
    %515 = vmatprep.subr.bf16.mxu0 0
    %516 = vmatpush2.bf16.msra.mxu0 0
    %517 = vmatprep.subr.bf16.mxu0 0
    %518 = vmatpush2.bf16.msra.mxu0 0
    %519 = vmatprep.subr.bf16.mxu0 0
    %520 = vmatpush2.bf16.msra.mxu0 0
    %521 = vmatprep.subr.bf16.mxu0 0
    %522 = vmatpush2.bf16.msra.mxu0 0
    %523 = vmatprep.subr.bf16.mxu0 0
    %524 = vmatpush2.bf16.msra.mxu0 0
    %525 = vmatprep.subr.bf16.mxu0 0
    %526 = vmatpush2.bf16.msra.mxu0 0
    %527 = vmatprep.subr.bf16.mxu0 0
    %528 = vmatpush2.bf16.msra.mxu0 0
    %529 = vmatprep.subr.bf16.mxu0 0
    %530 = vmatpush2.bf16.msra.mxu0 0
    %531 = vmatprep.mubr.bf16.mxu0 0
    %532 = vmatmul.mubr.bf16.gmra.mxu0 %v485
    %v533 = vpop.f32.mrf.mxu0
    %v534 = vadd.f32 %v458, %v533
    %v535 = vpop.f32.mrf.mxu0
    %v536 = vpop.f32.mrf.mxu0
    %v537 = vadd.f32 %v458, %v536
    %v538 = vpop.f32.mrf.mxu0
    %539 = vmatprep.mubr.bf16.mxu0 0
    %540 = vmatmul.mubr.bf16.gmra.mxu0 %v488
    %v541 = vpop.f32.mrf.mxu0
    %v542 = vadd.f32 %v458, %v541
    %v543 = vpop.f32.mrf.mxu0
    %v544 = vpop.f32.mrf.mxu0
    %v545 = vadd.f32 %v458, %v544
    %v546 = vpop.f32.mrf.mxu0
    %547 = vmatprep.mubr.bf16.mxu0 0
    %548 = vmatmul.mubr.bf16.gmra.mxu0 %v491
    %v549 = vpop.f32.mrf.mxu0
    %v550 = vadd.f32 %v458, %v549
    %v551 = vpop.f32.mrf.mxu0
    %v552 = vpop.f32.mrf.mxu0
    %v553 = vadd.f32 %v458, %v552
    %v554 = vpop.f32.mrf.mxu0
    %555 = vmatprep.mubr.bf16.mxu0 0
    %556 = vmatmul.mubr.bf16.gmra.mxu0 %v494
    %v557 = vpop.f32.mrf.mxu0
    %v558 = vadd.f32 %v458, %v557
    %v559 = vpop.f32.mrf.mxu0
    %v560 = vpop.f32.mrf.mxu0
    %v561 = vadd.f32 %v458, %v560
    %v562 = vpop.f32.mrf.mxu0
    %563 = vmatprep.mubr.bf16.mxu0 0
    %564 = vmatmul.mubr.bf16.gmra.mxu0 %v497
    %v565 = vpop.f32.mrf.mxu0
    %v566 = vadd.f32 %v458, %v565
    %v567 = vpop.f32.mrf.mxu0
    %v568 = vpop.f32.mrf.mxu0
    %v569 = vadd.f32 %v458, %v568
    %v570 = vpop.f32.mrf.mxu0
    %571 = vdwg.mxu0
    %v572 = vmax.f32 %v534, 0.0
    %v573 = vmax.f32 %v537, 0.0
    %v574 = vmax.f32 %v542, 0.0
    %v575 = vmax.f32 %v545, 0.0
    %v576 = vmax.f32 %v550, 0.0
    %v577 = vmax.f32 %v553, 0.0
    %v578 = vmax.f32 %v558, 0.0
    %v579 = vmax.f32 %v561, 0.0
    %v580 = vmax.f32 %v566, 0.0
    %v581 = vmax.f32 %v569, 0.0
    %v582 = vld [vmem:[%s7] sm:$0xf]
    %v583 = vld [vmem:[%s7 + $0x4] sm:$0xf]
    %v584 = vld [vmem:[%s7 + $0x8] sm:$0xf]
    %v585 = vld [vmem:[%s7 + $0xc] sm:$0xf]
    %v586 = vld [vmem:[%s7 + $0x10] sm:$0xf]
    %v587 = vld [vmem:[%s7 + $0x14] sm:$0xf]
    %v588 = vld [vmem:[%s7 + $0x18] sm:$0xf]
    %v589 = vld [vmem:[%s7 + $0x1c] sm:$0xf]
    %v590 = vpack.c.bf16 %v573, %v572
    %v591 = vpack.c.bf16 %v575, %v574
    %v592 = vpack.c.bf16 %v577, %v576
    %v593 = vpack.c.bf16 %v579, %v578
    %v594 = vpack.c.bf16 %v580, %v580
    %s595 = scalar_lea.vmem %s7, 32
    %v596 = vld [vmem:[%s595] sm:$0xf]
    %v597 = vld [vmem:[%s595 + $0x4] sm:$0xf]
    %v598 = vld [vmem:[%s595 + $0x8] sm:$0xf]
    %v599 = vld [vmem:[%s595 + $0xc] sm:$0xf]
    %v600 = vld [vmem:[%s595 + $0x10] sm:$0xf]
    %v601 = vld [vmem:[%s595 + $0x14] sm:$0xf]
    %v602 = vld [vmem:[%s595 + $0x18] sm:$0xf]
    %v603 = vld [vmem:[%s595 + $0x1c] sm:$0xf]
    %v604 = vpack.c.bf16 %v581, %v580
    %vm605 = vsmask.f32 7424
    %v607 = vshrl.u32 %v590, 16
    %v609 = vshll.u32 %v590, 16
    %v611 = vrot.slane %v609, 1
    %v612 = vor.u32 %v607, %v611
    %v614 = vshll.u32 %v591, 16
    %v616 = vrot.slane %v614, 1
    %v617 = vsel %vm605, %v612, %v616
    %v618 = vshrl.u32 %v591, 16
    %v620 = vor.u32 %v618, %v616
    %v622 = vshll.u32 %v592, 16
    %v624 = vrot.slane %v622, 1
    %v625 = vsel %vm605, %v620, %v624
    %v626 = vshrl.u32 %v592, 16
    %v628 = vor.u32 %v626, %v624
    %v630 = vshll.u32 %v593, 16
    %v632 = vrot.slane %v630, 1
    %v633 = vsel %vm605, %v628, %v632
    %v634 = vshrl.u32 %v593, 16
    %v636 = vor.u32 %v634, %v632
    %v638 = vshll.u32 %v604, 16
    %v640 = vrot.slane %v638, 1
    %v641 = vsel %vm605, %v636, %v640
    %v642 = vshrl.u32 %v604, 16
    %v644 = vor.u32 %v642, %v640
    %v653 = vunpack.c.l.b16 %v596
    %v654 = vunpack.c.l.b16 %v597
    %v655 = vunpack.c.l.b16 %v598
    %v656 = vunpack.c.l.b16 %v599
    %v657 = vunpack.c.l.b16 %v600
    %v658 = vunpack.c.l.b16 %v601
    %v659 = vunpack.c.l.b16 %v602
    %v660 = vunpack.c.l.b16 %v603
    %v661 = vpack.c.b16 %v654, %v653
    %v662 = vpack.c.b16 %v656, %v655
    %v663 = vpack.c.b16 %v658, %v657
    %v664 = vpack.c.b16 %v660, %v659
    %v670 = vsel %vm341, %v617, 0
    %v673 = vsel %vm341, %v625, 0
    %v676 = vsel %vm341, %v633, 0
    %v679 = vsel %vm341, %v641, 0
    %v682 = vsel %vm341, %v644, 0
    %684 = vmatprep.subr.bf16.mxu0 0
    %685 = vmatpush1.bf16.msra.mxu0 0
    %686 = vmatprep.subr.bf16.mxu0 0
    %687 = vmatpush1.bf16.msra.mxu0 0
    %688 = vmatprep.subr.bf16.mxu0 0
    %689 = vmatpush1.bf16.msra.mxu0 0
    %690 = vmatprep.subr.bf16.mxu0 0
    %691 = vmatpush1.bf16.msra.mxu0 0
    %692 = vmatprep.subr.bf16.mxu0 0
    %693 = vmatpush1.bf16.msra.mxu0 %v664
    %694 = vmatprep.subr.bf16.mxu0 0
    %695 = vmatpush1.bf16.msra.mxu0 %v663
    %696 = vmatprep.subr.bf16.mxu0 0
    %697 = vmatpush1.bf16.msra.mxu0 %v662
    %698 = vmatprep.subr.bf16.mxu0 0
    %699 = vmatpush1.bf16.msra.mxu0 %v661
    %700 = vmatprep.subr.bf16.mxu0 0
    %701 = vmatpush2.bf16.msra.mxu0 0
    %702 = vmatprep.subr.bf16.mxu0 0
    %703 = vmatpush2.bf16.msra.mxu0 0
    %704 = vmatprep.subr.bf16.mxu0 0
    %705 = vmatpush2.bf16.msra.mxu0 0
    %706 = vmatprep.subr.bf16.mxu0 0
    %707 = vmatpush2.bf16.msra.mxu0 0
    %708 = vmatprep.subr.bf16.mxu0 0
    %709 = vmatpush2.bf16.msra.mxu0 0
    %710 = vmatprep.subr.bf16.mxu0 0
    %711 = vmatpush2.bf16.msra.mxu0 0
    %712 = vmatprep.subr.bf16.mxu0 0
    %713 = vmatpush2.bf16.msra.mxu0 0
    %714 = vmatprep.subr.bf16.mxu0 0
    %715 = vmatpush2.bf16.msra.mxu0 0
    %716 = vmatprep.mubr.bf16.mxu0 0
    %717 = vmatmul.mubr.bf16.gmra.mxu0 %v670
    %v718 = vpop.f32.mrf.mxu0
    %v719 = vadd.f32 0.0, %v718
    %v720 = vpop.f32.mrf.mxu0
    %v721 = vpop.f32.mrf.mxu0
    %v722 = vadd.f32 0.0, %v721
    %v723 = vpop.f32.mrf.mxu0
    %724 = vmatprep.mubr.bf16.mxu0 0
    %725 = vmatmul.mubr.bf16.gmra.mxu0 %v673
    %v726 = vpop.f32.mrf.mxu0
    %v727 = vadd.f32 0.0, %v726
    %v728 = vpop.f32.mrf.mxu0
    %v729 = vpop.f32.mrf.mxu0
    %v730 = vpop.f32.mrf.mxu0
    %731 = vmatprep.mubr.bf16.mxu0 0
    %732 = vmatmul.mubr.bf16.gmra.mxu0 %v676
    %v733 = vpop.f32.mrf.mxu0
    %v734 = vadd.f32 0.0, %v733
    %v735 = vpop.f32.mrf.mxu0
    %v736 = vpop.f32.mrf.mxu0
    %v737 = vadd.f32 0.0, %v736
    %v738 = vpop.f32.mrf.mxu0
    %739 = vmatprep.mubr.bf16.mxu0 0
    %740 = vmatmul.mubr.bf16.gmra.mxu0 %v679
    %v741 = vpop.f32.mrf.mxu0
    %v742 = vadd.f32 0.0, %v741
    %v743 = vpop.f32.mrf.mxu0
    %v744 = vpop.f32.mrf.mxu0
    %v745 = vadd.f32 0.0, %v744
    %v746 = vpop.f32.mrf.mxu0
    %747 = vmatprep.mubr.bf16.mxu0 0
    %748 = vmatmul.mubr.bf16.gmra.mxu0 %v682
    %v749 = vpop.f32.mrf.mxu0
    %v750 = vpop.f32.mrf.mxu0
    %v751 = vpop.f32.mrf.mxu0
    %v752 = vpop.f32.mrf.mxu0
    %753 = vdwg.mxu0
    %v762 = vunpack.c.l.b16 %v582
    %v763 = vunpack.c.l.b16 %v583
    %v764 = vunpack.c.l.b16 %v584
    %v765 = vunpack.c.l.b16 %v585
    %v766 = vunpack.c.l.b16 %v586
    %v767 = vunpack.c.l.b16 %v587
    %v768 = vunpack.c.l.b16 %v588
    %v769 = vunpack.c.l.b16 %v589
    %v770 = vpack.c.b16 %v763, %v762
    %v771 = vpack.c.b16 %v765, %v764
    %v772 = vpack.c.b16 %v767, %v766
    %v773 = vpack.c.b16 %v769, %v768
    %v778 = vsel %vm341, %v590, 0
    %v780 = vsel %vm341, %v591, 0
    %v782 = vsel %vm341, %v592, 0
    %v784 = vsel %vm341, %v593, 0
    %v787 = vsel %vm341, %v594, 0
    %789 = vmatprep.subr.bf16.mxu0 0
    %790 = vmatpush1.bf16.msra.mxu0 0
    %791 = vmatprep.subr.bf16.mxu0 0
    %792 = vmatpush1.bf16.msra.mxu0 0
    %793 = vmatprep.subr.bf16.mxu0 0
    %794 = vmatpush1.bf16.msra.mxu0 0
    %795 = vmatprep.subr.bf16.mxu0 0
    %796 = vmatpush1.bf16.msra.mxu0 0
    %797 = vmatprep.subr.bf16.mxu0 0
    %798 = vmatpush1.bf16.msra.mxu0 %v773
    %799 = vmatprep.subr.bf16.mxu0 0
    %800 = vmatpush1.bf16.msra.mxu0 %v772
    %801 = vmatprep.subr.bf16.mxu0 0
    %802 = vmatpush1.bf16.msra.mxu0 %v771
    %803 = vmatprep.subr.bf16.mxu0 0
    %804 = vmatpush1.bf16.msra.mxu0 %v770
    %805 = vmatprep.subr.bf16.mxu0 0
    %806 = vmatpush2.bf16.msra.mxu0 0
    %807 = vmatprep.subr.bf16.mxu0 0
    %808 = vmatpush2.bf16.msra.mxu0 0
    %809 = vmatprep.subr.bf16.mxu0 0
    %810 = vmatpush2.bf16.msra.mxu0 0
    %811 = vmatprep.subr.bf16.mxu0 0
    %812 = vmatpush2.bf16.msra.mxu0 0
    %813 = vmatprep.subr.bf16.mxu0 0
    %814 = vmatpush2.bf16.msra.mxu0 0
    %815 = vmatprep.subr.bf16.mxu0 0
    %816 = vmatpush2.bf16.msra.mxu0 0
    %817 = vmatprep.subr.bf16.mxu0 0
    %818 = vmatpush2.bf16.msra.mxu0 0
    %819 = vmatprep.subr.bf16.mxu0 0
    %820 = vmatpush2.bf16.msra.mxu0 0
    %821 = vmatprep.mubr.bf16.mxu0 0
    %822 = vmatmul.mubr.bf16.gmra.mxu0 %v778
    %v823 = vpop.f32.mrf.mxu0
    %v824 = vadd.f32 %v719, %v823
    %v825 = vpop.f32.mrf.mxu0
    %v826 = vpop.f32.mrf.mxu0
    %v827 = vadd.f32 %v722, %v826
    %v828 = vpop.f32.mrf.mxu0
    %829 = vmatprep.mubr.bf16.mxu0 0
    %830 = vmatmul.mubr.bf16.gmra.mxu0 %v780
    %v831 = vpop.f32.mrf.mxu0
    %v832 = vadd.f32 %v727, %v831
    %v833 = vpop.f32.mrf.mxu0
    %v834 = vpop.f32.mrf.mxu0
    %v835 = vpop.f32.mrf.mxu0
    %836 = vmatprep.mubr.bf16.mxu0 0
    %837 = vmatmul.mubr.bf16.gmra.mxu0 %v782
    %v838 = vpop.f32.mrf.mxu0
    %v839 = vadd.f32 %v734, %v838
    %v840 = vpop.f32.mrf.mxu0
    %v841 = vpop.f32.mrf.mxu0
    %v842 = vadd.f32 %v737, %v841
    %v843 = vpop.f32.mrf.mxu0
    %844 = vmatprep.mubr.bf16.mxu0 0
    %845 = vmatmul.mubr.bf16.gmra.mxu0 %v784
    %v846 = vpop.f32.mrf.mxu0
    %v847 = vadd.f32 %v742, %v846
    %v848 = vpop.f32.mrf.mxu0
    %v849 = vpop.f32.mrf.mxu0
    %v850 = vadd.f32 %v745, %v849
    %v851 = vpop.f32.mrf.mxu0
    %852 = vmatprep.mubr.bf16.mxu0 0
    %853 = vmatmul.mubr.bf16.gmra.mxu0 %v787
    %v854 = vpop.f32.mrf.mxu0
    %v855 = vpop.f32.mrf.mxu0
    %v856 = vpop.f32.mrf.mxu0
    %v857 = vpop.f32.mrf.mxu0
    %858 = vdwg.mxu0
    %s859 = scalar_lea.vmem %s7, 64
    %v860 = vld [vmem:[%s859] sm:$0xf]
    %v861 = vld [vmem:[%s859 + $0x4] sm:$0xf]
    %v862 = vld [vmem:[%s859 + $0x8] sm:$0xf]
    %v863 = vld [vmem:[%s859 + $0xc] sm:$0xf]
    %v864 = vld [vmem:[%s859 + $0x10] sm:$0xf]
    %v865 = vld [vmem:[%s859 + $0x14] sm:$0xf]
    %v866 = vld [vmem:[%s859 + $0x18] sm:$0xf]
    %v867 = vld [vmem:[%s859 + $0x1c] sm:$0xf]
    %vm873 = vcmask 1044480
    %v874 = vrot.slane %v590, 3
    %v875 = vrot.slane %v591, 3
    %v876 = vsel %vm873, %v874, %v875
    %v877 = vrot.slane %v592, 3
    %v878 = vsel %vm873, %v875, %v877
    %v879 = vrot.slane %v593, 3
    %v880 = vsel %vm873, %v877, %v879
    %v881 = vrot.slane %v604, 3
    %v882 = vsel %vm873, %v879, %v881
    %v891 = vunpack.c.l.b16 %v860
    %v892 = vunpack.c.l.b16 %v861
    %v893 = vunpack.c.l.b16 %v862
    %v894 = vunpack.c.l.b16 %v863
    %v895 = vunpack.c.l.b16 %v864
    %v896 = vunpack.c.l.b16 %v865
    %v897 = vunpack.c.l.b16 %v866
    %v898 = vunpack.c.l.b16 %v867
    %v899 = vpack.c.b16 %v892, %v891
    %v900 = vpack.c.b16 %v894, %v893
    %v901 = vpack.c.b16 %v896, %v895
    %v902 = vpack.c.b16 %v898, %v897
    %v908 = vsel %vm341, %v876, 0
    %v911 = vsel %vm341, %v878, 0
    %v914 = vsel %vm341, %v880, 0
    %v917 = vsel %vm341, %v882, 0
    %v920 = vsel %vm341, %v881, 0
    %922 = vmatprep.subr.bf16.mxu0 0
    %923 = vmatpush1.bf16.msra.mxu0 0
    %924 = vmatprep.subr.bf16.mxu0 0
    %925 = vmatpush1.bf16.msra.mxu0 0
    %926 = vmatprep.subr.bf16.mxu0 0
    %927 = vmatpush1.bf16.msra.mxu0 0
    %928 = vmatprep.subr.bf16.mxu0 0
    %929 = vmatpush1.bf16.msra.mxu0 0
    %930 = vmatprep.subr.bf16.mxu0 0
    %931 = vmatpush1.bf16.msra.mxu0 %v902
    %932 = vmatprep.subr.bf16.mxu0 0
    %933 = vmatpush1.bf16.msra.mxu0 %v901
    %934 = vmatprep.subr.bf16.mxu0 0
    %935 = vmatpush1.bf16.msra.mxu0 %v900
    %936 = vmatprep.subr.bf16.mxu0 0
    %937 = vmatpush1.bf16.msra.mxu0 %v899
    %938 = vmatprep.subr.bf16.mxu0 0
    %939 = vmatpush2.bf16.msra.mxu0 0
    %940 = vmatprep.subr.bf16.mxu0 0
    %941 = vmatpush2.bf16.msra.mxu0 0
    %942 = vmatprep.subr.bf16.mxu0 0
    %943 = vmatpush2.bf16.msra.mxu0 0
    %944 = vmatprep.subr.bf16.mxu0 0
    %945 = vmatpush2.bf16.msra.mxu0 0
    %946 = vmatprep.subr.bf16.mxu0 0
    %947 = vmatpush2.bf16.msra.mxu0 0
    %948 = vmatprep.subr.bf16.mxu0 0
    %949 = vmatpush2.bf16.msra.mxu0 0
    %950 = vmatprep.subr.bf16.mxu0 0
    %951 = vmatpush2.bf16.msra.mxu0 0
    %952 = vmatprep.subr.bf16.mxu0 0
    %953 = vmatpush2.bf16.msra.mxu0 0
    %954 = vmatprep.mubr.bf16.mxu0 0
    %955 = vmatmul.mubr.bf16.gmra.mxu0 %v908
    %v956 = vpop.f32.mrf.mxu0
    %v957 = vadd.f32 0.0, %v956
    %v958 = vpop.f32.mrf.mxu0
    %v959 = vpop.f32.mrf.mxu0
    %v960 = vadd.f32 0.0, %v959
    %v961 = vpop.f32.mrf.mxu0
    %962 = vmatprep.mubr.bf16.mxu0 0
    %963 = vmatmul.mubr.bf16.gmra.mxu0 %v911
    %v964 = vpop.f32.mrf.mxu0
    %v965 = vadd.f32 0.0, %v964
    %v966 = vpop.f32.mrf.mxu0
    %v967 = vpop.f32.mrf.mxu0
    %v968 = vpop.f32.mrf.mxu0
    %969 = vmatprep.mubr.bf16.mxu0 0
    %970 = vmatmul.mubr.bf16.gmra.mxu0 %v914
    %v971 = vpop.f32.mrf.mxu0
    %v972 = vadd.f32 0.0, %v971
    %v973 = vpop.f32.mrf.mxu0
    %v974 = vpop.f32.mrf.mxu0
    %v975 = vadd.f32 0.0, %v974
    %v976 = vpop.f32.mrf.mxu0
    %977 = vmatprep.mubr.bf16.mxu0 0
    %978 = vmatmul.mubr.bf16.gmra.mxu0 %v917
    %v979 = vpop.f32.mrf.mxu0
    %v980 = vadd.f32 0.0, %v979
    %v981 = vpop.f32.mrf.mxu0
    %v982 = vpop.f32.mrf.mxu0
    %v983 = vadd.f32 0.0, %v982
    %v984 = vpop.f32.mrf.mxu0
    %985 = vmatprep.mubr.bf16.mxu0 0
    %986 = vmatmul.mubr.bf16.gmra.mxu0 %v920
    %v987 = vpop.f32.mrf.mxu0
    %v988 = vpop.f32.mrf.mxu0
    %v989 = vpop.f32.mrf.mxu0
    %v990 = vpop.f32.mrf.mxu0
    %991 = vdwg.mxu0
    %v992 = vadd.f32 %v824, %v957
    %v993 = vadd.f32 %v827, %v960
    %v994 = vadd.f32 %v832, %v965
    %v995 = vadd.f32 %v839, %v972
    %v996 = vadd.f32 %v842, %v975
    %v997 = vadd.f32 %v847, %v980
    %v998 = vadd.f32 %v850, %v983
    %s999 = scalar_lea.vmem %s7, 96
    %v1000 = vld [vmem:[%s999] sm:$0xf]
    %v1001 = vld [vmem:[%s999 + $0x4] sm:$0xf]
    %v1002 = vld [vmem:[%s999 + $0x8] sm:$0xf]
    %v1003 = vld [vmem:[%s999 + $0xc] sm:$0xf]
    %v1004 = vld [vmem:[%s999 + $0x10] sm:$0xf]
    %v1005 = vld [vmem:[%s999 + $0x14] sm:$0xf]
    %v1006 = vld [vmem:[%s999 + $0x18] sm:$0xf]
    %v1007 = vld [vmem:[%s999 + $0x1c] sm:$0xf]
    %vm1008 = vsmask.f32 4352
    %v1009 = vrot.slane %v607, 3
    %v1010 = vrot.slane %v609, 4
    %v1011 = vor.u32 %v1009, %v1010
    %v1012 = vrot.slane %v618, 3
    %v1013 = vrot.slane %v614, 4
    %v1014 = vor.u32 %v1012, %v1013
    %v1015 = vsel %vm1008, %v1011, %v1014
    %v1016 = vrot.slane %v626, 3
    %v1017 = vrot.slane %v622, 4
    %v1018 = vor.u32 %v1016, %v1017
    %v1019 = vsel %vm1008, %v1014, %v1018
    %v1020 = vrot.slane %v634, 3
    %v1021 = vrot.slane %v630, 4
    %v1022 = vor.u32 %v1020, %v1021
    %v1023 = vsel %vm1008, %v1018, %v1022
    %v1024 = vrot.slane %v642, 3
    %v1025 = vrot.slane %v638, 4
    %v1026 = vor.u32 %v1024, %v1025
    %v1027 = vsel %vm1008, %v1022, %v1026
    %v1036 = vunpack.c.l.b16 %v1000
    %v1037 = vunpack.c.l.b16 %v1001
    %v1038 = vunpack.c.l.b16 %v1002
    %v1039 = vunpack.c.l.b16 %v1003
    %v1040 = vunpack.c.l.b16 %v1004
    %v1041 = vunpack.c.l.b16 %v1005
    %v1042 = vunpack.c.l.b16 %v1006
    %v1043 = vunpack.c.l.b16 %v1007
    %v1044 = vpack.c.b16 %v1037, %v1036
    %v1045 = vpack.c.b16 %v1039, %v1038
    %v1046 = vpack.c.b16 %v1041, %v1040
    %v1047 = vpack.c.b16 %v1043, %v1042
    %v1053 = vsel %vm341, %v1015, 0
    %v1056 = vsel %vm341, %v1019, 0
    %v1059 = vsel %vm341, %v1023, 0
    %v1062 = vsel %vm341, %v1027, 0
    %v1065 = vsel %vm341, %v1026, 0
    %1067 = vmatprep.subr.bf16.mxu0 0
    %1068 = vmatpush1.bf16.msra.mxu0 0
    %1069 = vmatprep.subr.bf16.mxu0 0
    %1070 = vmatpush1.bf16.msra.mxu0 0
    %1071 = vmatprep.subr.bf16.mxu0 0
    %1072 = vmatpush1.bf16.msra.mxu0 0
    %1073 = vmatprep.subr.bf16.mxu0 0
    %1074 = vmatpush1.bf16.msra.mxu0 0
    %1075 = vmatprep.subr.bf16.mxu0 0
    %1076 = vmatpush1.bf16.msra.mxu0 %v1047
    %1077 = vmatprep.subr.bf16.mxu0 0
    %1078 = vmatpush1.bf16.msra.mxu0 %v1046
    %1079 = vmatprep.subr.bf16.mxu0 0
    %1080 = vmatpush1.bf16.msra.mxu0 %v1045
    %1081 = vmatprep.subr.bf16.mxu0 0
    %1082 = vmatpush1.bf16.msra.mxu0 %v1044
    %1083 = vmatprep.subr.bf16.mxu0 0
    %1084 = vmatpush2.bf16.msra.mxu0 0
    %1085 = vmatprep.subr.bf16.mxu0 0
    %1086 = vmatpush2.bf16.msra.mxu0 0
    %1087 = vmatprep.subr.bf16.mxu0 0
    %1088 = vmatpush2.bf16.msra.mxu0 0
    %1089 = vmatprep.subr.bf16.mxu0 0
    %1090 = vmatpush2.bf16.msra.mxu0 0
    %1091 = vmatprep.subr.bf16.mxu0 0
    %1092 = vmatpush2.bf16.msra.mxu0 0
    %1093 = vmatprep.subr.bf16.mxu0 0
    %1094 = vmatpush2.bf16.msra.mxu0 0
    %1095 = vmatprep.subr.bf16.mxu0 0
    %1096 = vmatpush2.bf16.msra.mxu0 0
    %1097 = vmatprep.subr.bf16.mxu0 0
    %1098 = vmatpush2.bf16.msra.mxu0 0
    %1099 = vmatprep.mubr.bf16.mxu0 0
    %1100 = vmatmul.mubr.bf16.gmra.mxu0 %v1053
    %v1101 = vpop.f32.mrf.mxu0
    %v1102 = vadd.f32 0.0, %v1101
    %v1103 = vpop.f32.mrf.mxu0
    %v1104 = vpop.f32.mrf.mxu0
    %v1105 = vadd.f32 0.0, %v1104
    %v1106 = vpop.f32.mrf.mxu0
    %1107 = vmatprep.mubr.bf16.mxu0 0
    %1108 = vmatmul.mubr.bf16.gmra.mxu0 %v1056
    %v1109 = vpop.f32.mrf.mxu0
    %v1110 = vadd.f32 0.0, %v1109
    %v1111 = vpop.f32.mrf.mxu0
    %v1112 = vpop.f32.mrf.mxu0
    %v1113 = vpop.f32.mrf.mxu0
    %1114 = vmatprep.mubr.bf16.mxu0 0
    %1115 = vmatmul.mubr.bf16.gmra.mxu0 %v1059
    %v1116 = vpop.f32.mrf.mxu0
    %v1117 = vadd.f32 0.0, %v1116
    %v1118 = vpop.f32.mrf.mxu0
    %v1119 = vpop.f32.mrf.mxu0
    %v1120 = vadd.f32 0.0, %v1119
    %v1121 = vpop.f32.mrf.mxu0
    %1122 = vmatprep.mubr.bf16.mxu0 0
    %1123 = vmatmul.mubr.bf16.gmra.mxu0 %v1062
    %v1124 = vpop.f32.mrf.mxu0
    %v1125 = vadd.f32 0.0, %v1124
    %v1126 = vpop.f32.mrf.mxu0
    %v1127 = vpop.f32.mrf.mxu0
    %v1128 = vadd.f32 0.0, %v1127
    %v1129 = vpop.f32.mrf.mxu0
    %1130 = vmatprep.mubr.bf16.mxu0 0
    %1131 = vmatmul.mubr.bf16.gmra.mxu0 %v1065
    %v1132 = vpop.f32.mrf.mxu0
    %v1133 = vpop.f32.mrf.mxu0
    %v1134 = vpop.f32.mrf.mxu0
    %v1135 = vpop.f32.mrf.mxu0
    %1136 = vdwg.mxu0
    %v1137 = vadd.f32 %v992, %v1102
    %v1138 = vadd.f32 %v993, %v1105
    %v1139 = vadd.f32 %v994, %v1110
    %v1140 = vadd.f32 %v995, %v1117
    %v1141 = vadd.f32 %v996, %v1120
    %v1142 = vadd.f32 %v997, %v1125
    %v1143 = vadd.f32 %v998, %v1128
    %v1144 = vld [vmem:[%s8] sm:$0x1]
    %v1146 = vlaneseq
    %v1147 = vshrl.u32 %v1146, 7
    %v1148 = vsub.s32 0, %v1147
    %v1149 = vrot.slane %v1144, %v1148
    %v1151 = vadd.f32 %v1137, %v1149
    %v1152 = vadd.f32 %v1138, %v1149
    %v1153 = vadd.f32 %v1139, %v1149
    %v1154 = vadd.f32 %v1140, %v1149
    %v1155 = vadd.f32 %v1141, %v1149
    %v1156 = vadd.f32 %v1142, %v1149
    %v1157 = vadd.f32 %v1143, %v1149
    %v1158 = vmax.f32 %v1151, 0.0
    %v1159 = vmax.f32 %v1152, 0.0
    %v1160 = vmax.f32 %v1153, 0.0
    %v1161 = vmax.f32 %v1154, 0.0
    %v1162 = vmax.f32 %v1155, 0.0
    %v1163 = vmax.f32 %v1156, 0.0
    %v1164 = vmax.f32 %v1157, 0.0
    %v1165 = vld [vmem:[%s10] sm:$0x1]
    %v1166 = vld [vmem:[%s9] sm:$0xf]
    %v1167 = vld [vmem:[%s9 + $0x4] sm:$0xf]
    %v1168 = vld [vmem:[%s9 + $0x8] sm:$0xf]
    %v1169 = vld [vmem:[%s9 + $0xc] sm:$0xf]
    %v1170 = vpack.c.bf16 %v1158, %v1158
    %v1175 = vunpack.c.l.b16 %v1166
    %v1176 = vunpack.c.l.b16 %v1167
    %v1177 = vunpack.c.l.b16 %v1168
    %v1178 = vunpack.c.l.b16 %v1169
    %v1179 = vpack.c.b16 %v1176, %v1175
    %v1180 = vpack.c.b16 %v1178, %v1177
    %vm1183 = vcmask 261120
    %v1185 = vsel %vm1183, %v1170, 0
    %1187 = vmatprep.subr.bf16.mxu0 0
    %1188 = vmatpush1.bf16.msra.mxu0 0
    %1189 = vmatprep.subr.bf16.mxu0 0
    %1190 = vmatpush1.bf16.msra.mxu0 0
    %1191 = vmatprep.subr.bf16.mxu0 0
    %1192 = vmatpush1.bf16.msra.mxu0 0
    %1193 = vmatprep.subr.bf16.mxu0 0
    %1194 = vmatpush1.bf16.msra.mxu0 0
    %1195 = vmatprep.subr.bf16.mxu0 0
    %1196 = vmatpush1.bf16.msra.mxu0 0
    %1197 = vmatprep.subr.bf16.mxu0 0
    %1198 = vmatpush1.bf16.msra.mxu0 0
    %1199 = vmatprep.subr.bf16.mxu0 0
    %1200 = vmatpush1.bf16.msra.mxu0 %v1180
    %1201 = vmatprep.subr.bf16.mxu0 0
    %1202 = vmatpush1.bf16.msra.mxu0 %v1179
    %1203 = vmatprep.subr.bf16.mxu0 0
    %1204 = vmatpush2.bf16.msra.mxu0 0
    %1205 = vmatprep.subr.bf16.mxu0 0
    %1206 = vmatpush2.bf16.msra.mxu0 0
    %1207 = vmatprep.subr.bf16.mxu0 0
    %1208 = vmatpush2.bf16.msra.mxu0 0
    %1209 = vmatprep.subr.bf16.mxu0 0
    %1210 = vmatpush2.bf16.msra.mxu0 0
    %1211 = vmatprep.subr.bf16.mxu0 0
    %1212 = vmatpush2.bf16.msra.mxu0 0
    %1213 = vmatprep.subr.bf16.mxu0 0
    %1214 = vmatpush2.bf16.msra.mxu0 0
    %1215 = vmatprep.subr.bf16.mxu0 0
    %1216 = vmatpush2.bf16.msra.mxu0 0
    %1217 = vmatprep.subr.bf16.mxu0 0
    %1218 = vmatpush2.bf16.msra.mxu0 0
    %1219 = vmatprep.mubr.bf16.mxu0 0
    %1220 = vmatmul.mubr.bf16.gmra.mxu0 %v1185
    %v1221 = vpop.f32.mrf.mxu0
    %v1222 = vadd.f32 0.0, %v1221
    %v1223 = vpop.f32.mrf.mxu0
    %v1224 = vpop.f32.mrf.mxu0
    %v1225 = vpop.f32.mrf.mxu0
    %1226 = vdwg.mxu0
    %v1227 = vadd.f32 %v1165, %v1222
    %s1228 = scalar_lea.vmem %s9, 16
    %v1229 = vld [vmem:[%s1228] sm:$0xf]
    %v1230 = vld [vmem:[%s1228 + $0x4] sm:$0xf]
    %v1231 = vld [vmem:[%s1228 + $0x8] sm:$0xf]
    %v1232 = vld [vmem:[%s1228 + $0xc] sm:$0xf]
    %v1233 = vshrl.u32 %v1170, 16
    %v1239 = vunpack.c.l.b16 %v1229
    %v1240 = vunpack.c.l.b16 %v1230
    %v1241 = vunpack.c.l.b16 %v1231
    %v1242 = vunpack.c.l.b16 %v1232
    %v1243 = vpack.c.b16 %v1240, %v1239
    %v1244 = vpack.c.b16 %v1242, %v1241
    %v1248 = vsel %vm1183, %v1233, 0
    %1250 = vmatprep.subr.bf16.mxu0 0
    %1251 = vmatpush1.bf16.msra.mxu0 0
    %1252 = vmatprep.subr.bf16.mxu0 0
    %1253 = vmatpush1.bf16.msra.mxu0 0
    %1254 = vmatprep.subr.bf16.mxu0 0
    %1255 = vmatpush1.bf16.msra.mxu0 0
    %1256 = vmatprep.subr.bf16.mxu0 0
    %1257 = vmatpush1.bf16.msra.mxu0 0
    %1258 = vmatprep.subr.bf16.mxu0 0
    %1259 = vmatpush1.bf16.msra.mxu0 0
    %1260 = vmatprep.subr.bf16.mxu0 0
    %1261 = vmatpush1.bf16.msra.mxu0 0
    %1262 = vmatprep.subr.bf16.mxu0 0
    %1263 = vmatpush1.bf16.msra.mxu0 %v1244
    %1264 = vmatprep.subr.bf16.mxu0 0
    %1265 = vmatpush1.bf16.msra.mxu0 %v1243
    %1266 = vmatprep.subr.bf16.mxu0 0
    %1267 = vmatpush2.bf16.msra.mxu0 0
    %1268 = vmatprep.subr.bf16.mxu0 0
    %1269 = vmatpush2.bf16.msra.mxu0 0
    %1270 = vmatprep.subr.bf16.mxu0 0
    %1271 = vmatpush2.bf16.msra.mxu0 0
    %1272 = vmatprep.subr.bf16.mxu0 0
    %1273 = vmatpush2.bf16.msra.mxu0 0
    %1274 = vmatprep.subr.bf16.mxu0 0
    %1275 = vmatpush2.bf16.msra.mxu0 0
    %1276 = vmatprep.subr.bf16.mxu0 0
    %1277 = vmatpush2.bf16.msra.mxu0 0
    %1278 = vmatprep.subr.bf16.mxu0 0
    %1279 = vmatpush2.bf16.msra.mxu0 0
    %1280 = vmatprep.subr.bf16.mxu0 0
    %1281 = vmatpush2.bf16.msra.mxu0 0
    %1282 = vmatprep.mubr.bf16.mxu0 0
    %1283 = vmatmul.mubr.bf16.gmra.mxu0 %v1248
    %v1284 = vpop.f32.mrf.mxu0
    %v1285 = vadd.f32 0.0, %v1284
    %v1286 = vpop.f32.mrf.mxu0
    %v1287 = vpop.f32.mrf.mxu0
    %v1288 = vpop.f32.mrf.mxu0
    %1289 = vdwg.mxu0
    %v1290 = vadd.f32 %v1227, %v1285
    %s1291 = scalar_lea.vmem %s9, 32
    %v1292 = vld [vmem:[%s1291] sm:$0xf]
    %v1293 = vld [vmem:[%s1291 + $0x4] sm:$0xf]
    %v1294 = vld [vmem:[%s1291 + $0x8] sm:$0xf]
    %v1295 = vld [vmem:[%s1291 + $0xc] sm:$0xf]
    %v1297 = vrot.slane %v1170, 1
    %v1302 = vunpack.c.l.b16 %v1292
    %v1303 = vunpack.c.l.b16 %v1293
    %v1304 = vunpack.c.l.b16 %v1294
    %v1305 = vunpack.c.l.b16 %v1295
    %v1306 = vpack.c.b16 %v1303, %v1302
    %v1307 = vpack.c.b16 %v1305, %v1304
    %v1311 = vsel %vm1183, %v1297, 0
    %1313 = vmatprep.subr.bf16.mxu0 0
    %1314 = vmatpush1.bf16.msra.mxu0 0
    %1315 = vmatprep.subr.bf16.mxu0 0
    %1316 = vmatpush1.bf16.msra.mxu0 0
    %1317 = vmatprep.subr.bf16.mxu0 0
    %1318 = vmatpush1.bf16.msra.mxu0 0
    %1319 = vmatprep.subr.bf16.mxu0 0
    %1320 = vmatpush1.bf16.msra.mxu0 0
    %1321 = vmatprep.subr.bf16.mxu0 0
    %1322 = vmatpush1.bf16.msra.mxu0 0
    %1323 = vmatprep.subr.bf16.mxu0 0
    %1324 = vmatpush1.bf16.msra.mxu0 0
    %1325 = vmatprep.subr.bf16.mxu0 0
    %1326 = vmatpush1.bf16.msra.mxu0 %v1307
    %1327 = vmatprep.subr.bf16.mxu0 0
    %1328 = vmatpush1.bf16.msra.mxu0 %v1306
    %1329 = vmatprep.subr.bf16.mxu0 0
    %1330 = vmatpush2.bf16.msra.mxu0 0
    %1331 = vmatprep.subr.bf16.mxu0 0
    %1332 = vmatpush2.bf16.msra.mxu0 0
    %1333 = vmatprep.subr.bf16.mxu0 0
    %1334 = vmatpush2.bf16.msra.mxu0 0
    %1335 = vmatprep.subr.bf16.mxu0 0
    %1336 = vmatpush2.bf16.msra.mxu0 0
    %1337 = vmatprep.subr.bf16.mxu0 0
    %1338 = vmatpush2.bf16.msra.mxu0 0
    %1339 = vmatprep.subr.bf16.mxu0 0
    %1340 = vmatpush2.bf16.msra.mxu0 0
    %1341 = vmatprep.subr.bf16.mxu0 0
    %1342 = vmatpush2.bf16.msra.mxu0 0
    %1343 = vmatprep.subr.bf16.mxu0 0
    %1344 = vmatpush2.bf16.msra.mxu0 0
    %1345 = vmatprep.mubr.bf16.mxu0 0
    %1346 = vmatmul.mubr.bf16.gmra.mxu0 %v1311
    %v1347 = vpop.f32.mrf.mxu0
    %v1348 = vadd.f32 0.0, %v1347
    %v1349 = vpop.f32.mrf.mxu0
    %v1350 = vpop.f32.mrf.mxu0
    %v1351 = vpop.f32.mrf.mxu0
    %1352 = vdwg.mxu0
    %v1353 = vadd.f32 %v1290, %v1348
    %s1354 = scalar_lea.vmem %s9, 48
    %v1355 = vld [vmem:[%s1354] sm:$0xf]
    %v1356 = vld [vmem:[%s1354 + $0x4] sm:$0xf]
    %v1357 = vld [vmem:[%s1354 + $0x8] sm:$0xf]
    %v1358 = vld [vmem:[%s1354 + $0xc] sm:$0xf]
    %v1359 = vrot.slane %v1233, 1
    %v1364 = vunpack.c.l.b16 %v1355
    %v1365 = vunpack.c.l.b16 %v1356
    %v1366 = vunpack.c.l.b16 %v1357
    %v1367 = vunpack.c.l.b16 %v1358
    %v1368 = vpack.c.b16 %v1365, %v1364
    %v1369 = vpack.c.b16 %v1367, %v1366
    %v1373 = vsel %vm1183, %v1359, 0
    %1375 = vmatprep.subr.bf16.mxu0 0
    %1376 = vmatpush1.bf16.msra.mxu0 0
    %1377 = vmatprep.subr.bf16.mxu0 0
    %1378 = vmatpush1.bf16.msra.mxu0 0
    %1379 = vmatprep.subr.bf16.mxu0 0
    %1380 = vmatpush1.bf16.msra.mxu0 0
    %1381 = vmatprep.subr.bf16.mxu0 0
    %1382 = vmatpush1.bf16.msra.mxu0 0
    %1383 = vmatprep.subr.bf16.mxu0 0
    %1384 = vmatpush1.bf16.msra.mxu0 0
    %1385 = vmatprep.subr.bf16.mxu0 0
    %1386 = vmatpush1.bf16.msra.mxu0 0
    %1387 = vmatprep.subr.bf16.mxu0 0
    %1388 = vmatpush1.bf16.msra.mxu0 %v1369
    %1389 = vmatprep.subr.bf16.mxu0 0
    %1390 = vmatpush1.bf16.msra.mxu0 %v1368
    %1391 = vmatprep.subr.bf16.mxu0 0
    %1392 = vmatpush2.bf16.msra.mxu0 0
    %1393 = vmatprep.subr.bf16.mxu0 0
    %1394 = vmatpush2.bf16.msra.mxu0 0
    %1395 = vmatprep.subr.bf16.mxu0 0
    %1396 = vmatpush2.bf16.msra.mxu0 0
    %1397 = vmatprep.subr.bf16.mxu0 0
    %1398 = vmatpush2.bf16.msra.mxu0 0
    %1399 = vmatprep.subr.bf16.mxu0 0
    %1400 = vmatpush2.bf16.msra.mxu0 0
    %1401 = vmatprep.subr.bf16.mxu0 0
    %1402 = vmatpush2.bf16.msra.mxu0 0
    %1403 = vmatprep.subr.bf16.mxu0 0
    %1404 = vmatpush2.bf16.msra.mxu0 0
    %1405 = vmatprep.subr.bf16.mxu0 0
    %1406 = vmatpush2.bf16.msra.mxu0 0
    %1407 = vmatprep.mubr.bf16.mxu0 0
    %1408 = vmatmul.mubr.bf16.gmra.mxu0 %v1373
    %v1409 = vpop.f32.mrf.mxu0
    %v1410 = vadd.f32 0.0, %v1409
    %v1411 = vpop.f32.mrf.mxu0
    %v1412 = vpop.f32.mrf.mxu0
    %v1413 = vpop.f32.mrf.mxu0
    %1414 = vdwg.mxu0
    %v1415 = vadd.f32 %v1353, %v1410
    %s1416 = scalar_lea.vmem %s9, 64
    %v1417 = vld [vmem:[%s1416] sm:$0xf]
    %v1418 = vld [vmem:[%s1416 + $0x4] sm:$0xf]
    %v1419 = vld [vmem:[%s1416 + $0x8] sm:$0xf]
    %v1420 = vld [vmem:[%s1416 + $0xc] sm:$0xf]
    %v1421 = vrot.slane %v1170, 3
    %v1426 = vunpack.c.l.b16 %v1417
    %v1427 = vunpack.c.l.b16 %v1418
    %v1428 = vunpack.c.l.b16 %v1419
    %v1429 = vunpack.c.l.b16 %v1420
    %v1430 = vpack.c.b16 %v1427, %v1426
    %v1431 = vpack.c.b16 %v1429, %v1428
    %v1435 = vsel %vm1183, %v1421, 0
    %1437 = vmatprep.subr.bf16.mxu0 0
    %1438 = vmatpush1.bf16.msra.mxu0 0
    %1439 = vmatprep.subr.bf16.mxu0 0
    %1440 = vmatpush1.bf16.msra.mxu0 0
    %1441 = vmatprep.subr.bf16.mxu0 0
    %1442 = vmatpush1.bf16.msra.mxu0 0
    %1443 = vmatprep.subr.bf16.mxu0 0
    %1444 = vmatpush1.bf16.msra.mxu0 0
    %1445 = vmatprep.subr.bf16.mxu0 0
    %1446 = vmatpush1.bf16.msra.mxu0 0
    %1447 = vmatprep.subr.bf16.mxu0 0
    %1448 = vmatpush1.bf16.msra.mxu0 0
    %1449 = vmatprep.subr.bf16.mxu0 0
    %1450 = vmatpush1.bf16.msra.mxu0 %v1431
    %1451 = vmatprep.subr.bf16.mxu0 0
    %1452 = vmatpush1.bf16.msra.mxu0 %v1430
    %1453 = vmatprep.subr.bf16.mxu0 0
    %1454 = vmatpush2.bf16.msra.mxu0 0
    %1455 = vmatprep.subr.bf16.mxu0 0
    %1456 = vmatpush2.bf16.msra.mxu0 0
    %1457 = vmatprep.subr.bf16.mxu0 0
    %1458 = vmatpush2.bf16.msra.mxu0 0
    %1459 = vmatprep.subr.bf16.mxu0 0
    %1460 = vmatpush2.bf16.msra.mxu0 0
    %1461 = vmatprep.subr.bf16.mxu0 0
    %1462 = vmatpush2.bf16.msra.mxu0 0
    %1463 = vmatprep.subr.bf16.mxu0 0
    %1464 = vmatpush2.bf16.msra.mxu0 0
    %1465 = vmatprep.subr.bf16.mxu0 0
    %1466 = vmatpush2.bf16.msra.mxu0 0
    %1467 = vmatprep.subr.bf16.mxu0 0
    %1468 = vmatpush2.bf16.msra.mxu0 0
    %1469 = vmatprep.mubr.bf16.mxu0 0
    %1470 = vmatmul.mubr.bf16.gmra.mxu0 %v1435
    %v1471 = vpop.f32.mrf.mxu0
    %v1472 = vadd.f32 0.0, %v1471
    %v1473 = vpop.f32.mrf.mxu0
    %v1474 = vpop.f32.mrf.mxu0
    %v1475 = vpop.f32.mrf.mxu0
    %1476 = vdwg.mxu0
    %v1477 = vadd.f32 %v1415, %v1472
    %s1478 = scalar_lea.vmem %s9, 80
    %v1479 = vld [vmem:[%s1478] sm:$0xf]
    %v1480 = vld [vmem:[%s1478 + $0x4] sm:$0xf]
    %v1481 = vld [vmem:[%s1478 + $0x8] sm:$0xf]
    %v1482 = vld [vmem:[%s1478 + $0xc] sm:$0xf]
    %v1483 = vrot.slane %v1233, 3
    %v1488 = vunpack.c.l.b16 %v1479
    %v1489 = vunpack.c.l.b16 %v1480
    %v1490 = vunpack.c.l.b16 %v1481
    %v1491 = vunpack.c.l.b16 %v1482
    %v1492 = vpack.c.b16 %v1489, %v1488
    %v1493 = vpack.c.b16 %v1491, %v1490
    %v1497 = vsel %vm1183, %v1483, 0
    %1499 = vmatprep.subr.bf16.mxu0 0
    %1500 = vmatpush1.bf16.msra.mxu0 0
    %1501 = vmatprep.subr.bf16.mxu0 0
    %1502 = vmatpush1.bf16.msra.mxu0 0
    %1503 = vmatprep.subr.bf16.mxu0 0
    %1504 = vmatpush1.bf16.msra.mxu0 0
    %1505 = vmatprep.subr.bf16.mxu0 0
    %1506 = vmatpush1.bf16.msra.mxu0 0
    %1507 = vmatprep.subr.bf16.mxu0 0
    %1508 = vmatpush1.bf16.msra.mxu0 0
    %1509 = vmatprep.subr.bf16.mxu0 0
    %1510 = vmatpush1.bf16.msra.mxu0 0
    %1511 = vmatprep.subr.bf16.mxu0 0
    %1512 = vmatpush1.bf16.msra.mxu0 %v1493
    %1513 = vmatprep.subr.bf16.mxu0 0
    %1514 = vmatpush1.bf16.msra.mxu0 %v1492
    %1515 = vmatprep.subr.bf16.mxu0 0
    %1516 = vmatpush2.bf16.msra.mxu0 0
    %1517 = vmatprep.subr.bf16.mxu0 0
    %1518 = vmatpush2.bf16.msra.mxu0 0
    %1519 = vmatprep.subr.bf16.mxu0 0
    %1520 = vmatpush2.bf16.msra.mxu0 0
    %1521 = vmatprep.subr.bf16.mxu0 0
    %1522 = vmatpush2.bf16.msra.mxu0 0
    %1523 = vmatprep.subr.bf16.mxu0 0
    %1524 = vmatpush2.bf16.msra.mxu0 0
    %1525 = vmatprep.subr.bf16.mxu0 0
    %1526 = vmatpush2.bf16.msra.mxu0 0
    %1527 = vmatprep.subr.bf16.mxu0 0
    %1528 = vmatpush2.bf16.msra.mxu0 0
    %1529 = vmatprep.subr.bf16.mxu0 0
    %1530 = vmatpush2.bf16.msra.mxu0 0
    %1531 = vmatprep.mubr.bf16.mxu0 0
    %1532 = vmatmul.mubr.bf16.gmra.mxu0 %v1497
    %v1533 = vpop.f32.mrf.mxu0
    %v1534 = vadd.f32 0.0, %v1533
    %v1535 = vpop.f32.mrf.mxu0
    %v1536 = vpop.f32.mrf.mxu0
    %v1537 = vpop.f32.mrf.mxu0
    %1538 = vdwg.mxu0
    %v1539 = vadd.f32 %v1477, %v1534
    %s1540 = scalar_lea.vmem %s9, 96
    %v1541 = vld [vmem:[%s1540] sm:$0xf]
    %v1542 = vld [vmem:[%s1540 + $0x4] sm:$0xf]
    %v1543 = vld [vmem:[%s1540 + $0x8] sm:$0xf]
    %v1544 = vld [vmem:[%s1540 + $0xc] sm:$0xf]
    %v1545 = vpack.c.bf16 %v1159, %v1159
    %v1550 = vunpack.c.l.b16 %v1541
    %v1551 = vunpack.c.l.b16 %v1542
    %v1552 = vunpack.c.l.b16 %v1543
    %v1553 = vunpack.c.l.b16 %v1544
    %v1554 = vpack.c.b16 %v1551, %v1550
    %v1555 = vpack.c.b16 %v1553, %v1552
    %v1559 = vsel %vm1183, %v1545, 0
    %1561 = vmatprep.subr.bf16.mxu0 0
    %1562 = vmatpush1.bf16.msra.mxu0 0
    %1563 = vmatprep.subr.bf16.mxu0 0
    %1564 = vmatpush1.bf16.msra.mxu0 0
    %1565 = vmatprep.subr.bf16.mxu0 0
    %1566 = vmatpush1.bf16.msra.mxu0 0
    %1567 = vmatprep.subr.bf16.mxu0 0
    %1568 = vmatpush1.bf16.msra.mxu0 0
    %1569 = vmatprep.subr.bf16.mxu0 0
    %1570 = vmatpush1.bf16.msra.mxu0 0
    %1571 = vmatprep.subr.bf16.mxu0 0
    %1572 = vmatpush1.bf16.msra.mxu0 0
    %1573 = vmatprep.subr.bf16.mxu0 0
    %1574 = vmatpush1.bf16.msra.mxu0 %v1555
    %1575 = vmatprep.subr.bf16.mxu0 0
    %1576 = vmatpush1.bf16.msra.mxu0 %v1554
    %1577 = vmatprep.subr.bf16.mxu0 0
    %1578 = vmatpush2.bf16.msra.mxu0 0
    %1579 = vmatprep.subr.bf16.mxu0 0
    %1580 = vmatpush2.bf16.msra.mxu0 0
    %1581 = vmatprep.subr.bf16.mxu0 0
    %1582 = vmatpush2.bf16.msra.mxu0 0
    %1583 = vmatprep.subr.bf16.mxu0 0
    %1584 = vmatpush2.bf16.msra.mxu0 0
    %1585 = vmatprep.subr.bf16.mxu0 0
    %1586 = vmatpush2.bf16.msra.mxu0 0
    %1587 = vmatprep.subr.bf16.mxu0 0
    %1588 = vmatpush2.bf16.msra.mxu0 0
    %1589 = vmatprep.subr.bf16.mxu0 0
    %1590 = vmatpush2.bf16.msra.mxu0 0
    %1591 = vmatprep.subr.bf16.mxu0 0
    %1592 = vmatpush2.bf16.msra.mxu0 0
    %1593 = vmatprep.mubr.bf16.mxu0 0
    %1594 = vmatmul.mubr.bf16.gmra.mxu0 %v1559
    %v1595 = vpop.f32.mrf.mxu0
    %v1596 = vadd.f32 0.0, %v1595
    %v1597 = vpop.f32.mrf.mxu0
    %v1598 = vpop.f32.mrf.mxu0
    %v1599 = vpop.f32.mrf.mxu0
    %1600 = vdwg.mxu0
    %v1601 = vadd.f32 %v1539, %v1596
    %s1602 = scalar_lea.vmem %s9, 112
    %v1603 = vld [vmem:[%s1602] sm:$0xf]
    %v1604 = vld [vmem:[%s1602 + $0x4] sm:$0xf]
    %v1605 = vld [vmem:[%s1602 + $0x8] sm:$0xf]
    %v1606 = vld [vmem:[%s1602 + $0xc] sm:$0xf]
    %v1607 = vshrl.u32 %v1545, 16
    %v1613 = vunpack.c.l.b16 %v1603
    %v1614 = vunpack.c.l.b16 %v1604
    %v1615 = vunpack.c.l.b16 %v1605
    %v1616 = vunpack.c.l.b16 %v1606
    %v1617 = vpack.c.b16 %v1614, %v1613
    %v1618 = vpack.c.b16 %v1616, %v1615
    %v1622 = vsel %vm1183, %v1607, 0
    %1624 = vmatprep.subr.bf16.mxu0 0
    %1625 = vmatpush1.bf16.msra.mxu0 0
    %1626 = vmatprep.subr.bf16.mxu0 0
    %1627 = vmatpush1.bf16.msra.mxu0 0
    %1628 = vmatprep.subr.bf16.mxu0 0
    %1629 = vmatpush1.bf16.msra.mxu0 0
    %1630 = vmatprep.subr.bf16.mxu0 0
    %1631 = vmatpush1.bf16.msra.mxu0 0
    %1632 = vmatprep.subr.bf16.mxu0 0
    %1633 = vmatpush1.bf16.msra.mxu0 0
    %1634 = vmatprep.subr.bf16.mxu0 0
    %1635 = vmatpush1.bf16.msra.mxu0 0
    %1636 = vmatprep.subr.bf16.mxu0 0
    %1637 = vmatpush1.bf16.msra.mxu0 %v1618
    %1638 = vmatprep.subr.bf16.mxu0 0
    %1639 = vmatpush1.bf16.msra.mxu0 %v1617
    %1640 = vmatprep.subr.bf16.mxu0 0
    %1641 = vmatpush2.bf16.msra.mxu0 0
    %1642 = vmatprep.subr.bf16.mxu0 0
    %1643 = vmatpush2.bf16.msra.mxu0 0
    %1644 = vmatprep.subr.bf16.mxu0 0
    %1645 = vmatpush2.bf16.msra.mxu0 0
    %1646 = vmatprep.subr.bf16.mxu0 0
    %1647 = vmatpush2.bf16.msra.mxu0 0
    %1648 = vmatprep.subr.bf16.mxu0 0
    %1649 = vmatpush2.bf16.msra.mxu0 0
    %1650 = vmatprep.subr.bf16.mxu0 0
    %1651 = vmatpush2.bf16.msra.mxu0 0
    %1652 = vmatprep.subr.bf16.mxu0 0
    %1653 = vmatpush2.bf16.msra.mxu0 0
    %1654 = vmatprep.subr.bf16.mxu0 0
    %1655 = vmatpush2.bf16.msra.mxu0 0
    %1656 = vmatprep.mubr.bf16.mxu0 0
    %1657 = vmatmul.mubr.bf16.gmra.mxu0 %v1622
    %v1658 = vpop.f32.mrf.mxu0
    %v1659 = vadd.f32 0.0, %v1658
    %v1660 = vpop.f32.mrf.mxu0
    %v1661 = vpop.f32.mrf.mxu0
    %v1662 = vpop.f32.mrf.mxu0
    %1663 = vdwg.mxu0
    %v1664 = vadd.f32 %v1601, %v1659
    %s1665 = scalar_lea.vmem %s9, 128
    %v1666 = vld [vmem:[%s1665] sm:$0xf]
    %v1667 = vld [vmem:[%s1665 + $0x4] sm:$0xf]
    %v1668 = vld [vmem:[%s1665 + $0x8] sm:$0xf]
    %v1669 = vld [vmem:[%s1665 + $0xc] sm:$0xf]
    %v1671 = vrot.slane %v1545, 2
    %v1676 = vunpack.c.l.b16 %v1666
    %v1677 = vunpack.c.l.b16 %v1667
    %v1678 = vunpack.c.l.b16 %v1668
    %v1679 = vunpack.c.l.b16 %v1669
    %v1680 = vpack.c.b16 %v1677, %v1676
    %v1681 = vpack.c.b16 %v1679, %v1678
    %v1685 = vsel %vm1183, %v1671, 0
    %1687 = vmatprep.subr.bf16.mxu0 0
    %1688 = vmatpush1.bf16.msra.mxu0 0
    %1689 = vmatprep.subr.bf16.mxu0 0
    %1690 = vmatpush1.bf16.msra.mxu0 0
    %1691 = vmatprep.subr.bf16.mxu0 0
    %1692 = vmatpush1.bf16.msra.mxu0 0
    %1693 = vmatprep.subr.bf16.mxu0 0
    %1694 = vmatpush1.bf16.msra.mxu0 0
    %1695 = vmatprep.subr.bf16.mxu0 0
    %1696 = vmatpush1.bf16.msra.mxu0 0
    %1697 = vmatprep.subr.bf16.mxu0 0
    %1698 = vmatpush1.bf16.msra.mxu0 0
    %1699 = vmatprep.subr.bf16.mxu0 0
    %1700 = vmatpush1.bf16.msra.mxu0 %v1681
    %1701 = vmatprep.subr.bf16.mxu0 0
    %1702 = vmatpush1.bf16.msra.mxu0 %v1680
    %1703 = vmatprep.subr.bf16.mxu0 0
    %1704 = vmatpush2.bf16.msra.mxu0 0
    %1705 = vmatprep.subr.bf16.mxu0 0
    %1706 = vmatpush2.bf16.msra.mxu0 0
    %1707 = vmatprep.subr.bf16.mxu0 0
    %1708 = vmatpush2.bf16.msra.mxu0 0
    %1709 = vmatprep.subr.bf16.mxu0 0
    %1710 = vmatpush2.bf16.msra.mxu0 0
    %1711 = vmatprep.subr.bf16.mxu0 0
    %1712 = vmatpush2.bf16.msra.mxu0 0
    %1713 = vmatprep.subr.bf16.mxu0 0
    %1714 = vmatpush2.bf16.msra.mxu0 0
    %1715 = vmatprep.subr.bf16.mxu0 0
    %1716 = vmatpush2.bf16.msra.mxu0 0
    %1717 = vmatprep.subr.bf16.mxu0 0
    %1718 = vmatpush2.bf16.msra.mxu0 0
    %1719 = vmatprep.mubr.bf16.mxu0 0
    %1720 = vmatmul.mubr.bf16.gmra.mxu0 %v1685
    %v1721 = vpop.f32.mrf.mxu0
    %v1722 = vadd.f32 0.0, %v1721
    %v1723 = vpop.f32.mrf.mxu0
    %v1724 = vpop.f32.mrf.mxu0
    %v1725 = vpop.f32.mrf.mxu0
    %1726 = vdwg.mxu0
    %v1727 = vadd.f32 %v1664, %v1722
    %s1728 = scalar_lea.vmem %s9, 144
    %v1729 = vld [vmem:[%s1728] sm:$0xf]
    %v1730 = vld [vmem:[%s1728 + $0x4] sm:$0xf]
    %v1731 = vld [vmem:[%s1728 + $0x8] sm:$0xf]
    %v1732 = vld [vmem:[%s1728 + $0xc] sm:$0xf]
    %v1733 = vrot.slane %v1607, 2
    %v1738 = vunpack.c.l.b16 %v1729
    %v1739 = vunpack.c.l.b16 %v1730
    %v1740 = vunpack.c.l.b16 %v1731
    %v1741 = vunpack.c.l.b16 %v1732
    %v1742 = vpack.c.b16 %v1739, %v1738
    %v1743 = vpack.c.b16 %v1741, %v1740
    %v1747 = vsel %vm1183, %v1733, 0
    %1749 = vmatprep.subr.bf16.mxu0 0
    %1750 = vmatpush1.bf16.msra.mxu0 0
    %1751 = vmatprep.subr.bf16.mxu0 0
    %1752 = vmatpush1.bf16.msra.mxu0 0
    %1753 = vmatprep.subr.bf16.mxu0 0
    %1754 = vmatpush1.bf16.msra.mxu0 0
    %1755 = vmatprep.subr.bf16.mxu0 0
    %1756 = vmatpush1.bf16.msra.mxu0 0
    %1757 = vmatprep.subr.bf16.mxu0 0
    %1758 = vmatpush1.bf16.msra.mxu0 0
    %1759 = vmatprep.subr.bf16.mxu0 0
    %1760 = vmatpush1.bf16.msra.mxu0 0
    %1761 = vmatprep.subr.bf16.mxu0 0
    %1762 = vmatpush1.bf16.msra.mxu0 %v1743
    %1763 = vmatprep.subr.bf16.mxu0 0
    %1764 = vmatpush1.bf16.msra.mxu0 %v1742
    %1765 = vmatprep.subr.bf16.mxu0 0
    %1766 = vmatpush2.bf16.msra.mxu0 0
    %1767 = vmatprep.subr.bf16.mxu0 0
    %1768 = vmatpush2.bf16.msra.mxu0 0
    %1769 = vmatprep.subr.bf16.mxu0 0
    %1770 = vmatpush2.bf16.msra.mxu0 0
    %1771 = vmatprep.subr.bf16.mxu0 0
    %1772 = vmatpush2.bf16.msra.mxu0 0
    %1773 = vmatprep.subr.bf16.mxu0 0
    %1774 = vmatpush2.bf16.msra.mxu0 0
    %1775 = vmatprep.subr.bf16.mxu0 0
    %1776 = vmatpush2.bf16.msra.mxu0 0
    %1777 = vmatprep.subr.bf16.mxu0 0
    %1778 = vmatpush2.bf16.msra.mxu0 0
    %1779 = vmatprep.subr.bf16.mxu0 0
    %1780 = vmatpush2.bf16.msra.mxu0 0
    %1781 = vmatprep.mubr.bf16.mxu0 0
    %1782 = vmatmul.mubr.bf16.gmra.mxu0 %v1747
    %v1783 = vpop.f32.mrf.mxu0
    %v1784 = vadd.f32 0.0, %v1783
    %v1785 = vpop.f32.mrf.mxu0
    %v1786 = vpop.f32.mrf.mxu0
    %v1787 = vpop.f32.mrf.mxu0
    %1788 = vdwg.mxu0
    %v1789 = vadd.f32 %v1727, %v1784
    %s1790 = scalar_lea.vmem %s9, 160
    %v1791 = vld [vmem:[%s1790] sm:$0xf]
    %v1792 = vld [vmem:[%s1790 + $0x4] sm:$0xf]
    %v1793 = vld [vmem:[%s1790 + $0x8] sm:$0xf]
    %v1794 = vld [vmem:[%s1790 + $0xc] sm:$0xf]
    %v1795 = vrot.slane %v1545, 3
    %v1800 = vunpack.c.l.b16 %v1791
    %v1801 = vunpack.c.l.b16 %v1792
    %v1802 = vunpack.c.l.b16 %v1793
    %v1803 = vunpack.c.l.b16 %v1794
    %v1804 = vpack.c.b16 %v1801, %v1800
    %v1805 = vpack.c.b16 %v1803, %v1802
    %v1809 = vsel %vm1183, %v1795, 0
    %1811 = vmatprep.subr.bf16.mxu0 0
    %1812 = vmatpush1.bf16.msra.mxu0 0
    %1813 = vmatprep.subr.bf16.mxu0 0
    %1814 = vmatpush1.bf16.msra.mxu0 0
    %1815 = vmatprep.subr.bf16.mxu0 0
    %1816 = vmatpush1.bf16.msra.mxu0 0
    %1817 = vmatprep.subr.bf16.mxu0 0
    %1818 = vmatpush1.bf16.msra.mxu0 0
    %1819 = vmatprep.subr.bf16.mxu0 0
    %1820 = vmatpush1.bf16.msra.mxu0 0
    %1821 = vmatprep.subr.bf16.mxu0 0
    %1822 = vmatpush1.bf16.msra.mxu0 0
    %1823 = vmatprep.subr.bf16.mxu0 0
    %1824 = vmatpush1.bf16.msra.mxu0 %v1805
    %1825 = vmatprep.subr.bf16.mxu0 0
    %1826 = vmatpush1.bf16.msra.mxu0 %v1804
    %1827 = vmatprep.subr.bf16.mxu0 0
    %1828 = vmatpush2.bf16.msra.mxu0 0
    %1829 = vmatprep.subr.bf16.mxu0 0
    %1830 = vmatpush2.bf16.msra.mxu0 0
    %1831 = vmatprep.subr.bf16.mxu0 0
    %1832 = vmatpush2.bf16.msra.mxu0 0
    %1833 = vmatprep.subr.bf16.mxu0 0
    %1834 = vmatpush2.bf16.msra.mxu0 0
    %1835 = vmatprep.subr.bf16.mxu0 0
    %1836 = vmatpush2.bf16.msra.mxu0 0
    %1837 = vmatprep.subr.bf16.mxu0 0
    %1838 = vmatpush2.bf16.msra.mxu0 0
    %1839 = vmatprep.subr.bf16.mxu0 0
    %1840 = vmatpush2.bf16.msra.mxu0 0
    %1841 = vmatprep.subr.bf16.mxu0 0
    %1842 = vmatpush2.bf16.msra.mxu0 0
    %1843 = vmatprep.mubr.bf16.mxu0 0
    %1844 = vmatmul.mubr.bf16.gmra.mxu0 %v1809
    %v1845 = vpop.f32.mrf.mxu0
    %v1846 = vadd.f32 0.0, %v1845
    %v1847 = vpop.f32.mrf.mxu0
    %v1848 = vpop.f32.mrf.mxu0
    %v1849 = vpop.f32.mrf.mxu0
    %1850 = vdwg.mxu0
    %v1851 = vadd.f32 %v1789, %v1846
    %s1852 = scalar_lea.vmem %s9, 176
    %v1853 = vld [vmem:[%s1852] sm:$0xf]
    %v1854 = vld [vmem:[%s1852 + $0x4] sm:$0xf]
    %v1855 = vld [vmem:[%s1852 + $0x8] sm:$0xf]
    %v1856 = vld [vmem:[%s1852 + $0xc] sm:$0xf]
    %v1857 = vrot.slane %v1607, 3
    %v1862 = vunpack.c.l.b16 %v1853
    %v1863 = vunpack.c.l.b16 %v1854
    %v1864 = vunpack.c.l.b16 %v1855
    %v1865 = vunpack.c.l.b16 %v1856
    %v1866 = vpack.c.b16 %v1863, %v1862
    %v1867 = vpack.c.b16 %v1865, %v1864
    %v1871 = vsel %vm1183, %v1857, 0
    %1873 = vmatprep.subr.bf16.mxu0 0
    %1874 = vmatpush1.bf16.msra.mxu0 0
    %1875 = vmatprep.subr.bf16.mxu0 0
    %1876 = vmatpush1.bf16.msra.mxu0 0
    %1877 = vmatprep.subr.bf16.mxu0 0
    %1878 = vmatpush1.bf16.msra.mxu0 0
    %1879 = vmatprep.subr.bf16.mxu0 0
    %1880 = vmatpush1.bf16.msra.mxu0 0
    %1881 = vmatprep.subr.bf16.mxu0 0
    %1882 = vmatpush1.bf16.msra.mxu0 0
    %1883 = vmatprep.subr.bf16.mxu0 0
    %1884 = vmatpush1.bf16.msra.mxu0 0
    %1885 = vmatprep.subr.bf16.mxu0 0
    %1886 = vmatpush1.bf16.msra.mxu0 %v1867
    %1887 = vmatprep.subr.bf16.mxu0 0
    %1888 = vmatpush1.bf16.msra.mxu0 %v1866
    %1889 = vmatprep.subr.bf16.mxu0 0
    %1890 = vmatpush2.bf16.msra.mxu0 0
    %1891 = vmatprep.subr.bf16.mxu0 0
    %1892 = vmatpush2.bf16.msra.mxu0 0
    %1893 = vmatprep.subr.bf16.mxu0 0
    %1894 = vmatpush2.bf16.msra.mxu0 0
    %1895 = vmatprep.subr.bf16.mxu0 0
    %1896 = vmatpush2.bf16.msra.mxu0 0
    %1897 = vmatprep.subr.bf16.mxu0 0
    %1898 = vmatpush2.bf16.msra.mxu0 0
    %1899 = vmatprep.subr.bf16.mxu0 0
    %1900 = vmatpush2.bf16.msra.mxu0 0
    %1901 = vmatprep.subr.bf16.mxu0 0
    %1902 = vmatpush2.bf16.msra.mxu0 0
    %1903 = vmatprep.subr.bf16.mxu0 0
    %1904 = vmatpush2.bf16.msra.mxu0 0
    %1905 = vmatprep.mubr.bf16.mxu0 0
    %1906 = vmatmul.mubr.bf16.gmra.mxu0 %v1871
    %v1907 = vpop.f32.mrf.mxu0
    %v1908 = vadd.f32 0.0, %v1907
    %v1909 = vpop.f32.mrf.mxu0
    %v1910 = vpop.f32.mrf.mxu0
    %v1911 = vpop.f32.mrf.mxu0
    %1912 = vdwg.mxu0
    %v1913 = vadd.f32 %v1851, %v1908
    %s1914 = scalar_lea.vmem %s9, 192
    %v1915 = vld [vmem:[%s1914] sm:$0xf]
    %v1916 = vld [vmem:[%s1914 + $0x4] sm:$0xf]
    %v1917 = vld [vmem:[%s1914 + $0x8] sm:$0xf]
    %v1918 = vld [vmem:[%s1914 + $0xc] sm:$0xf]
    %v1919 = vpack.c.bf16 %v1160, %v1160
    %v1921 = vrot.slane %v1919, 1
    %v1926 = vunpack.c.l.b16 %v1915
    %v1927 = vunpack.c.l.b16 %v1916
    %v1928 = vunpack.c.l.b16 %v1917
    %v1929 = vunpack.c.l.b16 %v1918
    %v1930 = vpack.c.b16 %v1927, %v1926
    %v1931 = vpack.c.b16 %v1929, %v1928
    %v1935 = vsel %vm1183, %v1921, 0
    %1937 = vmatprep.subr.bf16.mxu0 0
    %1938 = vmatpush1.bf16.msra.mxu0 0
    %1939 = vmatprep.subr.bf16.mxu0 0
    %1940 = vmatpush1.bf16.msra.mxu0 0
    %1941 = vmatprep.subr.bf16.mxu0 0
    %1942 = vmatpush1.bf16.msra.mxu0 0
    %1943 = vmatprep.subr.bf16.mxu0 0
    %1944 = vmatpush1.bf16.msra.mxu0 0
    %1945 = vmatprep.subr.bf16.mxu0 0
    %1946 = vmatpush1.bf16.msra.mxu0 0
    %1947 = vmatprep.subr.bf16.mxu0 0
    %1948 = vmatpush1.bf16.msra.mxu0 0
    %1949 = vmatprep.subr.bf16.mxu0 0
    %1950 = vmatpush1.bf16.msra.mxu0 %v1931
    %1951 = vmatprep.subr.bf16.mxu0 0
    %1952 = vmatpush1.bf16.msra.mxu0 %v1930
    %1953 = vmatprep.subr.bf16.mxu0 0
    %1954 = vmatpush2.bf16.msra.mxu0 0
    %1955 = vmatprep.subr.bf16.mxu0 0
    %1956 = vmatpush2.bf16.msra.mxu0 0
    %1957 = vmatprep.subr.bf16.mxu0 0
    %1958 = vmatpush2.bf16.msra.mxu0 0
    %1959 = vmatprep.subr.bf16.mxu0 0
    %1960 = vmatpush2.bf16.msra.mxu0 0
    %1961 = vmatprep.subr.bf16.mxu0 0
    %1962 = vmatpush2.bf16.msra.mxu0 0
    %1963 = vmatprep.subr.bf16.mxu0 0
    %1964 = vmatpush2.bf16.msra.mxu0 0
    %1965 = vmatprep.subr.bf16.mxu0 0
    %1966 = vmatpush2.bf16.msra.mxu0 0
    %1967 = vmatprep.subr.bf16.mxu0 0
    %1968 = vmatpush2.bf16.msra.mxu0 0
    %1969 = vmatprep.mubr.bf16.mxu0 0
    %1970 = vmatmul.mubr.bf16.gmra.mxu0 %v1935
    %v1971 = vpop.f32.mrf.mxu0
    %v1972 = vadd.f32 0.0, %v1971
    %v1973 = vpop.f32.mrf.mxu0
    %v1974 = vpop.f32.mrf.mxu0
    %v1975 = vpop.f32.mrf.mxu0
    %1976 = vdwg.mxu0
    %v1977 = vadd.f32 %v1913, %v1972
    %s1978 = scalar_lea.vmem %s9, 208
    %v1979 = vld [vmem:[%s1978] sm:$0xf]
    %v1980 = vld [vmem:[%s1978 + $0x4] sm:$0xf]
    %v1981 = vld [vmem:[%s1978 + $0x8] sm:$0xf]
    %v1982 = vld [vmem:[%s1978 + $0xc] sm:$0xf]
    %v1984 = vshrl.u32 %v1919, 16
    %v1986 = vrot.slane %v1984, 1
    %v1991 = vunpack.c.l.b16 %v1979
    %v1992 = vunpack.c.l.b16 %v1980
    %v1993 = vunpack.c.l.b16 %v1981
    %v1994 = vunpack.c.l.b16 %v1982
    %v1995 = vpack.c.b16 %v1992, %v1991
    %v1996 = vpack.c.b16 %v1994, %v1993
    %v2000 = vsel %vm1183, %v1986, 0
    %2002 = vmatprep.subr.bf16.mxu0 0
    %2003 = vmatpush1.bf16.msra.mxu0 0
    %2004 = vmatprep.subr.bf16.mxu0 0
    %2005 = vmatpush1.bf16.msra.mxu0 0
    %2006 = vmatprep.subr.bf16.mxu0 0
    %2007 = vmatpush1.bf16.msra.mxu0 0
    %2008 = vmatprep.subr.bf16.mxu0 0
    %2009 = vmatpush1.bf16.msra.mxu0 0
    %2010 = vmatprep.subr.bf16.mxu0 0
    %2011 = vmatpush1.bf16.msra.mxu0 0
    %2012 = vmatprep.subr.bf16.mxu0 0
    %2013 = vmatpush1.bf16.msra.mxu0 0
    %2014 = vmatprep.subr.bf16.mxu0 0
    %2015 = vmatpush1.bf16.msra.mxu0 %v1996
    %2016 = vmatprep.subr.bf16.mxu0 0
    %2017 = vmatpush1.bf16.msra.mxu0 %v1995
    %2018 = vmatprep.subr.bf16.mxu0 0
    %2019 = vmatpush2.bf16.msra.mxu0 0
    %2020 = vmatprep.subr.bf16.mxu0 0
    %2021 = vmatpush2.bf16.msra.mxu0 0
    %2022 = vmatprep.subr.bf16.mxu0 0
    %2023 = vmatpush2.bf16.msra.mxu0 0
    %2024 = vmatprep.subr.bf16.mxu0 0
    %2025 = vmatpush2.bf16.msra.mxu0 0
    %2026 = vmatprep.subr.bf16.mxu0 0
    %2027 = vmatpush2.bf16.msra.mxu0 0
    %2028 = vmatprep.subr.bf16.mxu0 0
    %2029 = vmatpush2.bf16.msra.mxu0 0
    %2030 = vmatprep.subr.bf16.mxu0 0
    %2031 = vmatpush2.bf16.msra.mxu0 0
    %2032 = vmatprep.subr.bf16.mxu0 0
    %2033 = vmatpush2.bf16.msra.mxu0 0
    %2034 = vmatprep.mubr.bf16.mxu0 0
    %2035 = vmatmul.mubr.bf16.gmra.mxu0 %v2000
    %v2036 = vpop.f32.mrf.mxu0
    %v2037 = vadd.f32 0.0, %v2036
    %v2038 = vpop.f32.mrf.mxu0
    %v2039 = vpop.f32.mrf.mxu0
    %v2040 = vpop.f32.mrf.mxu0
    %2041 = vdwg.mxu0
    %v2042 = vadd.f32 %v1977, %v2037
    %s2043 = scalar_lea.vmem %s9, 224
    %v2044 = vld [vmem:[%s2043] sm:$0xf]
    %v2045 = vld [vmem:[%s2043 + $0x4] sm:$0xf]
    %v2046 = vld [vmem:[%s2043 + $0x8] sm:$0xf]
    %v2047 = vld [vmem:[%s2043 + $0xc] sm:$0xf]
    %v2048 = vrot.slane %v1919, 2
    %v2053 = vunpack.c.l.b16 %v2044
    %v2054 = vunpack.c.l.b16 %v2045
    %v2055 = vunpack.c.l.b16 %v2046
    %v2056 = vunpack.c.l.b16 %v2047
    %v2057 = vpack.c.b16 %v2054, %v2053
    %v2058 = vpack.c.b16 %v2056, %v2055
    %v2062 = vsel %vm1183, %v2048, 0
    %2064 = vmatprep.subr.bf16.mxu0 0
    %2065 = vmatpush1.bf16.msra.mxu0 0
    %2066 = vmatprep.subr.bf16.mxu0 0
    %2067 = vmatpush1.bf16.msra.mxu0 0
    %2068 = vmatprep.subr.bf16.mxu0 0
    %2069 = vmatpush1.bf16.msra.mxu0 0
    %2070 = vmatprep.subr.bf16.mxu0 0
    %2071 = vmatpush1.bf16.msra.mxu0 0
    %2072 = vmatprep.subr.bf16.mxu0 0
    %2073 = vmatpush1.bf16.msra.mxu0 0
    %2074 = vmatprep.subr.bf16.mxu0 0
    %2075 = vmatpush1.bf16.msra.mxu0 0
    %2076 = vmatprep.subr.bf16.mxu0 0
    %2077 = vmatpush1.bf16.msra.mxu0 %v2058
    %2078 = vmatprep.subr.bf16.mxu0 0
    %2079 = vmatpush1.bf16.msra.mxu0 %v2057
    %2080 = vmatprep.subr.bf16.mxu0 0
    %2081 = vmatpush2.bf16.msra.mxu0 0
    %2082 = vmatprep.subr.bf16.mxu0 0
    %2083 = vmatpush2.bf16.msra.mxu0 0
    %2084 = vmatprep.subr.bf16.mxu0 0
    %2085 = vmatpush2.bf16.msra.mxu0 0
    %2086 = vmatprep.subr.bf16.mxu0 0
    %2087 = vmatpush2.bf16.msra.mxu0 0
    %2088 = vmatprep.subr.bf16.mxu0 0
    %2089 = vmatpush2.bf16.msra.mxu0 0
    %2090 = vmatprep.subr.bf16.mxu0 0
    %2091 = vmatpush2.bf16.msra.mxu0 0
    %2092 = vmatprep.subr.bf16.mxu0 0
    %2093 = vmatpush2.bf16.msra.mxu0 0
    %2094 = vmatprep.subr.bf16.mxu0 0
    %2095 = vmatpush2.bf16.msra.mxu0 0
    %2096 = vmatprep.mubr.bf16.mxu0 0
    %2097 = vmatmul.mubr.bf16.gmra.mxu0 %v2062
    %v2098 = vpop.f32.mrf.mxu0
    %v2099 = vadd.f32 0.0, %v2098
    %v2100 = vpop.f32.mrf.mxu0
    %v2101 = vpop.f32.mrf.mxu0
    %v2102 = vpop.f32.mrf.mxu0
    %2103 = vdwg.mxu0
    %v2104 = vadd.f32 %v2042, %v2099
    %s2105 = scalar_lea.vmem %s9, 240
    %v2106 = vld [vmem:[%s2105] sm:$0xf]
    %v2107 = vld [vmem:[%s2105 + $0x4] sm:$0xf]
    %v2108 = vld [vmem:[%s2105 + $0x8] sm:$0xf]
    %v2109 = vld [vmem:[%s2105 + $0xc] sm:$0xf]
    %v2110 = vrot.slane %v1984, 2
    %v2115 = vunpack.c.l.b16 %v2106
    %v2116 = vunpack.c.l.b16 %v2107
    %v2117 = vunpack.c.l.b16 %v2108
    %v2118 = vunpack.c.l.b16 %v2109
    %v2119 = vpack.c.b16 %v2116, %v2115
    %v2120 = vpack.c.b16 %v2118, %v2117
    %v2124 = vsel %vm1183, %v2110, 0
    %2126 = vmatprep.subr.bf16.mxu0 0
    %2127 = vmatpush1.bf16.msra.mxu0 0
    %2128 = vmatprep.subr.bf16.mxu0 0
    %2129 = vmatpush1.bf16.msra.mxu0 0
    %2130 = vmatprep.subr.bf16.mxu0 0
    %2131 = vmatpush1.bf16.msra.mxu0 0
    %2132 = vmatprep.subr.bf16.mxu0 0
    %2133 = vmatpush1.bf16.msra.mxu0 0
    %2134 = vmatprep.subr.bf16.mxu0 0
    %2135 = vmatpush1.bf16.msra.mxu0 0
    %2136 = vmatprep.subr.bf16.mxu0 0
    %2137 = vmatpush1.bf16.msra.mxu0 0
    %2138 = vmatprep.subr.bf16.mxu0 0
    %2139 = vmatpush1.bf16.msra.mxu0 %v2120
    %2140 = vmatprep.subr.bf16.mxu0 0
    %2141 = vmatpush1.bf16.msra.mxu0 %v2119
    %2142 = vmatprep.subr.bf16.mxu0 0
    %2143 = vmatpush2.bf16.msra.mxu0 0
    %2144 = vmatprep.subr.bf16.mxu0 0
    %2145 = vmatpush2.bf16.msra.mxu0 0
    %2146 = vmatprep.subr.bf16.mxu0 0
    %2147 = vmatpush2.bf16.msra.mxu0 0
    %2148 = vmatprep.subr.bf16.mxu0 0
    %2149 = vmatpush2.bf16.msra.mxu0 0
    %2150 = vmatprep.subr.bf16.mxu0 0
    %2151 = vmatpush2.bf16.msra.mxu0 0
    %2152 = vmatprep.subr.bf16.mxu0 0
    %2153 = vmatpush2.bf16.msra.mxu0 0
    %2154 = vmatprep.subr.bf16.mxu0 0
    %2155 = vmatpush2.bf16.msra.mxu0 0
    %2156 = vmatprep.subr.bf16.mxu0 0
    %2157 = vmatpush2.bf16.msra.mxu0 0
    %2158 = vmatprep.mubr.bf16.mxu0 0
    %2159 = vmatmul.mubr.bf16.gmra.mxu0 %v2124
    %v2160 = vpop.f32.mrf.mxu0
    %v2161 = vadd.f32 0.0, %v2160
    %v2162 = vpop.f32.mrf.mxu0
    %v2163 = vpop.f32.mrf.mxu0
    %v2164 = vpop.f32.mrf.mxu0
    %2165 = vdwg.mxu0
    %v2166 = vadd.f32 %v2104, %v2161
    %vm2167 = vcmask 73728
    %2168 = vst.msk [vmem:[#allocation2] sm:$0x1] %vm2167, %v2166
    %v2169 = vld [vmem:[%s10] sm:$0x1]
    %v2170 = vld [vmem:[%s9] sm:$0xf]
    %v2171 = vld [vmem:[%s9 + $0x4] sm:$0xf]
    %v2172 = vld [vmem:[%s9 + $0x8] sm:$0xf]
    %v2173 = vld [vmem:[%s9 + $0xc] sm:$0xf]
    %v2174 = vpack.c.bf16 %v1161, %v1161
    %v2176 = vrot.slane %v2174, 2
    %v2181 = vunpack.c.l.b16 %v2170
    %v2182 = vunpack.c.l.b16 %v2171
    %v2183 = vunpack.c.l.b16 %v2172
    %v2184 = vunpack.c.l.b16 %v2173
    %v2185 = vpack.c.b16 %v2182, %v2181
    %v2186 = vpack.c.b16 %v2184, %v2183
    %v2190 = vsel %vm1183, %v2176, 0
    %2192 = vmatprep.subr.bf16.mxu0 0
    %2193 = vmatpush1.bf16.msra.mxu0 0
    %2194 = vmatprep.subr.bf16.mxu0 0
    %2195 = vmatpush1.bf16.msra.mxu0 0
    %2196 = vmatprep.subr.bf16.mxu0 0
    %2197 = vmatpush1.bf16.msra.mxu0 0
    %2198 = vmatprep.subr.bf16.mxu0 0
    %2199 = vmatpush1.bf16.msra.mxu0 0
    %2200 = vmatprep.subr.bf16.mxu0 0
    %2201 = vmatpush1.bf16.msra.mxu0 0
    %2202 = vmatprep.subr.bf16.mxu0 0
    %2203 = vmatpush1.bf16.msra.mxu0 0
    %2204 = vmatprep.subr.bf16.mxu0 0
    %2205 = vmatpush1.bf16.msra.mxu0 %v2186
    %2206 = vmatprep.subr.bf16.mxu0 0
    %2207 = vmatpush1.bf16.msra.mxu0 %v2185
    %2208 = vmatprep.subr.bf16.mxu0 0
    %2209 = vmatpush2.bf16.msra.mxu0 0
    %2210 = vmatprep.subr.bf16.mxu0 0
    %2211 = vmatpush2.bf16.msra.mxu0 0
    %2212 = vmatprep.subr.bf16.mxu0 0
    %2213 = vmatpush2.bf16.msra.mxu0 0
    %2214 = vmatprep.subr.bf16.mxu0 0
    %2215 = vmatpush2.bf16.msra.mxu0 0
    %2216 = vmatprep.subr.bf16.mxu0 0
    %2217 = vmatpush2.bf16.msra.mxu0 0
    %2218 = vmatprep.subr.bf16.mxu0 0
    %2219 = vmatpush2.bf16.msra.mxu0 0
    %2220 = vmatprep.subr.bf16.mxu0 0
    %2221 = vmatpush2.bf16.msra.mxu0 0
    %2222 = vmatprep.subr.bf16.mxu0 0
    %2223 = vmatpush2.bf16.msra.mxu0 0
    %2224 = vmatprep.mubr.bf16.mxu0 0
    %2225 = vmatmul.mubr.bf16.gmra.mxu0 %v2190
    %v2226 = vpop.f32.mrf.mxu0
    %v2227 = vadd.f32 0.0, %v2226
    %v2228 = vpop.f32.mrf.mxu0
    %v2229 = vpop.f32.mrf.mxu0
    %v2230 = vpop.f32.mrf.mxu0
    %2231 = vdwg.mxu0
    %v2232 = vadd.f32 %v2169, %v2227
    %v2233 = vld [vmem:[%s1228] sm:$0xf]
    %v2234 = vld [vmem:[%s1228 + $0x4] sm:$0xf]
    %v2235 = vld [vmem:[%s1228 + $0x8] sm:$0xf]
    %v2236 = vld [vmem:[%s1228 + $0xc] sm:$0xf]
    %v2238 = vshrl.u32 %v2174, 16
    %v2240 = vrot.slane %v2238, 2
    %v2245 = vunpack.c.l.b16 %v2233
    %v2246 = vunpack.c.l.b16 %v2234
    %v2247 = vunpack.c.l.b16 %v2235
    %v2248 = vunpack.c.l.b16 %v2236
    %v2249 = vpack.c.b16 %v2246, %v2245
    %v2250 = vpack.c.b16 %v2248, %v2247
    %v2254 = vsel %vm1183, %v2240, 0
    %2256 = vmatprep.subr.bf16.mxu0 0
    %2257 = vmatpush1.bf16.msra.mxu0 0
    %2258 = vmatprep.subr.bf16.mxu0 0
    %2259 = vmatpush1.bf16.msra.mxu0 0
    %2260 = vmatprep.subr.bf16.mxu0 0
    %2261 = vmatpush1.bf16.msra.mxu0 0
    %2262 = vmatprep.subr.bf16.mxu0 0
    %2263 = vmatpush1.bf16.msra.mxu0 0
    %2264 = vmatprep.subr.bf16.mxu0 0
    %2265 = vmatpush1.bf16.msra.mxu0 0
    %2266 = vmatprep.subr.bf16.mxu0 0
    %2267 = vmatpush1.bf16.msra.mxu0 0
    %2268 = vmatprep.subr.bf16.mxu0 0
    %2269 = vmatpush1.bf16.msra.mxu0 %v2250
    %2270 = vmatprep.subr.bf16.mxu0 0
    %2271 = vmatpush1.bf16.msra.mxu0 %v2249
    %2272 = vmatprep.subr.bf16.mxu0 0
    %2273 = vmatpush2.bf16.msra.mxu0 0
    %2274 = vmatprep.subr.bf16.mxu0 0
    %2275 = vmatpush2.bf16.msra.mxu0 0
    %2276 = vmatprep.subr.bf16.mxu0 0
    %2277 = vmatpush2.bf16.msra.mxu0 0
    %2278 = vmatprep.subr.bf16.mxu0 0
    %2279 = vmatpush2.bf16.msra.mxu0 0
    %2280 = vmatprep.subr.bf16.mxu0 0
    %2281 = vmatpush2.bf16.msra.mxu0 0
    %2282 = vmatprep.subr.bf16.mxu0 0
    %2283 = vmatpush2.bf16.msra.mxu0 0
    %2284 = vmatprep.subr.bf16.mxu0 0
    %2285 = vmatpush2.bf16.msra.mxu0 0
    %2286 = vmatprep.subr.bf16.mxu0 0
    %2287 = vmatpush2.bf16.msra.mxu0 0
    %2288 = vmatprep.mubr.bf16.mxu0 0
    %2289 = vmatmul.mubr.bf16.gmra.mxu0 %v2254
    %v2290 = vpop.f32.mrf.mxu0
    %v2291 = vadd.f32 0.0, %v2290
    %v2292 = vpop.f32.mrf.mxu0
    %v2293 = vpop.f32.mrf.mxu0
    %v2294 = vpop.f32.mrf.mxu0
    %2295 = vdwg.mxu0
    %v2296 = vadd.f32 %v2232, %v2291
    %v2297 = vld [vmem:[%s1291] sm:$0xf]
    %v2298 = vld [vmem:[%s1291 + $0x4] sm:$0xf]
    %v2299 = vld [vmem:[%s1291 + $0x8] sm:$0xf]
    %v2300 = vld [vmem:[%s1291 + $0xc] sm:$0xf]
    %v2301 = vrot.slane %v2174, 3
    %v2306 = vunpack.c.l.b16 %v2297
    %v2307 = vunpack.c.l.b16 %v2298
    %v2308 = vunpack.c.l.b16 %v2299
    %v2309 = vunpack.c.l.b16 %v2300
    %v2310 = vpack.c.b16 %v2307, %v2306
    %v2311 = vpack.c.b16 %v2309, %v2308
    %v2315 = vsel %vm1183, %v2301, 0
    %2317 = vmatprep.subr.bf16.mxu0 0
    %2318 = vmatpush1.bf16.msra.mxu0 0
    %2319 = vmatprep.subr.bf16.mxu0 0
    %2320 = vmatpush1.bf16.msra.mxu0 0
    %2321 = vmatprep.subr.bf16.mxu0 0
    %2322 = vmatpush1.bf16.msra.mxu0 0
    %2323 = vmatprep.subr.bf16.mxu0 0
    %2324 = vmatpush1.bf16.msra.mxu0 0
    %2325 = vmatprep.subr.bf16.mxu0 0
    %2326 = vmatpush1.bf16.msra.mxu0 0
    %2327 = vmatprep.subr.bf16.mxu0 0
    %2328 = vmatpush1.bf16.msra.mxu0 0
    %2329 = vmatprep.subr.bf16.mxu0 0
    %2330 = vmatpush1.bf16.msra.mxu0 %v2311
    %2331 = vmatprep.subr.bf16.mxu0 0
    %2332 = vmatpush1.bf16.msra.mxu0 %v2310
    %2333 = vmatprep.subr.bf16.mxu0 0
    %2334 = vmatpush2.bf16.msra.mxu0 0
    %2335 = vmatprep.subr.bf16.mxu0 0
    %2336 = vmatpush2.bf16.msra.mxu0 0
    %2337 = vmatprep.subr.bf16.mxu0 0
    %2338 = vmatpush2.bf16.msra.mxu0 0
    %2339 = vmatprep.subr.bf16.mxu0 0
    %2340 = vmatpush2.bf16.msra.mxu0 0
    %2341 = vmatprep.subr.bf16.mxu0 0
    %2342 = vmatpush2.bf16.msra.mxu0 0
    %2343 = vmatprep.subr.bf16.mxu0 0
    %2344 = vmatpush2.bf16.msra.mxu0 0
    %2345 = vmatprep.subr.bf16.mxu0 0
    %2346 = vmatpush2.bf16.msra.mxu0 0
    %2347 = vmatprep.subr.bf16.mxu0 0
    %2348 = vmatpush2.bf16.msra.mxu0 0
    %2349 = vmatprep.mubr.bf16.mxu0 0
    %2350 = vmatmul.mubr.bf16.gmra.mxu0 %v2315
    %v2351 = vpop.f32.mrf.mxu0
    %v2352 = vadd.f32 0.0, %v2351
    %v2353 = vpop.f32.mrf.mxu0
    %v2354 = vpop.f32.mrf.mxu0
    %v2355 = vpop.f32.mrf.mxu0
    %2356 = vdwg.mxu0
    %v2357 = vadd.f32 %v2296, %v2352
    %v2358 = vld [vmem:[%s1354] sm:$0xf]
    %v2359 = vld [vmem:[%s1354 + $0x4] sm:$0xf]
    %v2360 = vld [vmem:[%s1354 + $0x8] sm:$0xf]
    %v2361 = vld [vmem:[%s1354 + $0xc] sm:$0xf]
    %v2362 = vrot.slane %v2238, 3
    %v2367 = vunpack.c.l.b16 %v2358
    %v2368 = vunpack.c.l.b16 %v2359
    %v2369 = vunpack.c.l.b16 %v2360
    %v2370 = vunpack.c.l.b16 %v2361
    %v2371 = vpack.c.b16 %v2368, %v2367
    %v2372 = vpack.c.b16 %v2370, %v2369
    %v2376 = vsel %vm1183, %v2362, 0
    %2378 = vmatprep.subr.bf16.mxu0 0
    %2379 = vmatpush1.bf16.msra.mxu0 0
    %2380 = vmatprep.subr.bf16.mxu0 0
    %2381 = vmatpush1.bf16.msra.mxu0 0
    %2382 = vmatprep.subr.bf16.mxu0 0
    %2383 = vmatpush1.bf16.msra.mxu0 0
    %2384 = vmatprep.subr.bf16.mxu0 0
    %2385 = vmatpush1.bf16.msra.mxu0 0
    %2386 = vmatprep.subr.bf16.mxu0 0
    %2387 = vmatpush1.bf16.msra.mxu0 0
    %2388 = vmatprep.subr.bf16.mxu0 0
    %2389 = vmatpush1.bf16.msra.mxu0 0
    %2390 = vmatprep.subr.bf16.mxu0 0
    %2391 = vmatpush1.bf16.msra.mxu0 %v2372
    %2392 = vmatprep.subr.bf16.mxu0 0
    %2393 = vmatpush1.bf16.msra.mxu0 %v2371
    %2394 = vmatprep.subr.bf16.mxu0 0
    %2395 = vmatpush2.bf16.msra.mxu0 0
    %2396 = vmatprep.subr.bf16.mxu0 0
    %2397 = vmatpush2.bf16.msra.mxu0 0
    %2398 = vmatprep.subr.bf16.mxu0 0
    %2399 = vmatpush2.bf16.msra.mxu0 0
    %2400 = vmatprep.subr.bf16.mxu0 0
    %2401 = vmatpush2.bf16.msra.mxu0 0
    %2402 = vmatprep.subr.bf16.mxu0 0
    %2403 = vmatpush2.bf16.msra.mxu0 0
    %2404 = vmatprep.subr.bf16.mxu0 0
    %2405 = vmatpush2.bf16.msra.mxu0 0
    %2406 = vmatprep.subr.bf16.mxu0 0
    %2407 = vmatpush2.bf16.msra.mxu0 0
    %2408 = vmatprep.subr.bf16.mxu0 0
    %2409 = vmatpush2.bf16.msra.mxu0 0
    %2410 = vmatprep.mubr.bf16.mxu0 0
    %2411 = vmatmul.mubr.bf16.gmra.mxu0 %v2376
    %v2412 = vpop.f32.mrf.mxu0
    %v2413 = vadd.f32 0.0, %v2412
    %v2414 = vpop.f32.mrf.mxu0
    %v2415 = vpop.f32.mrf.mxu0
    %v2416 = vpop.f32.mrf.mxu0
    %2417 = vdwg.mxu0
    %v2418 = vadd.f32 %v2357, %v2413
    %v2419 = vld [vmem:[%s1416] sm:$0xf]
    %v2420 = vld [vmem:[%s1416 + $0x4] sm:$0xf]
    %v2421 = vld [vmem:[%s1416 + $0x8] sm:$0xf]
    %v2422 = vld [vmem:[%s1416 + $0xc] sm:$0xf]
    %v2423 = vpack.c.bf16 %v1162, %v1162
    %v2425 = vrot.slane %v2423, 1
    %v2430 = vunpack.c.l.b16 %v2419
    %v2431 = vunpack.c.l.b16 %v2420
    %v2432 = vunpack.c.l.b16 %v2421
    %v2433 = vunpack.c.l.b16 %v2422
    %v2434 = vpack.c.b16 %v2431, %v2430
    %v2435 = vpack.c.b16 %v2433, %v2432
    %v2439 = vsel %vm1183, %v2425, 0
    %2441 = vmatprep.subr.bf16.mxu0 0
    %2442 = vmatpush1.bf16.msra.mxu0 0
    %2443 = vmatprep.subr.bf16.mxu0 0
    %2444 = vmatpush1.bf16.msra.mxu0 0
    %2445 = vmatprep.subr.bf16.mxu0 0
    %2446 = vmatpush1.bf16.msra.mxu0 0
    %2447 = vmatprep.subr.bf16.mxu0 0
    %2448 = vmatpush1.bf16.msra.mxu0 0
    %2449 = vmatprep.subr.bf16.mxu0 0
    %2450 = vmatpush1.bf16.msra.mxu0 0
    %2451 = vmatprep.subr.bf16.mxu0 0
    %2452 = vmatpush1.bf16.msra.mxu0 0
    %2453 = vmatprep.subr.bf16.mxu0 0
    %2454 = vmatpush1.bf16.msra.mxu0 %v2435
    %2455 = vmatprep.subr.bf16.mxu0 0
    %2456 = vmatpush1.bf16.msra.mxu0 %v2434
    %2457 = vmatprep.subr.bf16.mxu0 0
    %2458 = vmatpush2.bf16.msra.mxu0 0
    %2459 = vmatprep.subr.bf16.mxu0 0
    %2460 = vmatpush2.bf16.msra.mxu0 0
    %2461 = vmatprep.subr.bf16.mxu0 0
    %2462 = vmatpush2.bf16.msra.mxu0 0
    %2463 = vmatprep.subr.bf16.mxu0 0
    %2464 = vmatpush2.bf16.msra.mxu0 0
    %2465 = vmatprep.subr.bf16.mxu0 0
    %2466 = vmatpush2.bf16.msra.mxu0 0
    %2467 = vmatprep.subr.bf16.mxu0 0
    %2468 = vmatpush2.bf16.msra.mxu0 0
    %2469 = vmatprep.subr.bf16.mxu0 0
    %2470 = vmatpush2.bf16.msra.mxu0 0
    %2471 = vmatprep.subr.bf16.mxu0 0
    %2472 = vmatpush2.bf16.msra.mxu0 0
    %2473 = vmatprep.mubr.bf16.mxu0 0
    %2474 = vmatmul.mubr.bf16.gmra.mxu0 %v2439
    %v2475 = vpop.f32.mrf.mxu0
    %v2476 = vadd.f32 0.0, %v2475
    %v2477 = vpop.f32.mrf.mxu0
    %v2478 = vpop.f32.mrf.mxu0
    %v2479 = vpop.f32.mrf.mxu0
    %2480 = vdwg.mxu0
    %v2481 = vadd.f32 %v2418, %v2476
    %v2482 = vld [vmem:[%s1478] sm:$0xf]
    %v2483 = vld [vmem:[%s1478 + $0x4] sm:$0xf]
    %v2484 = vld [vmem:[%s1478 + $0x8] sm:$0xf]
    %v2485 = vld [vmem:[%s1478 + $0xc] sm:$0xf]
    %v2487 = vshrl.u32 %v2423, 16
    %v2489 = vrot.slane %v2487, 1
    %v2494 = vunpack.c.l.b16 %v2482
    %v2495 = vunpack.c.l.b16 %v2483
    %v2496 = vunpack.c.l.b16 %v2484
    %v2497 = vunpack.c.l.b16 %v2485
    %v2498 = vpack.c.b16 %v2495, %v2494
    %v2499 = vpack.c.b16 %v2497, %v2496
    %v2503 = vsel %vm1183, %v2489, 0
    %2505 = vmatprep.subr.bf16.mxu0 0
    %2506 = vmatpush1.bf16.msra.mxu0 0
    %2507 = vmatprep.subr.bf16.mxu0 0
    %2508 = vmatpush1.bf16.msra.mxu0 0
    %2509 = vmatprep.subr.bf16.mxu0 0
    %2510 = vmatpush1.bf16.msra.mxu0 0
    %2511 = vmatprep.subr.bf16.mxu0 0
    %2512 = vmatpush1.bf16.msra.mxu0 0
    %2513 = vmatprep.subr.bf16.mxu0 0
    %2514 = vmatpush1.bf16.msra.mxu0 0
    %2515 = vmatprep.subr.bf16.mxu0 0
    %2516 = vmatpush1.bf16.msra.mxu0 0
    %2517 = vmatprep.subr.bf16.mxu0 0
    %2518 = vmatpush1.bf16.msra.mxu0 %v2499
    %2519 = vmatprep.subr.bf16.mxu0 0
    %2520 = vmatpush1.bf16.msra.mxu0 %v2498
    %2521 = vmatprep.subr.bf16.mxu0 0
    %2522 = vmatpush2.bf16.msra.mxu0 0
    %2523 = vmatprep.subr.bf16.mxu0 0
    %2524 = vmatpush2.bf16.msra.mxu0 0
    %2525 = vmatprep.subr.bf16.mxu0 0
    %2526 = vmatpush2.bf16.msra.mxu0 0
    %2527 = vmatprep.subr.bf16.mxu0 0
    %2528 = vmatpush2.bf16.msra.mxu0 0
    %2529 = vmatprep.subr.bf16.mxu0 0
    %2530 = vmatpush2.bf16.msra.mxu0 0
    %2531 = vmatprep.subr.bf16.mxu0 0
    %2532 = vmatpush2.bf16.msra.mxu0 0
    %2533 = vmatprep.subr.bf16.mxu0 0
    %2534 = vmatpush2.bf16.msra.mxu0 0
    %2535 = vmatprep.subr.bf16.mxu0 0
    %2536 = vmatpush2.bf16.msra.mxu0 0
    %2537 = vmatprep.mubr.bf16.mxu0 0
    %2538 = vmatmul.mubr.bf16.gmra.mxu0 %v2503
    %v2539 = vpop.f32.mrf.mxu0
    %v2540 = vadd.f32 0.0, %v2539
    %v2541 = vpop.f32.mrf.mxu0
    %v2542 = vpop.f32.mrf.mxu0
    %v2543 = vpop.f32.mrf.mxu0
    %2544 = vdwg.mxu0
    %v2545 = vadd.f32 %v2481, %v2540
    %v2546 = vld [vmem:[%s1540] sm:$0xf]
    %v2547 = vld [vmem:[%s1540 + $0x4] sm:$0xf]
    %v2548 = vld [vmem:[%s1540 + $0x8] sm:$0xf]
    %v2549 = vld [vmem:[%s1540 + $0xc] sm:$0xf]
    %v2550 = vrot.slane %v2423, 2
    %v2555 = vunpack.c.l.b16 %v2546
    %v2556 = vunpack.c.l.b16 %v2547
    %v2557 = vunpack.c.l.b16 %v2548
    %v2558 = vunpack.c.l.b16 %v2549
    %v2559 = vpack.c.b16 %v2556, %v2555
    %v2560 = vpack.c.b16 %v2558, %v2557
    %v2564 = vsel %vm1183, %v2550, 0
    %2566 = vmatprep.subr.bf16.mxu0 0
    %2567 = vmatpush1.bf16.msra.mxu0 0
    %2568 = vmatprep.subr.bf16.mxu0 0
    %2569 = vmatpush1.bf16.msra.mxu0 0
    %2570 = vmatprep.subr.bf16.mxu0 0
    %2571 = vmatpush1.bf16.msra.mxu0 0
    %2572 = vmatprep.subr.bf16.mxu0 0
    %2573 = vmatpush1.bf16.msra.mxu0 0
    %2574 = vmatprep.subr.bf16.mxu0 0
    %2575 = vmatpush1.bf16.msra.mxu0 0
    %2576 = vmatprep.subr.bf16.mxu0 0
    %2577 = vmatpush1.bf16.msra.mxu0 0
    %2578 = vmatprep.subr.bf16.mxu0 0
    %2579 = vmatpush1.bf16.msra.mxu0 %v2560
    %2580 = vmatprep.subr.bf16.mxu0 0
    %2581 = vmatpush1.bf16.msra.mxu0 %v2559
    %2582 = vmatprep.subr.bf16.mxu0 0
    %2583 = vmatpush2.bf16.msra.mxu0 0
    %2584 = vmatprep.subr.bf16.mxu0 0
    %2585 = vmatpush2.bf16.msra.mxu0 0
    %2586 = vmatprep.subr.bf16.mxu0 0
    %2587 = vmatpush2.bf16.msra.mxu0 0
    %2588 = vmatprep.subr.bf16.mxu0 0
    %2589 = vmatpush2.bf16.msra.mxu0 0
    %2590 = vmatprep.subr.bf16.mxu0 0
    %2591 = vmatpush2.bf16.msra.mxu0 0
    %2592 = vmatprep.subr.bf16.mxu0 0
    %2593 = vmatpush2.bf16.msra.mxu0 0
    %2594 = vmatprep.subr.bf16.mxu0 0
    %2595 = vmatpush2.bf16.msra.mxu0 0
    %2596 = vmatprep.subr.bf16.mxu0 0
    %2597 = vmatpush2.bf16.msra.mxu0 0
    %2598 = vmatprep.mubr.bf16.mxu0 0
    %2599 = vmatmul.mubr.bf16.gmra.mxu0 %v2564
    %v2600 = vpop.f32.mrf.mxu0
    %v2601 = vadd.f32 0.0, %v2600
    %v2602 = vpop.f32.mrf.mxu0
    %v2603 = vpop.f32.mrf.mxu0
    %v2604 = vpop.f32.mrf.mxu0
    %2605 = vdwg.mxu0
    %v2606 = vadd.f32 %v2545, %v2601
    %v2607 = vld [vmem:[%s1602] sm:$0xf]
    %v2608 = vld [vmem:[%s1602 + $0x4] sm:$0xf]
    %v2609 = vld [vmem:[%s1602 + $0x8] sm:$0xf]
    %v2610 = vld [vmem:[%s1602 + $0xc] sm:$0xf]
    %v2611 = vrot.slane %v2487, 2
    %v2616 = vunpack.c.l.b16 %v2607
    %v2617 = vunpack.c.l.b16 %v2608
    %v2618 = vunpack.c.l.b16 %v2609
    %v2619 = vunpack.c.l.b16 %v2610
    %v2620 = vpack.c.b16 %v2617, %v2616
    %v2621 = vpack.c.b16 %v2619, %v2618
    %v2625 = vsel %vm1183, %v2611, 0
    %2627 = vmatprep.subr.bf16.mxu0 0
    %2628 = vmatpush1.bf16.msra.mxu0 0
    %2629 = vmatprep.subr.bf16.mxu0 0
    %2630 = vmatpush1.bf16.msra.mxu0 0
    %2631 = vmatprep.subr.bf16.mxu0 0
    %2632 = vmatpush1.bf16.msra.mxu0 0
    %2633 = vmatprep.subr.bf16.mxu0 0
    %2634 = vmatpush1.bf16.msra.mxu0 0
    %2635 = vmatprep.subr.bf16.mxu0 0
    %2636 = vmatpush1.bf16.msra.mxu0 0
    %2637 = vmatprep.subr.bf16.mxu0 0
    %2638 = vmatpush1.bf16.msra.mxu0 0
    %2639 = vmatprep.subr.bf16.mxu0 0
    %2640 = vmatpush1.bf16.msra.mxu0 %v2621
    %2641 = vmatprep.subr.bf16.mxu0 0
    %2642 = vmatpush1.bf16.msra.mxu0 %v2620
    %2643 = vmatprep.subr.bf16.mxu0 0
    %2644 = vmatpush2.bf16.msra.mxu0 0
    %2645 = vmatprep.subr.bf16.mxu0 0
    %2646 = vmatpush2.bf16.msra.mxu0 0
    %2647 = vmatprep.subr.bf16.mxu0 0
    %2648 = vmatpush2.bf16.msra.mxu0 0
    %2649 = vmatprep.subr.bf16.mxu0 0
    %2650 = vmatpush2.bf16.msra.mxu0 0
    %2651 = vmatprep.subr.bf16.mxu0 0
    %2652 = vmatpush2.bf16.msra.mxu0 0
    %2653 = vmatprep.subr.bf16.mxu0 0
    %2654 = vmatpush2.bf16.msra.mxu0 0
    %2655 = vmatprep.subr.bf16.mxu0 0
    %2656 = vmatpush2.bf16.msra.mxu0 0
    %2657 = vmatprep.subr.bf16.mxu0 0
    %2658 = vmatpush2.bf16.msra.mxu0 0
    %2659 = vmatprep.mubr.bf16.mxu0 0
    %2660 = vmatmul.mubr.bf16.gmra.mxu0 %v2625
    %v2661 = vpop.f32.mrf.mxu0
    %v2662 = vadd.f32 0.0, %v2661
    %v2663 = vpop.f32.mrf.mxu0
    %v2664 = vpop.f32.mrf.mxu0
    %v2665 = vpop.f32.mrf.mxu0
    %2666 = vdwg.mxu0
    %v2667 = vadd.f32 %v2606, %v2662
    %v2668 = vld [vmem:[%s1665] sm:$0xf]
    %v2669 = vld [vmem:[%s1665 + $0x4] sm:$0xf]
    %v2670 = vld [vmem:[%s1665 + $0x8] sm:$0xf]
    %v2671 = vld [vmem:[%s1665 + $0xc] sm:$0xf]
    %v2672 = vpack.c.bf16 %v1163, %v1163
    %v2677 = vunpack.c.l.b16 %v2668
    %v2678 = vunpack.c.l.b16 %v2669
    %v2679 = vunpack.c.l.b16 %v2670
    %v2680 = vunpack.c.l.b16 %v2671
    %v2681 = vpack.c.b16 %v2678, %v2677
    %v2682 = vpack.c.b16 %v2680, %v2679
    %v2686 = vsel %vm1183, %v2672, 0
    %2688 = vmatprep.subr.bf16.mxu0 0
    %2689 = vmatpush1.bf16.msra.mxu0 0
    %2690 = vmatprep.subr.bf16.mxu0 0
    %2691 = vmatpush1.bf16.msra.mxu0 0
    %2692 = vmatprep.subr.bf16.mxu0 0
    %2693 = vmatpush1.bf16.msra.mxu0 0
    %2694 = vmatprep.subr.bf16.mxu0 0
    %2695 = vmatpush1.bf16.msra.mxu0 0
    %2696 = vmatprep.subr.bf16.mxu0 0
    %2697 = vmatpush1.bf16.msra.mxu0 0
    %2698 = vmatprep.subr.bf16.mxu0 0
    %2699 = vmatpush1.bf16.msra.mxu0 0
    %2700 = vmatprep.subr.bf16.mxu0 0
    %2701 = vmatpush1.bf16.msra.mxu0 %v2682
    %2702 = vmatprep.subr.bf16.mxu0 0
    %2703 = vmatpush1.bf16.msra.mxu0 %v2681
    %2704 = vmatprep.subr.bf16.mxu0 0
    %2705 = vmatpush2.bf16.msra.mxu0 0
    %2706 = vmatprep.subr.bf16.mxu0 0
    %2707 = vmatpush2.bf16.msra.mxu0 0
    %2708 = vmatprep.subr.bf16.mxu0 0
    %2709 = vmatpush2.bf16.msra.mxu0 0
    %2710 = vmatprep.subr.bf16.mxu0 0
    %2711 = vmatpush2.bf16.msra.mxu0 0
    %2712 = vmatprep.subr.bf16.mxu0 0
    %2713 = vmatpush2.bf16.msra.mxu0 0
    %2714 = vmatprep.subr.bf16.mxu0 0
    %2715 = vmatpush2.bf16.msra.mxu0 0
    %2716 = vmatprep.subr.bf16.mxu0 0
    %2717 = vmatpush2.bf16.msra.mxu0 0
    %2718 = vmatprep.subr.bf16.mxu0 0
    %2719 = vmatpush2.bf16.msra.mxu0 0
    %2720 = vmatprep.mubr.bf16.mxu0 0
    %2721 = vmatmul.mubr.bf16.gmra.mxu0 %v2686
    %v2722 = vpop.f32.mrf.mxu0
    %v2723 = vadd.f32 0.0, %v2722
    %v2724 = vpop.f32.mrf.mxu0
    %v2725 = vpop.f32.mrf.mxu0
    %v2726 = vpop.f32.mrf.mxu0
    %2727 = vdwg.mxu0
    %v2728 = vadd.f32 %v2667, %v2723
    %v2729 = vld [vmem:[%s1728] sm:$0xf]
    %v2730 = vld [vmem:[%s1728 + $0x4] sm:$0xf]
    %v2731 = vld [vmem:[%s1728 + $0x8] sm:$0xf]
    %v2732 = vld [vmem:[%s1728 + $0xc] sm:$0xf]
    %v2733 = vshrl.u32 %v2672, 16
    %v2739 = vunpack.c.l.b16 %v2729
    %v2740 = vunpack.c.l.b16 %v2730
    %v2741 = vunpack.c.l.b16 %v2731
    %v2742 = vunpack.c.l.b16 %v2732
    %v2743 = vpack.c.b16 %v2740, %v2739
    %v2744 = vpack.c.b16 %v2742, %v2741
    %v2748 = vsel %vm1183, %v2733, 0
    %2750 = vmatprep.subr.bf16.mxu0 0
    %2751 = vmatpush1.bf16.msra.mxu0 0
    %2752 = vmatprep.subr.bf16.mxu0 0
    %2753 = vmatpush1.bf16.msra.mxu0 0
    %2754 = vmatprep.subr.bf16.mxu0 0
    %2755 = vmatpush1.bf16.msra.mxu0 0
    %2756 = vmatprep.subr.bf16.mxu0 0
    %2757 = vmatpush1.bf16.msra.mxu0 0
    %2758 = vmatprep.subr.bf16.mxu0 0
    %2759 = vmatpush1.bf16.msra.mxu0 0
    %2760 = vmatprep.subr.bf16.mxu0 0
    %2761 = vmatpush1.bf16.msra.mxu0 0
    %2762 = vmatprep.subr.bf16.mxu0 0
    %2763 = vmatpush1.bf16.msra.mxu0 %v2744
    %2764 = vmatprep.subr.bf16.mxu0 0
    %2765 = vmatpush1.bf16.msra.mxu0 %v2743
    %2766 = vmatprep.subr.bf16.mxu0 0
    %2767 = vmatpush2.bf16.msra.mxu0 0
    %2768 = vmatprep.subr.bf16.mxu0 0
    %2769 = vmatpush2.bf16.msra.mxu0 0
    %2770 = vmatprep.subr.bf16.mxu0 0
    %2771 = vmatpush2.bf16.msra.mxu0 0
    %2772 = vmatprep.subr.bf16.mxu0 0
    %2773 = vmatpush2.bf16.msra.mxu0 0
    %2774 = vmatprep.subr.bf16.mxu0 0
    %2775 = vmatpush2.bf16.msra.mxu0 0
    %2776 = vmatprep.subr.bf16.mxu0 0
    %2777 = vmatpush2.bf16.msra.mxu0 0
    %2778 = vmatprep.subr.bf16.mxu0 0
    %2779 = vmatpush2.bf16.msra.mxu0 0
    %2780 = vmatprep.subr.bf16.mxu0 0
    %2781 = vmatpush2.bf16.msra.mxu0 0
    %2782 = vmatprep.mubr.bf16.mxu0 0
    %2783 = vmatmul.mubr.bf16.gmra.mxu0 %v2748
    %v2784 = vpop.f32.mrf.mxu0
    %v2785 = vadd.f32 0.0, %v2784
    %v2786 = vpop.f32.mrf.mxu0
    %v2787 = vpop.f32.mrf.mxu0
    %v2788 = vpop.f32.mrf.mxu0
    %2789 = vdwg.mxu0
    %v2790 = vadd.f32 %v2728, %v2785
    %v2791 = vld [vmem:[%s1790] sm:$0xf]
    %v2792 = vld [vmem:[%s1790 + $0x4] sm:$0xf]
    %v2793 = vld [vmem:[%s1790 + $0x8] sm:$0xf]
    %v2794 = vld [vmem:[%s1790 + $0xc] sm:$0xf]
    %v2796 = vrot.slane %v2672, 1
    %v2801 = vunpack.c.l.b16 %v2791
    %v2802 = vunpack.c.l.b16 %v2792
    %v2803 = vunpack.c.l.b16 %v2793
    %v2804 = vunpack.c.l.b16 %v2794
    %v2805 = vpack.c.b16 %v2802, %v2801
    %v2806 = vpack.c.b16 %v2804, %v2803
    %v2810 = vsel %vm1183, %v2796, 0
    %2812 = vmatprep.subr.bf16.mxu0 0
    %2813 = vmatpush1.bf16.msra.mxu0 0
    %2814 = vmatprep.subr.bf16.mxu0 0
    %2815 = vmatpush1.bf16.msra.mxu0 0
    %2816 = vmatprep.subr.bf16.mxu0 0
    %2817 = vmatpush1.bf16.msra.mxu0 0
    %2818 = vmatprep.subr.bf16.mxu0 0
    %2819 = vmatpush1.bf16.msra.mxu0 0
    %2820 = vmatprep.subr.bf16.mxu0 0
    %2821 = vmatpush1.bf16.msra.mxu0 0
    %2822 = vmatprep.subr.bf16.mxu0 0
    %2823 = vmatpush1.bf16.msra.mxu0 0
    %2824 = vmatprep.subr.bf16.mxu0 0
    %2825 = vmatpush1.bf16.msra.mxu0 %v2806
    %2826 = vmatprep.subr.bf16.mxu0 0
    %2827 = vmatpush1.bf16.msra.mxu0 %v2805
    %2828 = vmatprep.subr.bf16.mxu0 0
    %2829 = vmatpush2.bf16.msra.mxu0 0
    %2830 = vmatprep.subr.bf16.mxu0 0
    %2831 = vmatpush2.bf16.msra.mxu0 0
    %2832 = vmatprep.subr.bf16.mxu0 0
    %2833 = vmatpush2.bf16.msra.mxu0 0
    %2834 = vmatprep.subr.bf16.mxu0 0
    %2835 = vmatpush2.bf16.msra.mxu0 0
    %2836 = vmatprep.subr.bf16.mxu0 0
    %2837 = vmatpush2.bf16.msra.mxu0 0
    %2838 = vmatprep.subr.bf16.mxu0 0
    %2839 = vmatpush2.bf16.msra.mxu0 0
    %2840 = vmatprep.subr.bf16.mxu0 0
    %2841 = vmatpush2.bf16.msra.mxu0 0
    %2842 = vmatprep.subr.bf16.mxu0 0
    %2843 = vmatpush2.bf16.msra.mxu0 0
    %2844 = vmatprep.mubr.bf16.mxu0 0
    %2845 = vmatmul.mubr.bf16.gmra.mxu0 %v2810
    %v2846 = vpop.f32.mrf.mxu0
    %v2847 = vadd.f32 0.0, %v2846
    %v2848 = vpop.f32.mrf.mxu0
    %v2849 = vpop.f32.mrf.mxu0
    %v2850 = vpop.f32.mrf.mxu0
    %2851 = vdwg.mxu0
    %v2852 = vadd.f32 %v2790, %v2847
    %v2853 = vld [vmem:[%s1852] sm:$0xf]
    %v2854 = vld [vmem:[%s1852 + $0x4] sm:$0xf]
    %v2855 = vld [vmem:[%s1852 + $0x8] sm:$0xf]
    %v2856 = vld [vmem:[%s1852 + $0xc] sm:$0xf]
    %v2857 = vrot.slane %v2733, 1
    %v2862 = vunpack.c.l.b16 %v2853
    %v2863 = vunpack.c.l.b16 %v2854
    %v2864 = vunpack.c.l.b16 %v2855
    %v2865 = vunpack.c.l.b16 %v2856
    %v2866 = vpack.c.b16 %v2863, %v2862
    %v2867 = vpack.c.b16 %v2865, %v2864
    %v2871 = vsel %vm1183, %v2857, 0
    %2873 = vmatprep.subr.bf16.mxu0 0
    %2874 = vmatpush1.bf16.msra.mxu0 0
    %2875 = vmatprep.subr.bf16.mxu0 0
    %2876 = vmatpush1.bf16.msra.mxu0 0
    %2877 = vmatprep.subr.bf16.mxu0 0
    %2878 = vmatpush1.bf16.msra.mxu0 0
    %2879 = vmatprep.subr.bf16.mxu0 0
    %2880 = vmatpush1.bf16.msra.mxu0 0
    %2881 = vmatprep.subr.bf16.mxu0 0
    %2882 = vmatpush1.bf16.msra.mxu0 0
    %2883 = vmatprep.subr.bf16.mxu0 0
    %2884 = vmatpush1.bf16.msra.mxu0 0
    %2885 = vmatprep.subr.bf16.mxu0 0
    %2886 = vmatpush1.bf16.msra.mxu0 %v2867
    %2887 = vmatprep.subr.bf16.mxu0 0
    %2888 = vmatpush1.bf16.msra.mxu0 %v2866
    %2889 = vmatprep.subr.bf16.mxu0 0
    %2890 = vmatpush2.bf16.msra.mxu0 0
    %2891 = vmatprep.subr.bf16.mxu0 0
    %2892 = vmatpush2.bf16.msra.mxu0 0
    %2893 = vmatprep.subr.bf16.mxu0 0
    %2894 = vmatpush2.bf16.msra.mxu0 0
    %2895 = vmatprep.subr.bf16.mxu0 0
    %2896 = vmatpush2.bf16.msra.mxu0 0
    %2897 = vmatprep.subr.bf16.mxu0 0
    %2898 = vmatpush2.bf16.msra.mxu0 0
    %2899 = vmatprep.subr.bf16.mxu0 0
    %2900 = vmatpush2.bf16.msra.mxu0 0
    %2901 = vmatprep.subr.bf16.mxu0 0
    %2902 = vmatpush2.bf16.msra.mxu0 0
    %2903 = vmatprep.subr.bf16.mxu0 0
    %2904 = vmatpush2.bf16.msra.mxu0 0
    %2905 = vmatprep.mubr.bf16.mxu0 0
    %2906 = vmatmul.mubr.bf16.gmra.mxu0 %v2871
    %v2907 = vpop.f32.mrf.mxu0
    %v2908 = vadd.f32 0.0, %v2907
    %v2909 = vpop.f32.mrf.mxu0
    %v2910 = vpop.f32.mrf.mxu0
    %v2911 = vpop.f32.mrf.mxu0
    %2912 = vdwg.mxu0
    %v2913 = vadd.f32 %v2852, %v2908
    %v2914 = vld [vmem:[%s1914] sm:$0xf]
    %v2915 = vld [vmem:[%s1914 + $0x4] sm:$0xf]
    %v2916 = vld [vmem:[%s1914 + $0x8] sm:$0xf]
    %v2917 = vld [vmem:[%s1914 + $0xc] sm:$0xf]
    %v2918 = vrot.slane %v2672, 3
    %v2923 = vunpack.c.l.b16 %v2914
    %v2924 = vunpack.c.l.b16 %v2915
    %v2925 = vunpack.c.l.b16 %v2916
    %v2926 = vunpack.c.l.b16 %v2917
    %v2927 = vpack.c.b16 %v2924, %v2923
    %v2928 = vpack.c.b16 %v2926, %v2925
    %v2932 = vsel %vm1183, %v2918, 0
    %2934 = vmatprep.subr.bf16.mxu0 0
    %2935 = vmatpush1.bf16.msra.mxu0 0
    %2936 = vmatprep.subr.bf16.mxu0 0
    %2937 = vmatpush1.bf16.msra.mxu0 0
    %2938 = vmatprep.subr.bf16.mxu0 0
    %2939 = vmatpush1.bf16.msra.mxu0 0
    %2940 = vmatprep.subr.bf16.mxu0 0
    %2941 = vmatpush1.bf16.msra.mxu0 0
    %2942 = vmatprep.subr.bf16.mxu0 0
    %2943 = vmatpush1.bf16.msra.mxu0 0
    %2944 = vmatprep.subr.bf16.mxu0 0
    %2945 = vmatpush1.bf16.msra.mxu0 0
    %2946 = vmatprep.subr.bf16.mxu0 0
    %2947 = vmatpush1.bf16.msra.mxu0 %v2928
    %2948 = vmatprep.subr.bf16.mxu0 0
    %2949 = vmatpush1.bf16.msra.mxu0 %v2927
    %2950 = vmatprep.subr.bf16.mxu0 0
    %2951 = vmatpush2.bf16.msra.mxu0 0
    %2952 = vmatprep.subr.bf16.mxu0 0
    %2953 = vmatpush2.bf16.msra.mxu0 0
    %2954 = vmatprep.subr.bf16.mxu0 0
    %2955 = vmatpush2.bf16.msra.mxu0 0
    %2956 = vmatprep.subr.bf16.mxu0 0
    %2957 = vmatpush2.bf16.msra.mxu0 0
    %2958 = vmatprep.subr.bf16.mxu0 0
    %2959 = vmatpush2.bf16.msra.mxu0 0
    %2960 = vmatprep.subr.bf16.mxu0 0
    %2961 = vmatpush2.bf16.msra.mxu0 0
    %2962 = vmatprep.subr.bf16.mxu0 0
    %2963 = vmatpush2.bf16.msra.mxu0 0
    %2964 = vmatprep.subr.bf16.mxu0 0
    %2965 = vmatpush2.bf16.msra.mxu0 0
    %2966 = vmatprep.mubr.bf16.mxu0 0
    %2967 = vmatmul.mubr.bf16.gmra.mxu0 %v2932
    %v2968 = vpop.f32.mrf.mxu0
    %v2969 = vadd.f32 0.0, %v2968
    %v2970 = vpop.f32.mrf.mxu0
    %v2971 = vpop.f32.mrf.mxu0
    %v2972 = vpop.f32.mrf.mxu0
    %2973 = vdwg.mxu0
    %v2974 = vadd.f32 %v2913, %v2969
    %v2975 = vld [vmem:[%s1978] sm:$0xf]
    %v2976 = vld [vmem:[%s1978 + $0x4] sm:$0xf]
    %v2977 = vld [vmem:[%s1978 + $0x8] sm:$0xf]
    %v2978 = vld [vmem:[%s1978 + $0xc] sm:$0xf]
    %v2979 = vrot.slane %v2733, 3
    %v2984 = vunpack.c.l.b16 %v2975
    %v2985 = vunpack.c.l.b16 %v2976
    %v2986 = vunpack.c.l.b16 %v2977
    %v2987 = vunpack.c.l.b16 %v2978
    %v2988 = vpack.c.b16 %v2985, %v2984
    %v2989 = vpack.c.b16 %v2987, %v2986
    %v2993 = vsel %vm1183, %v2979, 0
    %2995 = vmatprep.subr.bf16.mxu0 0
    %2996 = vmatpush1.bf16.msra.mxu0 0
    %2997 = vmatprep.subr.bf16.mxu0 0
    %2998 = vmatpush1.bf16.msra.mxu0 0
    %2999 = vmatprep.subr.bf16.mxu0 0
    %3000 = vmatpush1.bf16.msra.mxu0 0
    %3001 = vmatprep.subr.bf16.mxu0 0
    %3002 = vmatpush1.bf16.msra.mxu0 0
    %3003 = vmatprep.subr.bf16.mxu0 0
    %3004 = vmatpush1.bf16.msra.mxu0 0
    %3005 = vmatprep.subr.bf16.mxu0 0
    %3006 = vmatpush1.bf16.msra.mxu0 0
    %3007 = vmatprep.subr.bf16.mxu0 0
    %3008 = vmatpush1.bf16.msra.mxu0 %v2989
    %3009 = vmatprep.subr.bf16.mxu0 0
    %3010 = vmatpush1.bf16.msra.mxu0 %v2988
    %3011 = vmatprep.subr.bf16.mxu0 0
    %3012 = vmatpush2.bf16.msra.mxu0 0
    %3013 = vmatprep.subr.bf16.mxu0 0
    %3014 = vmatpush2.bf16.msra.mxu0 0
    %3015 = vmatprep.subr.bf16.mxu0 0
    %3016 = vmatpush2.bf16.msra.mxu0 0
    %3017 = vmatprep.subr.bf16.mxu0 0
    %3018 = vmatpush2.bf16.msra.mxu0 0
    %3019 = vmatprep.subr.bf16.mxu0 0
    %3020 = vmatpush2.bf16.msra.mxu0 0
    %3021 = vmatprep.subr.bf16.mxu0 0
    %3022 = vmatpush2.bf16.msra.mxu0 0
    %3023 = vmatprep.subr.bf16.mxu0 0
    %3024 = vmatpush2.bf16.msra.mxu0 0
    %3025 = vmatprep.subr.bf16.mxu0 0
    %3026 = vmatpush2.bf16.msra.mxu0 0
    %3027 = vmatprep.mubr.bf16.mxu0 0
    %3028 = vmatmul.mubr.bf16.gmra.mxu0 %v2993
    %v3029 = vpop.f32.mrf.mxu0
    %v3030 = vadd.f32 0.0, %v3029
    %v3031 = vpop.f32.mrf.mxu0
    %v3032 = vpop.f32.mrf.mxu0
    %v3033 = vpop.f32.mrf.mxu0
    %3034 = vdwg.mxu0
    %v3035 = vadd.f32 %v2974, %v3030
    %v3036 = vld [vmem:[%s2043] sm:$0xf]
    %v3037 = vld [vmem:[%s2043 + $0x4] sm:$0xf]
    %v3038 = vld [vmem:[%s2043 + $0x8] sm:$0xf]
    %v3039 = vld [vmem:[%s2043 + $0xc] sm:$0xf]
    %v3040 = vpack.c.bf16 %v1164, %v1164
    %v3045 = vunpack.c.l.b16 %v3036
    %v3046 = vunpack.c.l.b16 %v3037
    %v3047 = vunpack.c.l.b16 %v3038
    %v3048 = vunpack.c.l.b16 %v3039
    %v3049 = vpack.c.b16 %v3046, %v3045
    %v3050 = vpack.c.b16 %v3048, %v3047
    %v3054 = vsel %vm1183, %v3040, 0
    %3056 = vmatprep.subr.bf16.mxu0 0
    %3057 = vmatpush1.bf16.msra.mxu0 0
    %3058 = vmatprep.subr.bf16.mxu0 0
    %3059 = vmatpush1.bf16.msra.mxu0 0
    %3060 = vmatprep.subr.bf16.mxu0 0
    %3061 = vmatpush1.bf16.msra.mxu0 0
    %3062 = vmatprep.subr.bf16.mxu0 0
    %3063 = vmatpush1.bf16.msra.mxu0 0
    %3064 = vmatprep.subr.bf16.mxu0 0
    %3065 = vmatpush1.bf16.msra.mxu0 0
    %3066 = vmatprep.subr.bf16.mxu0 0
    %3067 = vmatpush1.bf16.msra.mxu0 0
    %3068 = vmatprep.subr.bf16.mxu0 0
    %3069 = vmatpush1.bf16.msra.mxu0 %v3050
    %3070 = vmatprep.subr.bf16.mxu0 0
    %3071 = vmatpush1.bf16.msra.mxu0 %v3049
    %3072 = vmatprep.subr.bf16.mxu0 0
    %3073 = vmatpush2.bf16.msra.mxu0 0
    %3074 = vmatprep.subr.bf16.mxu0 0
    %3075 = vmatpush2.bf16.msra.mxu0 0
    %3076 = vmatprep.subr.bf16.mxu0 0
    %3077 = vmatpush2.bf16.msra.mxu0 0
    %3078 = vmatprep.subr.bf16.mxu0 0
    %3079 = vmatpush2.bf16.msra.mxu0 0
    %3080 = vmatprep.subr.bf16.mxu0 0
    %3081 = vmatpush2.bf16.msra.mxu0 0
    %3082 = vmatprep.subr.bf16.mxu0 0
    %3083 = vmatpush2.bf16.msra.mxu0 0
    %3084 = vmatprep.subr.bf16.mxu0 0
    %3085 = vmatpush2.bf16.msra.mxu0 0
    %3086 = vmatprep.subr.bf16.mxu0 0
    %3087 = vmatpush2.bf16.msra.mxu0 0
    %3088 = vmatprep.mubr.bf16.mxu0 0
    %3089 = vmatmul.mubr.bf16.gmra.mxu0 %v3054
    %v3090 = vpop.f32.mrf.mxu0
    %v3091 = vadd.f32 0.0, %v3090
    %v3092 = vpop.f32.mrf.mxu0
    %v3093 = vpop.f32.mrf.mxu0
    %v3094 = vpop.f32.mrf.mxu0
    %3095 = vdwg.mxu0
    %v3096 = vadd.f32 %v3035, %v3091
    %v3097 = vld [vmem:[%s2105] sm:$0xf]
    %v3098 = vld [vmem:[%s2105 + $0x4] sm:$0xf]
    %v3099 = vld [vmem:[%s2105 + $0x8] sm:$0xf]
    %v3100 = vld [vmem:[%s2105 + $0xc] sm:$0xf]
    %v3101 = vshrl.u32 %v3040, 16
    %v3107 = vunpack.c.l.b16 %v3097
    %v3108 = vunpack.c.l.b16 %v3098
    %v3109 = vunpack.c.l.b16 %v3099
    %v3110 = vunpack.c.l.b16 %v3100
    %v3111 = vpack.c.b16 %v3108, %v3107
    %v3112 = vpack.c.b16 %v3110, %v3109
    %v3116 = vsel %vm1183, %v3101, 0
    %3118 = vmatprep.subr.bf16.mxu0 0
    %3119 = vmatpush1.bf16.msra.mxu0 0
    %3120 = vmatprep.subr.bf16.mxu0 0
    %3121 = vmatpush1.bf16.msra.mxu0 0
    %3122 = vmatprep.subr.bf16.mxu0 0
    %3123 = vmatpush1.bf16.msra.mxu0 0
    %3124 = vmatprep.subr.bf16.mxu0 0
    %3125 = vmatpush1.bf16.msra.mxu0 0
    %3126 = vmatprep.subr.bf16.mxu0 0
    %3127 = vmatpush1.bf16.msra.mxu0 0
    %3128 = vmatprep.subr.bf16.mxu0 0
    %3129 = vmatpush1.bf16.msra.mxu0 0
    %3130 = vmatprep.subr.bf16.mxu0 0
    %3131 = vmatpush1.bf16.msra.mxu0 %v3112
    %3132 = vmatprep.subr.bf16.mxu0 0
    %3133 = vmatpush1.bf16.msra.mxu0 %v3111
    %3134 = vmatprep.subr.bf16.mxu0 0
    %3135 = vmatpush2.bf16.msra.mxu0 0
    %3136 = vmatprep.subr.bf16.mxu0 0
    %3137 = vmatpush2.bf16.msra.mxu0 0
    %3138 = vmatprep.subr.bf16.mxu0 0
    %3139 = vmatpush2.bf16.msra.mxu0 0
    %3140 = vmatprep.subr.bf16.mxu0 0
    %3141 = vmatpush2.bf16.msra.mxu0 0
    %3142 = vmatprep.subr.bf16.mxu0 0
    %3143 = vmatpush2.bf16.msra.mxu0 0
    %3144 = vmatprep.subr.bf16.mxu0 0
    %3145 = vmatpush2.bf16.msra.mxu0 0
    %3146 = vmatprep.subr.bf16.mxu0 0
    %3147 = vmatpush2.bf16.msra.mxu0 0
    %3148 = vmatprep.subr.bf16.mxu0 0
    %3149 = vmatpush2.bf16.msra.mxu0 0
    %3150 = vmatprep.mubr.bf16.mxu0 0
    %3151 = vmatmul.mubr.bf16.gmra.mxu0 %v3116
    %v3152 = vpop.f32.mrf.mxu0
    %v3153 = vadd.f32 0.0, %v3152
    %v3154 = vpop.f32.mrf.mxu0
    %v3155 = vpop.f32.mrf.mxu0
    %v3156 = vpop.f32.mrf.mxu0
    %3157 = vdwg.mxu0
    %v3158 = vadd.f32 %v3096, %v3153
    %3159 = vst.msk [vmem:[#allocation2 + $0x1] sm:$0x1] %vm2167, %v3158
    // Predicated region
    $region46: #{forward.1} parent=1 // pred_check
      _
    $region47: #{forward.1} parent=1 // pred_check_branch
      %3161 = sbr.rel (0) target = $region49
    $region48: #{forward.1} parent=1 // pred_region
      %s3163 = ssub.s32 32, 32
      %3164 = vsyncadd [#allocation3], %s3163
      %s3166 = sshll.u32 [#allocation2], 4
      %s3167 = int_to_ptr.vmem [resolvable:$true] %s3166
      %3169 = dma.vmem_to_hbm [thread:$0]  %s3167, 32, %s11, [#allocation3]
    $region49: #{forward.1} parent=1 // pred_fallthru
      _
    // Predicated region
    $region50: #{forward.1} parent=1 // pred_check
      _
    $region51: #{forward.1} parent=1 // pred_check_branch
      %3171 = sbr.rel (0) target = $region53
    $region52: #{forward.1} parent=1 // pred_region
      %3172 = dma.done [#allocation3], 32
    $region53: #{forward.1} parent=1 // pred_fallthru
      _
    %3173 = vsyncpa [#allocation3], 1

</llo_original>
